<compile_context>
chip_gen: v5e
topology: v5e:2x2
jax: 0.10.0
libtpu: 0.0.40
codegen_flags: <defaults>
</compile_context>

<pallas_src>
import functools

import jax
import jax.numpy as jnp
from jax.experimental import pallas as pl
from jax.experimental.pallas import tpu as pltpu


# ---------------------------------------------------------------------------
# helpers
# ---------------------------------------------------------------------------
def _round_up(a, b):
    return (a + b - 1) // b * b


def _expand_A_kmajor(W, D):
    """A[(f*D+d'), (k*H+h)*D+d] = W[k,h,f] * delta(d,d')  ->  (F*D, K*H*D)."""
    K, H, F = W.shape
    eye_d = jnp.eye(D, dtype=W.dtype)
    a = W.transpose(2, 0, 1)[:, None, :, :, None] * eye_d[None, :, None, None, :]
    return a.reshape(F * D, K * H * D)


def _expand_R_kmajor(H, K, D, dtype=jnp.float32):
    """R[(k*H+h)*D+d, k'*D+d'] = delta(k,k') * delta(d,d')  ->  (K*H*D, K*D)."""
    eye_k = jnp.eye(K, dtype=dtype)
    eye_d = jnp.eye(D, dtype=dtype)
    r = eye_k[:, None, None, :, None] * eye_d[None, None, :, None, :]
    r = jnp.broadcast_to(r, (K, H, D, K, D))
    return r.reshape(K * H * D, K * D)


# ---------------------------------------------------------------------------
# fused kernel: DeepFM + 2 CIN layers + final linear, one batch tile per step
# ---------------------------------------------------------------------------
def xdeepfm_fused_kernel(ef_ref, lin_ref, wide_ref, spad_ref, b1_ref, w2_ref,
                         b2_ref, w3_ref, r1_ref, g1_ref, rg2_ref, out_ref,
                         *, F, D, K1, K2):
    ef = ef_ref[...]                                   # (TN, F*D) bf16, lane dense
    res = lin_ref[...]                                 # (TN, OUT) f32 (biases folded)

    fd = F * D
    wa1 = K1 * fd                                      # A1 segment width
    wa2 = K2 * K1 * D                                  # A2 segment width
    off_s = _round_up(wa1 + wa2, 128)                  # 128-aligned FM segment
    sw = spad_ref.shape[1]
    off_mlp = off_s + sw                               # 128-aligned MLP segment

    # ---- ONE wide MXU pass over every ef-contraction: [A1 | A2 | S | w1] ----
    wide = jnp.dot(ef, wide_ref[...], preferred_element_type=jnp.float32)

    # ---- FM second-order: s = sum_f emb, sq = sum_f emb^2 (pad cols are 0) --
    s = wide[:, off_s:off_mlp]                                           # (TN, SW)
    sq = jnp.dot(ef * ef, spad_ref[...], preferred_element_type=jnp.float32)
    res = res + 0.5 * jnp.sum(s * s - sq, axis=-1, keepdims=True)

    # ---- MLP (dropout == identity in eval); zero-padded lanes are inert ----
    h = jnp.maximum(wide[:, off_mlp:] + b1_ref[...], 0.0)
    h = jnp.dot(h.astype(w2_ref.dtype), w2_ref[...],
                preferred_element_type=jnp.float32) + b2_ref[...]
    h = jnp.maximum(h, 0.0)
    res = res + jnp.dot(h.astype(w3_ref.dtype), w3_ref[...],
                        preferred_element_type=jnp.float32)

    # ---- CIN layer 1 (k-major: replication = lane tiling, NOT a matmul) ----
    c1 = wide[:, :wa1]                                 # sum_f W1[k,h,f]*emb[:,f,d]
    b1c = jnp.concatenate([ef] * K1, axis=-1)          # emb[:,h,d] tiled K1 times
    feat1 = jnp.dot((b1c * c1).astype(ef.dtype), r1_ref[...],
                    preferred_element_type=jnp.float32)   # (TN, K1*D), sums over h
    feat1_b = feat1.astype(ef.dtype)
    res = res + jnp.dot(feat1_b, g1_ref[...],          # d-sum + final linear, layer 1
                        preferred_element_type=jnp.float32)

    # ---- CIN layer 2 (h-sum, d-sum and final linear all folded into RG2) ---
    c2 = wide[:, wa1:wa1 + wa2]                        # sum_f W2[k,h,f]*emb[:,f,d]
    b2c = jnp.concatenate([feat1_b] * K2, axis=-1)     # feat1 tiled K2 times
    res = res + jnp.dot((b2c * c2).astype(ef.dtype), rg2_ref[...],
                        preferred_element_type=jnp.float32)

    out_ref[...] = res                                 # single (TN, OUT) store


# ---------------------------------------------------------------------------
# one-time weight preparation (hoisted out of the per-call path)
# ---------------------------------------------------------------------------
def prepare_xdeepfm(params, compute_dtype=jnp.bfloat16):
    (embed_table, lin_table, lin_bias,
     w1, b1, w2, b2, w3, b3,
     cin_w1, cin_w2, final_w, final_b, offsets) = params

    f32 = jnp.float32
    cdt = compute_dtype

    D = embed_table.shape[1]
    K1, _, F = cin_w1.shape
    K2 = cin_w2.shape[0]
    OUT = final_w.shape[1]
    H1, H2 = w1.shape[1], w2.shape[1]
    FD = F * D

    # ---- CIN structured weights, k-major so replication == lane tiling -----
    A1 = _expand_A_kmajor(cin_w1.astype(f32), D)                   # (FD, K1*F*D)
    A2 = _expand_A_kmajor(cin_w2.astype(f32), D)                   # (FD, K2*K1*D)
    R1 = _expand_R_kmajor(F, K1, D, f32)                           # (K1*F*D, K1*D)
    G1 = jnp.repeat(final_w[:K1].astype(f32), D, axis=0)           # (K1*D, OUT)
    RG2 = jnp.repeat(final_w[K1:K1 + K2].astype(f32), K1 * D, axis=0)  # (K2*K1*D, OUT)

    # ---- FM sum matrix (tiled identity), padded to a lane multiple ---------
    SW = _round_up(D, 128)
    S = jnp.tile(jnp.eye(D, dtype=f32), (F, 1))                    # (FD, D)
    S_pad = jnp.pad(S, ((0, 0), (0, SW - D)))                      # (FD, SW)

    # ---- MLP weights padded to lane multiples (zero pads are inert) --------
    H1P, H2P = _round_up(H1, 128), _round_up(H2, 128)
    w1_pad = jnp.pad(w1.astype(f32), ((0, 0), (0, H1P - H1)))
    b1_pad = jnp.pad(b1.astype(f32).reshape(1, H1), ((0, 0), (0, H1P - H1)))
    w2_pad = jnp.pad(w2.astype(f32), ((0, H1P - H1), (0, H2P - H2)))
    b2_pad = jnp.pad(b2.astype(f32).reshape(1, H2), ((0, 0), (0, H2P - H2)))
    w3_pad = jnp.pad(w3.astype(f32), ((0, H2P - H2), (0, 0)))

    # ---- one wide RHS for all ef-contractions: [A1 | A2 | gap | S | w1] ----
    wa1, wa2 = K1 * F * D, K2 * K1 * D
    gap = _round_up(wa1 + wa2, 128) - (wa1 + wa2)
    wide_rhs = jnp.concatenate(
        [A1, A2, jnp.zeros((FD, gap), f32), S_pad, w1_pad], axis=1)

    return dict(
        embed_table=embed_table.astype(cdt),                       # bf16 ef stream
        lin_table=lin_table.astype(f32),
        lin_bias=(lin_bias + b3 + final_b).astype(f32).reshape(1, OUT),
        offsets=offsets,
        wide_rhs=wide_rhs.astype(cdt),
        s_pad=S_pad.astype(cdt),
        b1=b1_pad, w2=w2_pad.astype(cdt), b2=b2_pad, w3=w3_pad.astype(cdt),
        r1=R1.astype(cdt), g1=G1.astype(cdt), rg2=RG2.astype(cdt),
    )


# ---------------------------------------------------------------------------
# forward: embedding gathers (glue), batch-tiled single pallas_call
# ---------------------------------------------------------------------------
def xdeepfm_forward(x, prep, *, tile_n=512):
    embed_table = prep["embed_table"]
    lin_table, lin_bias, offsets = prep["lin_table"], prep["lin_bias"], prep["offsets"]
    wide_rhs, s_pad = prep["wide_rhs"], prep["s_pad"]
    b1, w2, b2, w3 = prep["b1"], prep["w2"], prep["b2"], prep["w3"]
    r1, g1, rg2 = prep["r1"], prep["g1"], prep["rg2"]

    N, F = x.shape
    D = embed_table.shape[1]
    OUT = g1.shape[1]
    K1 = g1.shape[0] // D
    K2 = rg2.shape[0] // (K1 * D)
    FD = F * D

    # batch tiling; pad the (tiny) index matrix so the gather emits the padded
    # embedding slab directly (no extra HBM round trip of ef / lin).
    ALIGN = 16                                   # bf16-friendly sublane multiple
    Nr = _round_up(N, ALIGN)
    TN = min(tile_n, Nr)
    if Nr <= TN and Nr >= 2 * ALIGN * 8:
        # prefer >= 2 grid steps so both v7x TensorCores get work
        TN = _round_up(pl.cdiv(Nr, 2), ALIGN)
    Np = _round_up(N, TN)
    xp = jnp.pad(x, ((0, Np - N), (0, 0)))       # padded rows index entry 0 (valid)

    # glue: data-dependent gathers stay in XLA
    idx = xp + offsets[None, :]
    ef = embed_table[idx].reshape(Np, FD)                          # (Np, FD) bf16
    lin = lin_table[idx].sum(axis=1) + lin_bias                    # (Np, OUT) f32

    kernel = functools.partial(xdeepfm_fused_kernel, F=F, D=D, K1=K1, K2=K2)

    def row_spec(shape):
        return pl.BlockSpec(shape, lambda i: (i, 0))

    def cst_spec(arr):
        # constant index_map -> resident across grid steps (tiny, ~1 MiB bf16);
        # single-buffering (pl.Buffered(1)) skipped: VMEM is nowhere near a limit.
        return pl.BlockSpec(tuple(arr.shape), lambda i: (0, 0))

    out = pl.pallas_call(
        kernel,
        out_shape=jax.ShapeDtypeStruct((Np, OUT), jnp.float32),
        grid=(Np // TN,),
        in_specs=[
            row_spec((TN, FD)),                  # streamed embedding (bf16)
            row_spec((TN, OUT)),                 # streamed pre-summed linear term
            cst_spec(wide_rhs), cst_spec(s_pad),
            cst_spec(b1), cst_spec(w2), cst_spec(b2), cst_spec(w3),
            cst_spec(r1), cst_spec(g1), cst_spec(rg2),
        ],
        out_specs=row_spec((TN, OUT)),
        compiler_params=pltpu.CompilerParams(
            dimension_semantics=("parallel",),
            vmem_limit_bytes=64 * 1024 * 1024),
    )(ef, lin, wide_rhs, s_pad, b1, w2, b2, w3, r1, g1, rg2)

    return out[:N]


# ---------------------------------------------------------------------------
# Pure-JAX reference for correctness checking
# ---------------------------------------------------------------------------
def xdeepfm_reference(x, params):
    (embed_table, lin_table, lin_bias,
     w1, b1, w2, b2, w3, b3,
     cin_w1, cin_w2, final_w, final_b, offsets) = params
    N, F = x.shape
    idx = x + offsets[None, :]
    emb = embed_table[idx]
    lin = lin_table[idx].sum(1) + lin_bias
    s = emb.sum(1)
    sq = (emb * emb).sum(1)
    fm = 0.5 * (s * s - sq).sum(1, keepdims=True)
    h = jax.nn.relu(emb.reshape(N, -1) @ w1 + b1)
    h = jax.nn.relu(h @ w2 + b2)
    dfm = lin + fm + h @ w3 + b3
    x0 = emb.transpose(0, 2, 1)
    last, feats = x0, []
    for W in (cin_w1, cin_w2):
        f = jnp.einsum('ndh,ndf,khf->ndk', last, x0, W)
        feats.append(f)
        last = f
    cat = jnp.concatenate(feats, axis=2).sum(axis=1)
    return dfm + cat @ final_w + final_b


if __name__ == "__main__":
    cat_dims = (10, 20, 30, 40, 50, 60, 70, 80)   # 8 categorical fields
    F = len(cat_dims)
    D = 16                                        # embed_dim
    OUT = 4                                       # output_dim
    mlp_dims = (32, 16)
    cin_dims = (8, 8)
    N = 300                                       # batch (exercises tiling + padding)

    key = jax.random.PRNGKey(0)
    ks = jax.random.split(key, 16)
    total = sum(cat_dims)

    embed_table = 0.1 * jax.random.normal(ks[0], (total, D), jnp.float32)
    lin_table = 0.1 * jax.random.normal(ks[1], (total, OUT), jnp.float32)
    lin_bias = 0.1 * jax.random.normal(ks[2], (1, OUT), jnp.float32)
    w1 = 0.1 * jax.random.normal(ks[3], (F * D, mlp_dims[0]), jnp.float32)
    b1 = 0.1 * jax.random.normal(ks[4], (1, mlp_dims[0]), jnp.float32)
    w2 = 0.1 * jax.random.normal(ks[5], (mlp_dims[0], mlp_dims[1]), jnp.float32)
    b2 = 0.1 * jax.random.normal(ks[6], (1, mlp_dims[1]), jnp.float32)
    w3 = 0.1 * jax.random.normal(ks[7], (mlp_dims[1], OUT), jnp.float32)
    b3 = 0.1 * jax.random.normal(ks[8], (1, OUT), jnp.float32)
    # Conv3d weights squeezed to (out_channels K, kernel H, kernel F)
    cin_w1 = 0.1 * jax.random.normal(ks[9], (cin_dims[0], F, F), jnp.float32)
    cin_w2 = 0.1 * jax.random.normal(ks[10], (cin_dims[1], cin_dims[0], F), jnp.float32)
    final_w = 0.1 * jax.random.normal(ks[11], (sum(cin_dims), OUT), jnp.float32)
    final_b = 0.1 * jax.random.normal(ks[12], (1, OUT), jnp.float32)

    offsets = jnp.concatenate(
        [jnp.zeros((1,), jnp.int32),
         jnp.cumsum(jnp.array(cat_dims, jnp.int32))[:-1]])

    x = jax.random.randint(ks[13], (N, F), 0, jnp.array(cat_dims, jnp.int32),
                           dtype=jnp.int32)

    params = (embed_table, lin_table, lin_bias,
              w1, b1, w2, b2, w3, b3,
              cin_w1, cin_w2, final_w, final_b, offsets)

    # one-time weight prep (Kronecker expansion + padding + bf16 cast), then jit
    prep = prepare_xdeepfm(params)
    fwd = jax.jit(xdeepfm_forward)
    out = jax.block_until_ready(fwd(x, prep))

    ref = xdeepfm_reference(x, params)
    assert out.shape == (N, OUT)
    max_err = jnp.max(jnp.abs(out - ref))
    # bf16 compute path: loosen tolerance vs. the f32 reference
    assert jnp.allclose(out, ref, rtol=3e-2, atol=3e-2), (max_err, out, ref)

    print("KERNEL_OK")
</pallas_src>

<mosaic_0001>
module attributes {stable_mosaic.version = 11 : i64} {
  func.func @xdeepfm_fused_kernel(%arg0: i32, %arg1: memref<160x128xbf16, #tpu.memory_space<vmem>>, %arg2: memref<160x4xf32, #tpu.memory_space<vmem>>, %arg3: memref<128x2304xbf16, #tpu.memory_space<vmem>>, %arg4: memref<128x128xbf16, #tpu.memory_space<vmem>>, %arg5: memref<1x128xf32, #tpu.memory_space<vmem>>, %arg6: memref<128x128xbf16, #tpu.memory_space<vmem>>, %arg7: memref<1x128xf32, #tpu.memory_space<vmem>>, %arg8: memref<128x4xbf16, #tpu.memory_space<vmem>>, %arg9: memref<1024x128xbf16, #tpu.memory_space<vmem>>, %arg10: memref<128x4xbf16, #tpu.memory_space<vmem>>, %arg11: memref<1024x4xbf16, #tpu.memory_space<vmem>>, %arg12: memref<160x4xf32, #tpu.memory_space<vmem>>) attributes {dimension_semantics = [#tpu.dimension_semantics<parallel>], iteration_bounds = array<i64: 2>, scalar_prefetch = 0 : i64, scratch_operands = 0 : i64, tpu.core_type = #tpu.core_type<tc>, window_params = [{transform_indices = @transform_0, window_bounds = array<i64: 160, 128>}, {transform_indices = @transform_1, window_bounds = array<i64: 160, 4>}, {pipeline_mode = #tpu.pipeline_mode<synchronous>, transform_indices = @transform_2, window_bounds = array<i64: 128, 2304>}, {pipeline_mode = #tpu.pipeline_mode<synchronous>, transform_indices = @transform_3, window_bounds = array<i64: 128, 128>}, {pipeline_mode = #tpu.pipeline_mode<synchronous>, transform_indices = @transform_4, window_bounds = array<i64: 1, 128>}, {pipeline_mode = #tpu.pipeline_mode<synchronous>, transform_indices = @transform_5, window_bounds = array<i64: 128, 128>}, {pipeline_mode = #tpu.pipeline_mode<synchronous>, transform_indices = @transform_6, window_bounds = array<i64: 1, 128>}, {pipeline_mode = #tpu.pipeline_mode<synchronous>, transform_indices = @transform_7, window_bounds = array<i64: 128, 4>}, {pipeline_mode = #tpu.pipeline_mode<synchronous>, transform_indices = @transform_8, window_bounds = array<i64: 1024, 128>}, {pipeline_mode = #tpu.pipeline_mode<synchronous>, transform_indices = @transform_9, window_bounds = array<i64: 128, 4>}, {pipeline_mode = #tpu.pipeline_mode<synchronous>, transform_indices = @transform_10, window_bounds = array<i64: 1024, 4>}, {transform_indices = @transform_11, window_bounds = array<i64: 160, 4>}]} {
    %c0 = arith.constant 0 : index
    %c0_0 = arith.constant 0 : index
    %0 = vector.load %arg1[%c0, %c0_0] : memref<160x128xbf16, #tpu.memory_space<vmem>>, vector<160x128xbf16>
    %c0_1 = arith.constant 0 : index
    %c0_2 = arith.constant 0 : index
    %1 = vector.load %arg2[%c0_1, %c0_2] : memref<160x4xf32, #tpu.memory_space<vmem>>, vector<160x4xf32>
    %c0_3 = arith.constant 0 : index
    %c0_4 = arith.constant 0 : index
    %2 = vector.load %arg3[%c0_3, %c0_4] : memref<128x2304xbf16, #tpu.memory_space<vmem>>, vector<128x2304xbf16>
    %cst = arith.constant dense<0.000000e+00> : vector<160x2304xf32>
    %3 = tpu.matmul %0, %2, %cst {dimension_numbers = #tpu.dot_dimension_numbers<[1], [0], [0], [1], [0, 0, 1, 1], [], []>} : vector<160x128xbf16>, vector<128x2304xbf16>, vector<160x2304xf32> -> vector<160x2304xf32>
    %4 = vector.extract_strided_slice %3 {offsets = [0, 2048], sizes = [160, 128], strides = [1, 1]} : vector<160x2304xf32> to vector<160x128xf32>
    %5 = arith.mulf %0, %0 : vector<160x128xbf16>
    %c0_5 = arith.constant 0 : index
    %c0_6 = arith.constant 0 : index
    %6 = vector.load %arg4[%c0_5, %c0_6] : memref<128x128xbf16, #tpu.memory_space<vmem>>, vector<128x128xbf16>
    %cst_7 = arith.constant dense<0.000000e+00> : vector<160x128xf32>
    %7 = tpu.matmul %5, %6, %cst_7 {dimension_numbers = #tpu.dot_dimension_numbers<[1], [0], [0], [1], [0, 0, 1, 1], [], []>} : vector<160x128xbf16>, vector<128x128xbf16>, vector<160x128xf32> -> vector<160x128xf32>
    %8 = arith.mulf %4, %4 : vector<160x128xf32>
    %9 = arith.subf %8, %7 : vector<160x128xf32>
    %cst_8 = arith.constant dense<0.000000e+00> : vector<160xf32>
    %10 = vector.multi_reduction <add>, %9, %cst_8 [1] : vector<160x128xf32> to vector<160xf32>
    %11 = vector.shape_cast %10 : vector<160xf32> to vector<160x1xf32>
    %cst_9 = arith.constant 5.000000e-01 : f32
    %12 = vector.broadcast %cst_9 : f32 to vector<160x1xf32>
    %13 = arith.mulf %12, %11 : vector<160x1xf32>
    %14 = vector.broadcast %13 : vector<160x1xf32> to vector<160x4xf32>
    %15 = arith.addf %1, %14 : vector<160x4xf32>
    %16 = vector.extract_strided_slice %3 {offsets = [0, 2176], sizes = [160, 128], strides = [1, 1]} : vector<160x2304xf32> to vector<160x128xf32>
    %c0_10 = arith.constant 0 : index
    %c0_11 = arith.constant 0 : index
    %17 = vector.load %arg5[%c0_10, %c0_11] : memref<1x128xf32, #tpu.memory_space<vmem>>, vector<1x128xf32>
    %18 = vector.broadcast %17 : vector<1x128xf32> to vector<160x128xf32>
    %19 = arith.addf %16, %18 : vector<160x128xf32>
    %cst_12 = arith.constant 0.000000e+00 : f32
    %20 = vector.broadcast %cst_12 : f32 to vector<160x128xf32>
    %21 = arith.maximumf %19, %20 : vector<160x128xf32>
    %22 = arith.truncf %21 : vector<160x128xf32> to vector<160x128xbf16>
    %c0_13 = arith.constant 0 : index
    %c0_14 = arith.constant 0 : index
    %23 = vector.load %arg6[%c0_13, %c0_14] : memref<128x128xbf16, #tpu.memory_space<vmem>>, vector<128x128xbf16>
    %cst_15 = arith.constant dense<0.000000e+00> : vector<160x128xf32>
    %24 = tpu.matmul %22, %23, %cst_15 {dimension_numbers = #tpu.dot_dimension_numbers<[1], [0], [0], [1], [0, 0, 1, 1], [], []>} : vector<160x128xbf16>, vector<128x128xbf16>, vector<160x128xf32> -> vector<160x128xf32>
    %c0_16 = arith.constant 0 : index
    %c0_17 = arith.constant 0 : index
    %25 = vector.load %arg7[%c0_16, %c0_17] : memref<1x128xf32, #tpu.memory_space<vmem>>, vector<1x128xf32>
    %26 = vector.broadcast %25 : vector<1x128xf32> to vector<160x128xf32>
    %27 = arith.addf %24, %26 : vector<160x128xf32>
    %cst_18 = arith.constant 0.000000e+00 : f32
    %28 = vector.broadcast %cst_18 : f32 to vector<160x128xf32>
    %29 = arith.maximumf %27, %28 : vector<160x128xf32>
    %30 = arith.truncf %29 : vector<160x128xf32> to vector<160x128xbf16>
    %c0_19 = arith.constant 0 : index
    %c0_20 = arith.constant 0 : index
    %31 = vector.load %arg8[%c0_19, %c0_20] : memref<128x4xbf16, #tpu.memory_space<vmem>>, vector<128x4xbf16>
    %cst_21 = arith.constant dense<0.000000e+00> : vector<160x4xf32>
    %32 = tpu.matmul %30, %31, %cst_21 {dimension_numbers = #tpu.dot_dimension_numbers<[1], [0], [0], [1], [0, 0, 1, 1], [], []>} : vector<160x128xbf16>, vector<128x4xbf16>, vector<160x4xf32> -> vector<160x4xf32>
    %33 = arith.addf %15, %32 : vector<160x4xf32>
    %34 = vector.extract_strided_slice %3 {offsets = [0, 0], sizes = [160, 1024], strides = [1, 1]} : vector<160x2304xf32> to vector<160x1024xf32>
    %35 = tpu.concatenate %0, %0, %0, %0, %0, %0, %0, %0 in 1 : vector<160x128xbf16>, vector<160x128xbf16>, vector<160x128xbf16>, vector<160x128xbf16>, vector<160x128xbf16>, vector<160x128xbf16>, vector<160x128xbf16>, vector<160x128xbf16> -> vector<160x1024xbf16>
    %36 = arith.extf %35 : vector<160x1024xbf16> to vector<160x1024xf32>
    %37 = arith.mulf %36, %34 : vector<160x1024xf32>
    %38 = arith.truncf %37 : vector<160x1024xf32> to vector<160x1024xbf16>
    %c0_22 = arith.constant 0 : index
    %c0_23 = arith.constant 0 : index
    %39 = vector.load %arg9[%c0_22, %c0_23] : memref<1024x128xbf16, #tpu.memory_space<vmem>>, vector<1024x128xbf16>
    %cst_24 = arith.constant dense<0.000000e+00> : vector<160x128xf32>
    %40 = tpu.matmul %38, %39, %cst_24 {dimension_numbers = #tpu.dot_dimension_numbers<[1], [0], [0], [1], [0, 0, 1, 1], [], []>} : vector<160x1024xbf16>, vector<1024x128xbf16>, vector<160x128xf32> -> vector<160x128xf32>
    %41 = arith.truncf %40 : vector<160x128xf32> to vector<160x128xbf16>
    %c0_25 = arith.constant 0 : index
    %c0_26 = arith.constant 0 : index
    %42 = vector.load %arg10[%c0_25, %c0_26] : memref<128x4xbf16, #tpu.memory_space<vmem>>, vector<128x4xbf16>
    %cst_27 = arith.constant dense<0.000000e+00> : vector<160x4xf32>
    %43 = tpu.matmul %41, %42, %cst_27 {dimension_numbers = #tpu.dot_dimension_numbers<[1], [0], [0], [1], [0, 0, 1, 1], [], []>} : vector<160x128xbf16>, vector<128x4xbf16>, vector<160x4xf32> -> vector<160x4xf32>
    %44 = arith.addf %33, %43 : vector<160x4xf32>
    %45 = vector.extract_strided_slice %3 {offsets = [0, 1024], sizes = [160, 1024], strides = [1, 1]} : vector<160x2304xf32> to vector<160x1024xf32>
    %46 = tpu.concatenate %41, %41, %41, %41, %41, %41, %41, %41 in 1 : vector<160x128xbf16>, vector<160x128xbf16>, vector<160x128xbf16>, vector<160x128xbf16>, vector<160x128xbf16>, vector<160x128xbf16>, vector<160x128xbf16>, vector<160x128xbf16> -> vector<160x1024xbf16>
    %47 = arith.extf %46 : vector<160x1024xbf16> to vector<160x1024xf32>
    %48 = arith.mulf %47, %45 : vector<160x1024xf32>
    %49 = arith.truncf %48 : vector<160x1024xf32> to vector<160x1024xbf16>
    %c0_28 = arith.constant 0 : index
    %c0_29 = arith.constant 0 : index
    %50 = vector.load %arg11[%c0_28, %c0_29] : memref<1024x4xbf16, #tpu.memory_space<vmem>>, vector<1024x4xbf16>
    %cst_30 = arith.constant dense<0.000000e+00> : vector<160x4xf32>
    %51 = tpu.matmul %49, %50, %cst_30 {dimension_numbers = #tpu.dot_dimension_numbers<[1], [0], [0], [1], [0, 0, 1, 1], [], []>} : vector<160x1024xbf16>, vector<1024x4xbf16>, vector<160x4xf32> -> vector<160x4xf32>
    %52 = arith.addf %44, %51 : vector<160x4xf32>
    %c0_31 = arith.constant 0 : index
    %c0_32 = arith.constant 0 : index
    %53 = vector.load %arg12[%c0_31, %c0_32] : memref<160x4xf32, #tpu.memory_space<vmem>>, vector<160x4xf32>
    tpu.vector_store %arg12[%c0_31, %c0_32], %52 {strides = array<i32>} : memref<160x4xf32, #tpu.memory_space<vmem>>, vector<160x4xf32>,
    return
  }
  func.func @transform_0(%arg0: i32) -> (i32, i32) {
    %c0_i32 = arith.constant 0 : i32
    %c0_i32_0 = arith.constant 0 : i32
    return %arg0, %c0_i32 : i32, i32
  }
  func.func @transform_1(%arg0: i32) -> (i32, i32) {
    %c0_i32 = arith.constant 0 : i32
    %c0_i32_0 = arith.constant 0 : i32
    return %arg0, %c0_i32 : i32, i32
  }
  func.func @transform_2(%arg0: i32) -> (i32, i32) {
    %c0_i32 = arith.constant 0 : i32
    %c0_i32_0 = arith.constant 0 : i32
    %c0_i32_1 = arith.constant 0 : i32
    return %c0_i32, %c0_i32_0 : i32, i32
  }
  func.func @transform_3(%arg0: i32) -> (i32, i32) {
    %c0_i32 = arith.constant 0 : i32
    %c0_i32_0 = arith.constant 0 : i32
    %c0_i32_1 = arith.constant 0 : i32
    return %c0_i32, %c0_i32_0 : i32, i32
  }
  func.func @transform_4(%arg0: i32) -> (i32, i32) {
    %c0_i32 = arith.constant 0 : i32
    %c0_i32_0 = arith.constant 0 : i32
    %c0_i32_1 = arith.constant 0 : i32
    return %c0_i32, %c0_i32_0 : i32, i32
  }
  func.func @transform_5(%arg0: i32) -> (i32, i32) {
    %c0_i32 = arith.constant 0 : i32
    %c0_i32_0 = arith.constant 0 : i32
    %c0_i32_1 = arith.constant 0 : i32
    return %c0_i32, %c0_i32_0 : i32, i32
  }
  func.func @transform_6(%arg0: i32) -> (i32, i32) {
    %c0_i32 = arith.constant 0 : i32
    %c0_i32_0 = arith.constant 0 : i32
    %c0_i32_1 = arith.constant 0 : i32
    return %c0_i32, %c0_i32_0 : i32, i32
  }
  func.func @transform_7(%arg0: i32) -> (i32, i32) {
    %c0_i32 = arith.constant 0 : i32
    %c0_i32_0 = arith.constant 0 : i32
    %c0_i32_1 = arith.constant 0 : i32
    return %c0_i32, %c0_i32_0 : i32, i32
  }
  func.func @transform_8(%arg0: i32) -> (i32, i32) {
    %c0_i32 = arith.constant 0 : i32
    %c0_i32_0 = arith.constant 0 : i32
    %c0_i32_1 = arith.constant 0 : i32
    return %c0_i32, %c0_i32_0 : i32, i32
  }
  func.func @transform_9(%arg0: i32) -> (i32, i32) {
    %c0_i32 = arith.constant 0 : i32
    %c0_i32_0 = arith.constant 0 : i32
    %c0_i32_1 = arith.constant 0 : i32
    return %c0_i32, %c0_i32_0 : i32, i32
  }
  func.func @transform_10(%arg0: i32) -> (i32, i32) {
    %c0_i32 = arith.constant 0 : i32
    %c0_i32_0 = arith.constant 0 : i32
    %c0_i32_1 = arith.constant 0 : i32
    return %c0_i32, %c0_i32_0 : i32, i32
  }
  func.func @transform_11(%arg0: i32) -> (i32, i32) {
    %c0_i32 = arith.constant 0 : i32
    %c0_i32_0 = arith.constant 0 : i32
    return %arg0, %c0_i32 : i32, i32
  }
}

</mosaic_0001>

<llo_original>
// kernel: xdeepfm_forward.1
$region0: #{xdeepfm_forward.1}
  #allocation0 [shape = 'u32[]', space=smem, size = 0x4, offset = 0x4, fixed_abs, tag = 'smem constant byte address 0x4 - core index']
  #allocation1 [shape = 'u32[72,128]{1,0:T(1,128)}', space=vmem, size = 0x9000, scoped, tag = 'internal scratch']
  %s0 = inlined_call_operand.vmem [shape: bf16[320,128], index: 0, kind: input, shape index: {}]
  %s1 = inlined_call_operand.vmem [shape: f32[320,4], index: 1, kind: input, shape index: {}]
  %s2 = inlined_call_operand.vmem [shape: bf16[128,2304], index: 2, kind: input, shape index: {}]
  %s3 = inlined_call_operand.vmem [shape: bf16[128,128], index: 3, kind: input, shape index: {}]
  %s4 = inlined_call_operand.vmem [shape: f32[1,128], index: 4, kind: input, shape index: {}]
  %s5 = inlined_call_operand.vmem [shape: bf16[128,128], index: 5, kind: input, shape index: {}]
  %s6 = inlined_call_operand.vmem [shape: f32[1,128], index: 6, kind: input, shape index: {}]
  %s7 = inlined_call_operand.vmem [shape: bf16[128,4], index: 7, kind: input, shape index: {}]
  %s8 = inlined_call_operand.vmem [shape: bf16[1024,128], index: 8, kind: input, shape index: {}]
  %s9 = inlined_call_operand.vmem [shape: bf16[128,4], index: 9, kind: input, shape index: {}]
  %s10 = inlined_call_operand.vmem [shape: bf16[1024,4], index: 10, kind: input, shape index: {}]
  %s11 = inlined_call_operand.vmem [shape: f32[320,4], index: 11, kind: output, shape index: {}]
  %s12 = sld [smem:[#allocation0]]
  $region77: #{xdeepfm_forward.1} parent=0
    _
  %s14 = ssub.s32 1, %s12
  %s15 = scalar_select 0, %s14, %s12
  loop: start=0, step=1, limit=4
  $region2: #{xdeepfm_forward.1} parent=0 // loop_pre_header
    _
  $region3: #{xdeepfm_forward.1} parent=0 // loop_header
    %s17 = sphi 0, %s21
    %p18 = scmp.ge.s32.totalorder %s17, 4
    %s27 = sphi 0, %s29
    %s30 = sphi 0, %s27
    %s31 = sphi 0, %s30
    %s47 = sphi 0, %s31
    %s53 = sphi 0, %s55
    %s56 = sphi 0, %s53
    %s57 = sphi 0, %s56
    %s73 = sphi 0, %s57
    %s77 = sphi 0, %s77
    %s79 = sphi 0, %s77
    %s80 = sphi 0, %s79
    %s94 = sphi 0, %s80
    %s98 = sphi 0, %s98
    %s100 = sphi 0, %s98
    %s101 = sphi 0, %s100
    %s115 = sphi 0, %s101
    %s119 = sphi 0, %s119
    %s121 = sphi 0, %s119
    %s122 = sphi 0, %s121
    %s136 = sphi 0, %s122
    %s140 = sphi 0, %s140
    %s142 = sphi 0, %s140
    %s143 = sphi 0, %s142
    %s157 = sphi 0, %s143
    %s161 = sphi 0, %s161
    %s163 = sphi 0, %s161
    %s164 = sphi 0, %s163
    %s178 = sphi 0, %s164
    %s182 = sphi 0, %s182
    %s184 = sphi 0, %s182
    %s185 = sphi 0, %s184
    %s199 = sphi 0, %s185
    %s203 = sphi 0, %s203
    %s205 = sphi 0, %s203
    %s206 = sphi 0, %s205
    %s220 = sphi 0, %s206
    %s224 = sphi 0, %s224
    %s226 = sphi 0, %s224
    %s227 = sphi 0, %s226
    %s241 = sphi 0, %s227
    %s245 = sphi 0, %s245
    %s247 = sphi 0, %s245
    %s248 = sphi 0, %s247
    %s262 = sphi 0, %s248
    %s268 = sphi 0, %s270
    %s271 = sphi 0, %s268
    %s272 = sphi 0, %s271
    %s288 = sphi 0, %s272
  $region4: #{xdeepfm_forward.1} parent=0 // loop_header_branch
    %20 = sbr.rel (%p18) target = $region8
  $region5: #{xdeepfm_forward.1} parent=0 // loop_body
    %s22 = ssub.s32 %s17, 1
    %s23 = ssub.s32 %s17, 2
    %s24 = sadd.s32 %s17, 1
    %s25 = ssub.s32 %s17, %s24
    %p26 = scmp.eq.s32.totalorder %s25, 0
    %s28 = sadd.s32 %s27, 1
    %s29 = scalar_select %p26, %s27, %s28
    %p32 = pneg %p26
    %p33 = scmp.eq.s32.totalorder %s17, 1
    %p34 = por %p32, %p33
    %p35 = scmp.ne.s32.totalorder %s27, %s30
    %p36 = scmp.eq.s32.totalorder %s17, 0
    %p37 = por %p35, %p36
    %p38 = scmp.ne.s32.totalorder %s27, %s30
    %p39 = scmp.eq.s32.totalorder %s22, 1
    %p40 = por %p38, %p39
    %p41 = scmp.ne.s32.totalorder %s30, %s31
    %p42 = scmp.eq.s32.totalorder %s22, 0
    %p43 = por %p41, %p42
    %p44 = scmp.ne.s32.totalorder %s30, %s31
    %p45 = scmp.eq.s32.totalorder %s23, 1
    %p46 = por %p44, %p45
    %p48 = scmp.ne.s32.totalorder %s31, %s47
    %p49 = scmp.eq.s32.totalorder %s23, 0
    %p50 = por %p48, %p49
    %s51 = ssub.s32 %s17, %s24
    %p52 = scmp.eq.s32.totalorder %s51, 0
    %s54 = sadd.s32 %s53, 1
    %s55 = scalar_select %p52, %s53, %s54
    %p58 = pneg %p52
    %p59 = scmp.eq.s32.totalorder %s17, 1
    %p60 = por %p58, %p59
    %p61 = scmp.ne.s32.totalorder %s53, %s56
    %p62 = scmp.eq.s32.totalorder %s17, 0
    %p63 = por %p61, %p62
    %p64 = scmp.ne.s32.totalorder %s53, %s56
    %p65 = scmp.eq.s32.totalorder %s22, 1
    %p66 = por %p64, %p65
    %p67 = scmp.ne.s32.totalorder %s56, %s57
    %p68 = scmp.eq.s32.totalorder %s22, 0
    %p69 = por %p67, %p68
    %p70 = scmp.ne.s32.totalorder %s56, %s57
    %p71 = scmp.eq.s32.totalorder %s23, 1
    %p72 = por %p70, %p71
    %p74 = scmp.ne.s32.totalorder %s57, %s73
    %p75 = scmp.eq.s32.totalorder %s23, 0
    %p76 = por %p74, %p75
    %s78 = sadd.s32 %s77, 1
    %p81 = scmp.eq.s32.totalorder %s17, 1
    %p82 = scmp.ne.s32.totalorder %s77, %s79
    %p83 = scmp.eq.s32.totalorder %s17, 0
    %p84 = por %p82, %p83
    %p85 = scmp.ne.s32.totalorder %s77, %s79
    %p86 = scmp.eq.s32.totalorder %s22, 1
    %p87 = por %p85, %p86
    %p88 = scmp.ne.s32.totalorder %s79, %s80
    %p89 = scmp.eq.s32.totalorder %s22, 0
    %p90 = por %p88, %p89
    %p91 = scmp.ne.s32.totalorder %s79, %s80
    %p92 = scmp.eq.s32.totalorder %s23, 1
    %p93 = por %p91, %p92
    %p95 = scmp.ne.s32.totalorder %s80, %s94
    %p96 = scmp.eq.s32.totalorder %s23, 0
    %p97 = por %p95, %p96
    %s99 = sadd.s32 %s98, 1
    %p102 = scmp.eq.s32.totalorder %s17, 1
    %p103 = scmp.ne.s32.totalorder %s98, %s100
    %p104 = scmp.eq.s32.totalorder %s17, 0
    %p105 = por %p103, %p104
    %p106 = scmp.ne.s32.totalorder %s98, %s100
    %p107 = scmp.eq.s32.totalorder %s22, 1
    %p108 = por %p106, %p107
    %p109 = scmp.ne.s32.totalorder %s100, %s101
    %p110 = scmp.eq.s32.totalorder %s22, 0
    %p111 = por %p109, %p110
    %p112 = scmp.ne.s32.totalorder %s100, %s101
    %p113 = scmp.eq.s32.totalorder %s23, 1
    %p114 = por %p112, %p113
    %p116 = scmp.ne.s32.totalorder %s101, %s115
    %p117 = scmp.eq.s32.totalorder %s23, 0
    %p118 = por %p116, %p117
    %s120 = sadd.s32 %s119, 1
    %p123 = scmp.eq.s32.totalorder %s17, 1
    %p124 = scmp.ne.s32.totalorder %s119, %s121
    %p125 = scmp.eq.s32.totalorder %s17, 0
    %p126 = por %p124, %p125
    %p127 = scmp.ne.s32.totalorder %s119, %s121
    %p128 = scmp.eq.s32.totalorder %s22, 1
    %p129 = por %p127, %p128
    %p130 = scmp.ne.s32.totalorder %s121, %s122
    %p131 = scmp.eq.s32.totalorder %s22, 0
    %p132 = por %p130, %p131
    %p133 = scmp.ne.s32.totalorder %s121, %s122
    %p134 = scmp.eq.s32.totalorder %s23, 1
    %p135 = por %p133, %p134
    %p137 = scmp.ne.s32.totalorder %s122, %s136
    %p138 = scmp.eq.s32.totalorder %s23, 0
    %p139 = por %p137, %p138
    %s141 = sadd.s32 %s140, 1
    %p144 = scmp.eq.s32.totalorder %s17, 1
    %p145 = scmp.ne.s32.totalorder %s140, %s142
    %p146 = scmp.eq.s32.totalorder %s17, 0
    %p147 = por %p145, %p146
    %p148 = scmp.ne.s32.totalorder %s140, %s142
    %p149 = scmp.eq.s32.totalorder %s22, 1
    %p150 = por %p148, %p149
    %p151 = scmp.ne.s32.totalorder %s142, %s143
    %p152 = scmp.eq.s32.totalorder %s22, 0
    %p153 = por %p151, %p152
    %p154 = scmp.ne.s32.totalorder %s142, %s143
    %p155 = scmp.eq.s32.totalorder %s23, 1
    %p156 = por %p154, %p155
    %p158 = scmp.ne.s32.totalorder %s143, %s157
    %p159 = scmp.eq.s32.totalorder %s23, 0
    %p160 = por %p158, %p159
    %s162 = sadd.s32 %s161, 1
    %p165 = scmp.eq.s32.totalorder %s17, 1
    %p166 = scmp.ne.s32.totalorder %s161, %s163
    %p167 = scmp.eq.s32.totalorder %s17, 0
    %p168 = por %p166, %p167
    %p169 = scmp.ne.s32.totalorder %s161, %s163
    %p170 = scmp.eq.s32.totalorder %s22, 1
    %p171 = por %p169, %p170
    %p172 = scmp.ne.s32.totalorder %s163, %s164
    %p173 = scmp.eq.s32.totalorder %s22, 0
    %p174 = por %p172, %p173
    %p175 = scmp.ne.s32.totalorder %s163, %s164
    %p176 = scmp.eq.s32.totalorder %s23, 1
    %p177 = por %p175, %p176
    %p179 = scmp.ne.s32.totalorder %s164, %s178
    %p180 = scmp.eq.s32.totalorder %s23, 0
    %p181 = por %p179, %p180
    %s183 = sadd.s32 %s182, 1
    %p186 = scmp.eq.s32.totalorder %s17, 1
    %p187 = scmp.ne.s32.totalorder %s182, %s184
    %p188 = scmp.eq.s32.totalorder %s17, 0
    %p189 = por %p187, %p188
    %p190 = scmp.ne.s32.totalorder %s182, %s184
    %p191 = scmp.eq.s32.totalorder %s22, 1
    %p192 = por %p190, %p191
    %p193 = scmp.ne.s32.totalorder %s184, %s185
    %p194 = scmp.eq.s32.totalorder %s22, 0
    %p195 = por %p193, %p194
    %p196 = scmp.ne.s32.totalorder %s184, %s185
    %p197 = scmp.eq.s32.totalorder %s23, 1
    %p198 = por %p196, %p197
    %p200 = scmp.ne.s32.totalorder %s185, %s199
    %p201 = scmp.eq.s32.totalorder %s23, 0
    %p202 = por %p200, %p201
    %s204 = sadd.s32 %s203, 1
    %p207 = scmp.eq.s32.totalorder %s17, 1
    %p208 = scmp.ne.s32.totalorder %s203, %s205
    %p209 = scmp.eq.s32.totalorder %s17, 0
    %p210 = por %p208, %p209
    %p211 = scmp.ne.s32.totalorder %s203, %s205
    %p212 = scmp.eq.s32.totalorder %s22, 1
    %p213 = por %p211, %p212
    %p214 = scmp.ne.s32.totalorder %s205, %s206
    %p215 = scmp.eq.s32.totalorder %s22, 0
    %p216 = por %p214, %p215
    %p217 = scmp.ne.s32.totalorder %s205, %s206
    %p218 = scmp.eq.s32.totalorder %s23, 1
    %p219 = por %p217, %p218
    %p221 = scmp.ne.s32.totalorder %s206, %s220
    %p222 = scmp.eq.s32.totalorder %s23, 0
    %p223 = por %p221, %p222
    %s225 = sadd.s32 %s224, 1
    %p228 = scmp.eq.s32.totalorder %s17, 1
    %p229 = scmp.ne.s32.totalorder %s224, %s226
    %p230 = scmp.eq.s32.totalorder %s17, 0
    %p231 = por %p229, %p230
    %p232 = scmp.ne.s32.totalorder %s224, %s226
    %p233 = scmp.eq.s32.totalorder %s22, 1
    %p234 = por %p232, %p233
    %p235 = scmp.ne.s32.totalorder %s226, %s227
    %p236 = scmp.eq.s32.totalorder %s22, 0
    %p237 = por %p235, %p236
    %p238 = scmp.ne.s32.totalorder %s226, %s227
    %p239 = scmp.eq.s32.totalorder %s23, 1
    %p240 = por %p238, %p239
    %p242 = scmp.ne.s32.totalorder %s227, %s241
    %p243 = scmp.eq.s32.totalorder %s23, 0
    %p244 = por %p242, %p243
    %s246 = sadd.s32 %s245, 1
    %p249 = scmp.eq.s32.totalorder %s17, 1
    %p250 = scmp.ne.s32.totalorder %s245, %s247
    %p251 = scmp.eq.s32.totalorder %s17, 0
    %p252 = por %p250, %p251
    %p253 = scmp.ne.s32.totalorder %s245, %s247
    %p254 = scmp.eq.s32.totalorder %s22, 1
    %p255 = por %p253, %p254
    %p256 = scmp.ne.s32.totalorder %s247, %s248
    %p257 = scmp.eq.s32.totalorder %s22, 0
    %p258 = por %p256, %p257
    %p259 = scmp.ne.s32.totalorder %s247, %s248
    %p260 = scmp.eq.s32.totalorder %s23, 1
    %p261 = por %p259, %p260
    %p263 = scmp.ne.s32.totalorder %s248, %s262
    %p264 = scmp.eq.s32.totalorder %s23, 0
    %p265 = por %p263, %p264
    %s266 = ssub.s32 %s17, %s24
    %p267 = scmp.eq.s32.totalorder %s266, 0
    %s269 = sadd.s32 %s268, 1
    %s270 = scalar_select %p267, %s268, %s269
    %p273 = pneg %p267
    %p274 = scmp.eq.s32.totalorder %s17, 1
    %p275 = por %p273, %p274
    %p276 = scmp.ne.s32.totalorder %s268, %s271
    %p277 = scmp.eq.s32.totalorder %s17, 0
    %p278 = por %p276, %p277
    %p279 = scmp.ne.s32.totalorder %s268, %s271
    %p280 = scmp.eq.s32.totalorder %s22, 1
    %p281 = por %p279, %p280
    %p282 = scmp.ne.s32.totalorder %s271, %s272
    %p283 = scmp.eq.s32.totalorder %s22, 0
    %p284 = por %p282, %p283
    %p285 = scmp.ne.s32.totalorder %s271, %s272
    %p286 = scmp.eq.s32.totalorder %s23, 1
    %p287 = por %p285, %p286
    %p289 = scmp.ne.s32.totalorder %s272, %s288
    %p290 = scmp.eq.s32.totalorder %s23, 0
    %p291 = por %p289, %p290
    %p292 = scmp.le.s32.totalorder 1, %s17
    %p293 = scmp.lt.s32.totalorder %s17, 3
    %p294 = pnand %p292, %p293
    %p295 = pneg %p294
    // Predicated region
    $region9: #{xdeepfm_forward.1} parent=5 // pred_check
      _
    $region10: #{xdeepfm_forward.1} parent=5 // pred_check_branch
      %297 = sbr.rel (%p294) target = $region12
    $region11: #{xdeepfm_forward.1} parent=5 // pred_region
      %s298 = ssub.s32 %s17, 1
      // Predicated region
      $region13: #{xdeepfm_forward.1} parent=11 // pred_check
        %p299 = pneg %p90
      $region14: #{xdeepfm_forward.1} parent=11 // pred_check_branch
        %301 = sbr.rel (%p299) target = $region16
      $region15: #{xdeepfm_forward.1} parent=11 // pred_region
        _
      $region16: #{xdeepfm_forward.1} parent=11 // pred_fallthru
        _
      // Predicated region
      $region17: #{xdeepfm_forward.1} parent=11 // pred_check
        %p302 = pneg %p111
      $region18: #{xdeepfm_forward.1} parent=11 // pred_check_branch
        %304 = sbr.rel (%p302) target = $region20
      $region19: #{xdeepfm_forward.1} parent=11 // pred_region
        _
      $region20: #{xdeepfm_forward.1} parent=11 // pred_fallthru
        _
      // Predicated region
      $region21: #{xdeepfm_forward.1} parent=11 // pred_check
        %p305 = pneg %p132
      $region22: #{xdeepfm_forward.1} parent=11 // pred_check_branch
        %307 = sbr.rel (%p305) target = $region24
      $region23: #{xdeepfm_forward.1} parent=11 // pred_region
        _
      $region24: #{xdeepfm_forward.1} parent=11 // pred_fallthru
        _
      // Predicated region
      $region25: #{xdeepfm_forward.1} parent=11 // pred_check
        %p308 = pneg %p153
      $region26: #{xdeepfm_forward.1} parent=11 // pred_check_branch
        %310 = sbr.rel (%p308) target = $region28
      $region27: #{xdeepfm_forward.1} parent=11 // pred_region
        _
      $region28: #{xdeepfm_forward.1} parent=11 // pred_fallthru
        _
      // Predicated region
      $region29: #{xdeepfm_forward.1} parent=11 // pred_check
        %p311 = pneg %p174
      $region30: #{xdeepfm_forward.1} parent=11 // pred_check_branch
        %313 = sbr.rel (%p311) target = $region32
      $region31: #{xdeepfm_forward.1} parent=11 // pred_region
        _
      $region32: #{xdeepfm_forward.1} parent=11 // pred_fallthru
        _
      // Predicated region
      $region33: #{xdeepfm_forward.1} parent=11 // pred_check
        %p314 = pneg %p195
      $region34: #{xdeepfm_forward.1} parent=11 // pred_check_branch
        %316 = sbr.rel (%p314) target = $region36
      $region35: #{xdeepfm_forward.1} parent=11 // pred_region
        _
      $region36: #{xdeepfm_forward.1} parent=11 // pred_fallthru
        _
      // Predicated region
      $region37: #{xdeepfm_forward.1} parent=11 // pred_check
        %p317 = pneg %p216
      $region38: #{xdeepfm_forward.1} parent=11 // pred_check_branch
        %319 = sbr.rel (%p317) target = $region40
      $region39: #{xdeepfm_forward.1} parent=11 // pred_region
        _
      $region40: #{xdeepfm_forward.1} parent=11 // pred_fallthru
        _
      // Predicated region
      $region41: #{xdeepfm_forward.1} parent=11 // pred_check
        %p320 = pneg %p237
      $region42: #{xdeepfm_forward.1} parent=11 // pred_check_branch
        %322 = sbr.rel (%p320) target = $region44
      $region43: #{xdeepfm_forward.1} parent=11 // pred_region
        _
      $region44: #{xdeepfm_forward.1} parent=11 // pred_fallthru
        _
      // Predicated region
      $region45: #{xdeepfm_forward.1} parent=11 // pred_check
        %p323 = pneg %p258
      $region46: #{xdeepfm_forward.1} parent=11 // pred_check_branch
        %325 = sbr.rel (%p323) target = $region48
      $region47: #{xdeepfm_forward.1} parent=11 // pred_region
        _
      $region48: #{xdeepfm_forward.1} parent=11 // pred_fallthru
        _
    $region12: #{xdeepfm_forward.1} parent=5 // pred_fallthru
      _
    %p326 = scmp.lt.s32.totalorder %s17, 2
    // Predicated region
    $region49: #{xdeepfm_forward.1} parent=5 // pred_check
      %p327 = pneg %p326
    $region50: #{xdeepfm_forward.1} parent=5 // pred_check_branch
      %329 = sbr.rel (%p327) target = $region52
    $region51: #{xdeepfm_forward.1} parent=5 // pred_region
      // Predicated region
      $region53: #{xdeepfm_forward.1} parent=51 // pred_check
        %p330 = pneg %p37
      $region54: #{xdeepfm_forward.1} parent=51 // pred_check_branch
        %332 = sbr.rel (%p330) target = $region56
      $region55: #{xdeepfm_forward.1} parent=51 // pred_region
        %s333 = smul.u32 20, %s17
        %p334 = scmp.lt.s32.totalorder %s333, 39
        %s335 = scalar_select %p334, %s333, 39
        %s336 = smul.addr %s335, 4
        %s337 = scalar_lea.vmem %s0, %s336
        %s338 = smul.u32 20, %s17
      $region56: #{xdeepfm_forward.1} parent=51 // pred_fallthru
        _
      // Predicated region
      $region57: #{xdeepfm_forward.1} parent=51 // pred_check
        %p339 = pneg %p63
      $region58: #{xdeepfm_forward.1} parent=51 // pred_check_branch
        %341 = sbr.rel (%p339) target = $region60
      $region59: #{xdeepfm_forward.1} parent=51 // pred_region
        %s342 = smul.u32 20, %s17
        %p343 = scmp.lt.s32.totalorder %s342, 39
        %s344 = scalar_select %p343, %s342, 39
        %s345 = smul.addr %s344, 8
        %s346 = scalar_lea.vmem %s1, %s345
        %s347 = smul.u32 20, %s17
      $region60: #{xdeepfm_forward.1} parent=51 // pred_fallthru
        _
    $region52: #{xdeepfm_forward.1} parent=5 // pred_fallthru
      _
    %p348 = scmp.le.s32.totalorder 1, %s17
    %p349 = scmp.lt.s32.totalorder %s17, 3
    %p350 = pnand %p348, %p349
    %p351 = pneg %p350
    // Predicated region
    $region61: #{xdeepfm_forward.1} parent=5 // pred_check
      _
    $region62: #{xdeepfm_forward.1} parent=5 // pred_check_branch
      %353 = sbr.rel (%p350) target = $region64
    $region63: #{xdeepfm_forward.1} parent=5 // pred_region
      %s354 = ssub.s32 %s17, 1
      %s355 = smul.u32 20, %s22
      %p356 = scmp.lt.s32.totalorder %s355, 39
      %s357 = scalar_select %p356, %s355, 39
      %s358 = smul.addr %s357, 4
      %s359 = scalar_lea.vmem %s0, %s358
      %p360 = pneg %p43
      %p361 = pneg %p40
      %s362 = smul.u32 20, %s22
      %p363 = scmp.lt.s32.totalorder %s362, 39
      %s364 = scalar_select %p363, %s362, 39
      %s365 = smul.addr %s364, 8
      %s366 = scalar_lea.vmem %s1, %s365
      %p367 = pneg %p69
      %p368 = pneg %p66
      %p369 = pneg %p90
      %p370 = pneg %p87
      %p371 = pneg %p111
      %p372 = pneg %p108
      %p373 = pneg %p132
      %p374 = pneg %p129
      %p375 = pneg %p153
      %p376 = pneg %p150
      %p377 = pneg %p174
      %p378 = pneg %p171
      %p379 = pneg %p195
      %p380 = pneg %p192
      %p381 = pneg %p216
      %p382 = pneg %p213
      %p383 = pneg %p237
      %p384 = pneg %p234
      %p385 = pneg %p258
      %p386 = pneg %p255
      %p387 = pneg %p284
      %p388 = pneg %p281
      %s389 = smul.u32 20, %s22
      %p390 = scmp.lt.s32.totalorder %s389, 39
      %s391 = scalar_select %p390, %s389, 39
      %s392 = smul.addr %s391, 8
      %s393 = scalar_lea.vmem %s11, %s392
      %s394 = smul.u32 20, %s22
      %p395 = scmp.lt.s32.totalorder %s394, 39
      %s396 = scalar_select %p395, %s394, 39
      %s397 = smul.addr %s396, 4
      %s398 = scalar_lea.vmem %s0, %s397
      %s399 = smul.u32 20, %s22
      %s400 = smul.u32 20, %s22
      %p401 = scmp.lt.s32.totalorder %s400, 39
      %s402 = scalar_select %p401, %s400, 39
      %s403 = smul.addr %s402, 8
      %s404 = scalar_lea.vmem %s1, %s403
      %s405 = smul.u32 20, %s22
      %s406 = smul.u32 20, %s22
      %p407 = scmp.lt.s32.totalorder %s406, 39
      %s408 = scalar_select %p407, %s406, 39
      %s409 = smul.addr %s408, 8
      %s410 = scalar_lea.vmem %s11, %s409
      %s411 = smul.u32 20, %s22
      %v412 = vld [vmem:[%s398] sm:$0xf]
      %v413 = vld [vmem:[%s398 + $0x4] sm:$0xf]
      %v414 = vld [vmem:[%s398 + $0x8] sm:$0xf]
      %v415 = vld [vmem:[%s398 + $0xc] sm:$0xf]
      %v416 = vld [vmem:[%s398 + $0x10] sm:$0xf]
      %v417 = vld [vmem:[%s398 + $0x14] sm:$0xf]
      %v418 = vld [vmem:[%s398 + $0x18] sm:$0xf]
      %v419 = vld [vmem:[%s398 + $0x1c] sm:$0xf]
      %v420 = vld [vmem:[%s398 + $0x20] sm:$0xf]
      %v421 = vld [vmem:[%s398 + $0x24] sm:$0xf]
      %v422 = vld [vmem:[%s398 + $0x28] sm:$0xf]
      %v423 = vld [vmem:[%s398 + $0x2c] sm:$0xf]
      %v424 = vld [vmem:[%s398 + $0x30] sm:$0xf]
      %v425 = vld [vmem:[%s398 + $0x34] sm:$0xf]
      %v426 = vld [vmem:[%s398 + $0x38] sm:$0xf]
      %v427 = vld [vmem:[%s398 + $0x3c] sm:$0xf]
      %v428 = vld [vmem:[%s398 + $0x40] sm:$0xf]
      %v429 = vld [vmem:[%s398 + $0x44] sm:$0xf]
      %v430 = vld [vmem:[%s398 + $0x48] sm:$0xf]
      %v431 = vld [vmem:[%s398 + $0x4c] sm:$0xf]
      %v432 = vld [vmem:[%s404] sm:$0xff]
      %v433 = vld [vmem:[%s404 + $0x8] sm:$0xff]
      %v434 = vld [vmem:[%s404 + $0x10] sm:$0xff]
      %v435 = vld [vmem:[%s404 + $0x18] sm:$0xff]
      %v436 = vld [vmem:[%s404 + $0x20] sm:$0xff]
      %v437 = vld [vmem:[%s404 + $0x28] sm:$0xff]
      %v438 = vld [vmem:[%s404 + $0x30] sm:$0xff]
      %v439 = vld [vmem:[%s404 + $0x38] sm:$0xff]
      %v440 = vld [vmem:[%s404 + $0x40] sm:$0xff]
      %v441 = vld [vmem:[%s404 + $0x48] sm:$0xff]
      %v442 = vld [vmem:[%s404 + $0x50] sm:$0xff]
      %v443 = vld [vmem:[%s404 + $0x58] sm:$0xff]
      %v444 = vld [vmem:[%s404 + $0x60] sm:$0xff]
      %v445 = vld [vmem:[%s404 + $0x68] sm:$0xff]
      %v446 = vld [vmem:[%s404 + $0x70] sm:$0xff]
      %v447 = vld [vmem:[%s404 + $0x78] sm:$0xff]
      %v448 = vld [vmem:[%s404 + $0x80] sm:$0xff]
      %v449 = vld [vmem:[%s404 + $0x88] sm:$0xff]
      %v450 = vld [vmem:[%s404 + $0x90] sm:$0xff]
      %v451 = vld [vmem:[%s404 + $0x98] sm:$0xff]
      %v452 = vld [vmem:[%s2] sm:$0xff]
      %v453 = vld [vmem:[%s2 + $0x8] sm:$0xff]
      %v454 = vld [vmem:[%s2 + $0x10] sm:$0xff]
      %v455 = vld [vmem:[%s2 + $0x18] sm:$0xff]
      %v456 = vld [vmem:[%s2 + $0x20] sm:$0xff]
      %v457 = vld [vmem:[%s2 + $0x28] sm:$0xff]
      %v458 = vld [vmem:[%s2 + $0x30] sm:$0xff]
      %v459 = vld [vmem:[%s2 + $0x38] sm:$0xff]
      %v460 = vld [vmem:[%s2 + $0x40] sm:$0xff]
      %v461 = vld [vmem:[%s2 + $0x48] sm:$0xff]
      %v462 = vld [vmem:[%s2 + $0x50] sm:$0xff]
      %v463 = vld [vmem:[%s2 + $0x58] sm:$0xff]
      %v464 = vld [vmem:[%s2 + $0x60] sm:$0xff]
      %v465 = vld [vmem:[%s2 + $0x68] sm:$0xff]
      %v466 = vld [vmem:[%s2 + $0x70] sm:$0xff]
      %v467 = vld [vmem:[%s2 + $0x78] sm:$0xff]
      %v468 = vld [vmem:[%s2 + $0x80] sm:$0xff]
      %v469 = vld [vmem:[%s2 + $0x88] sm:$0xff]
      %v470 = vld [vmem:[%s2 + $0x90] sm:$0xff]
      %v471 = vld [vmem:[%s2 + $0x98] sm:$0xff]
      %v472 = vld [vmem:[%s2 + $0xa0] sm:$0xff]
      %v473 = vld [vmem:[%s2 + $0xa8] sm:$0xff]
      %v474 = vld [vmem:[%s2 + $0xb0] sm:$0xff]
      %v475 = vld [vmem:[%s2 + $0xb8] sm:$0xff]
      %v476 = vld [vmem:[%s2 + $0xc0] sm:$0xff]
      %v477 = vld [vmem:[%s2 + $0xc8] sm:$0xff]
      %v478 = vld [vmem:[%s2 + $0xd0] sm:$0xff]
      %v479 = vld [vmem:[%s2 + $0xd8] sm:$0xff]
      %v480 = vld [vmem:[%s2 + $0xe0] sm:$0xff]
      %v481 = vld [vmem:[%s2 + $0xe8] sm:$0xff]
      %v482 = vld [vmem:[%s2 + $0xf0] sm:$0xff]
      %v483 = vld [vmem:[%s2 + $0xf8] sm:$0xff]
      %v484 = vld [vmem:[%s2 + $0x100] sm:$0xff]
      %v485 = vld [vmem:[%s2 + $0x108] sm:$0xff]
      %v486 = vld [vmem:[%s2 + $0x110] sm:$0xff]
      %v487 = vld [vmem:[%s2 + $0x118] sm:$0xff]
      %v488 = vld [vmem:[%s2 + $0x120] sm:$0xff]
      %v489 = vld [vmem:[%s2 + $0x128] sm:$0xff]
      %v490 = vld [vmem:[%s2 + $0x130] sm:$0xff]
      %v491 = vld [vmem:[%s2 + $0x138] sm:$0xff]
      %v492 = vld [vmem:[%s2 + $0x140] sm:$0xff]
      %v493 = vld [vmem:[%s2 + $0x148] sm:$0xff]
      %v494 = vld [vmem:[%s2 + $0x150] sm:$0xff]
      %v495 = vld [vmem:[%s2 + $0x158] sm:$0xff]
      %v496 = vld [vmem:[%s2 + $0x160] sm:$0xff]
      %v497 = vld [vmem:[%s2 + $0x168] sm:$0xff]
      %v498 = vld [vmem:[%s2 + $0x170] sm:$0xff]
      %v499 = vld [vmem:[%s2 + $0x178] sm:$0xff]
      %v500 = vld [vmem:[%s2 + $0x180] sm:$0xff]
      %v501 = vld [vmem:[%s2 + $0x188] sm:$0xff]
      %v502 = vld [vmem:[%s2 + $0x190] sm:$0xff]
      %v503 = vld [vmem:[%s2 + $0x198] sm:$0xff]
      %v504 = vld [vmem:[%s2 + $0x1a0] sm:$0xff]
      %v505 = vld [vmem:[%s2 + $0x1a8] sm:$0xff]
      %v506 = vld [vmem:[%s2 + $0x1b0] sm:$0xff]
      %v507 = vld [vmem:[%s2 + $0x1b8] sm:$0xff]
      %v508 = vld [vmem:[%s2 + $0x1c0] sm:$0xff]
      %v509 = vld [vmem:[%s2 + $0x1c8] sm:$0xff]
      %v510 = vld [vmem:[%s2 + $0x1d0] sm:$0xff]
      %v511 = vld [vmem:[%s2 + $0x1d8] sm:$0xff]
      %v512 = vld [vmem:[%s2 + $0x1e0] sm:$0xff]
      %v513 = vld [vmem:[%s2 + $0x1e8] sm:$0xff]
      %v514 = vld [vmem:[%s2 + $0x1f0] sm:$0xff]
      %v515 = vld [vmem:[%s2 + $0x1f8] sm:$0xff]
      %v516 = vld [vmem:[%s2 + $0x200] sm:$0xff]
      %v517 = vld [vmem:[%s2 + $0x208] sm:$0xff]
      %v518 = vld [vmem:[%s2 + $0x210] sm:$0xff]
      %v519 = vld [vmem:[%s2 + $0x218] sm:$0xff]
      %v520 = vld [vmem:[%s2 + $0x220] sm:$0xff]
      %v521 = vld [vmem:[%s2 + $0x228] sm:$0xff]
      %v522 = vld [vmem:[%s2 + $0x230] sm:$0xff]
      %v523 = vld [vmem:[%s2 + $0x238] sm:$0xff]
      %v524 = vld [vmem:[%s2 + $0x240] sm:$0xff]
      %v525 = vld [vmem:[%s2 + $0x248] sm:$0xff]
      %v526 = vld [vmem:[%s2 + $0x250] sm:$0xff]
      %v527 = vld [vmem:[%s2 + $0x258] sm:$0xff]
      %v528 = vld [vmem:[%s2 + $0x260] sm:$0xff]
      %v529 = vld [vmem:[%s2 + $0x268] sm:$0xff]
      %v530 = vld [vmem:[%s2 + $0x270] sm:$0xff]
      %v531 = vld [vmem:[%s2 + $0x278] sm:$0xff]
      %v532 = vld [vmem:[%s2 + $0x280] sm:$0xff]
      %v533 = vld [vmem:[%s2 + $0x288] sm:$0xff]
      %v534 = vld [vmem:[%s2 + $0x290] sm:$0xff]
      %v535 = vld [vmem:[%s2 + $0x298] sm:$0xff]
      %v536 = vld [vmem:[%s2 + $0x2a0] sm:$0xff]
      %v537 = vld [vmem:[%s2 + $0x2a8] sm:$0xff]
      %v538 = vld [vmem:[%s2 + $0x2b0] sm:$0xff]
      %v539 = vld [vmem:[%s2 + $0x2b8] sm:$0xff]
      %v540 = vld [vmem:[%s2 + $0x2c0] sm:$0xff]
      %v541 = vld [vmem:[%s2 + $0x2c8] sm:$0xff]
      %v542 = vld [vmem:[%s2 + $0x2d0] sm:$0xff]
      %v543 = vld [vmem:[%s2 + $0x2d8] sm:$0xff]
      %v544 = vld [vmem:[%s2 + $0x2e0] sm:$0xff]
      %v545 = vld [vmem:[%s2 + $0x2e8] sm:$0xff]
      %v546 = vld [vmem:[%s2 + $0x2f0] sm:$0xff]
      %v547 = vld [vmem:[%s2 + $0x2f8] sm:$0xff]
      %v548 = vld [vmem:[%s2 + $0x300] sm:$0xff]
      %v549 = vld [vmem:[%s2 + $0x308] sm:$0xff]
      %v550 = vld [vmem:[%s2 + $0x310] sm:$0xff]
      %v551 = vld [vmem:[%s2 + $0x318] sm:$0xff]
      %v552 = vld [vmem:[%s2 + $0x320] sm:$0xff]
      %v553 = vld [vmem:[%s2 + $0x328] sm:$0xff]
      %v554 = vld [vmem:[%s2 + $0x330] sm:$0xff]
      %v555 = vld [vmem:[%s2 + $0x338] sm:$0xff]
      %v556 = vld [vmem:[%s2 + $0x340] sm:$0xff]
      %v557 = vld [vmem:[%s2 + $0x348] sm:$0xff]
      %v558 = vld [vmem:[%s2 + $0x350] sm:$0xff]
      %v559 = vld [vmem:[%s2 + $0x358] sm:$0xff]
      %v560 = vld [vmem:[%s2 + $0x360] sm:$0xff]
      %v561 = vld [vmem:[%s2 + $0x368] sm:$0xff]
      %v562 = vld [vmem:[%s2 + $0x370] sm:$0xff]
      %v563 = vld [vmem:[%s2 + $0x378] sm:$0xff]
      %v564 = vld [vmem:[%s2 + $0x380] sm:$0xff]
      %v565 = vld [vmem:[%s2 + $0x388] sm:$0xff]
      %v566 = vld [vmem:[%s2 + $0x390] sm:$0xff]
      %v567 = vld [vmem:[%s2 + $0x398] sm:$0xff]
      %v568 = vld [vmem:[%s2 + $0x3a0] sm:$0xff]
      %v569 = vld [vmem:[%s2 + $0x3a8] sm:$0xff]
      %v570 = vld [vmem:[%s2 + $0x3b0] sm:$0xff]
      %v571 = vld [vmem:[%s2 + $0x3b8] sm:$0xff]
      %v572 = vld [vmem:[%s2 + $0x3c0] sm:$0xff]
      %v573 = vld [vmem:[%s2 + $0x3c8] sm:$0xff]
      %v574 = vld [vmem:[%s2 + $0x3d0] sm:$0xff]
      %v575 = vld [vmem:[%s2 + $0x3d8] sm:$0xff]
      %v576 = vld [vmem:[%s2 + $0x3e0] sm:$0xff]
      %v577 = vld [vmem:[%s2 + $0x3e8] sm:$0xff]
      %v578 = vld [vmem:[%s2 + $0x3f0] sm:$0xff]
      %v579 = vld [vmem:[%s2 + $0x3f8] sm:$0xff]
      %v580 = vld [vmem:[%s2 + $0x400] sm:$0xff]
      %v581 = vld [vmem:[%s2 + $0x408] sm:$0xff]
      %v582 = vld [vmem:[%s2 + $0x410] sm:$0xff]
      %v583 = vld [vmem:[%s2 + $0x418] sm:$0xff]
      %v584 = vld [vmem:[%s2 + $0x420] sm:$0xff]
      %v585 = vld [vmem:[%s2 + $0x428] sm:$0xff]
      %v586 = vld [vmem:[%s2 + $0x430] sm:$0xff]
      %v587 = vld [vmem:[%s2 + $0x438] sm:$0xff]
      %v588 = vld [vmem:[%s2 + $0x440] sm:$0xff]
      %v589 = vld [vmem:[%s2 + $0x448] sm:$0xff]
      %v590 = vld [vmem:[%s2 + $0x450] sm:$0xff]
      %v591 = vld [vmem:[%s2 + $0x458] sm:$0xff]
      %v592 = vld [vmem:[%s2 + $0x460] sm:$0xff]
      %v593 = vld [vmem:[%s2 + $0x468] sm:$0xff]
      %v594 = vld [vmem:[%s2 + $0x470] sm:$0xff]
      %v595 = vld [vmem:[%s2 + $0x478] sm:$0xff]
      %v616 = vunpack.c.l.b16 %v412
      %v617 = vunpack.c.l.b16 %v413
      %v618 = vunpack.c.l.b16 %v414
      %v619 = vunpack.c.l.b16 %v415
      %v620 = vunpack.c.l.b16 %v416
      %v621 = vunpack.c.l.b16 %v417
      %v622 = vunpack.c.l.b16 %v418
      %v623 = vunpack.c.l.b16 %v419
      %v624 = vunpack.c.l.b16 %v420
      %v625 = vunpack.c.l.b16 %v421
      %v626 = vunpack.c.l.b16 %v422
      %v627 = vunpack.c.l.b16 %v423
      %v628 = vunpack.c.l.b16 %v424
      %v629 = vunpack.c.l.b16 %v425
      %v630 = vunpack.c.l.b16 %v426
      %v631 = vunpack.c.l.b16 %v427
      %v632 = vunpack.c.l.b16 %v428
      %v633 = vunpack.c.l.b16 %v429
      %v634 = vunpack.c.l.b16 %v430
      %v635 = vunpack.c.l.b16 %v431
      %v636 = vpack.c.b16 %v617, %v616
      %v637 = vpack.c.b16 %v619, %v618
      %v638 = vpack.c.b16 %v621, %v620
      %v639 = vpack.c.b16 %v623, %v622
      %v640 = vpack.c.b16 %v625, %v624
      %v641 = vpack.c.b16 %v627, %v626
      %v642 = vpack.c.b16 %v629, %v628
      %v643 = vpack.c.b16 %v631, %v630
      %v644 = vpack.c.b16 %v633, %v632
      %v645 = vpack.c.b16 %v635, %v634
      %v800 = vunpack.c.l.b16 %v452
      %v801 = vunpack.c.h.b16 %v452
      %v802 = vunpack.c.l.b16 %v453
      %v803 = vunpack.c.h.b16 %v453
      %v804 = vunpack.c.l.b16 %v454
      %v805 = vunpack.c.h.b16 %v454
      %v806 = vunpack.c.l.b16 %v455
      %v807 = vunpack.c.h.b16 %v455
      %v808 = vunpack.c.l.b16 %v456
      %v809 = vunpack.c.h.b16 %v456
      %v810 = vunpack.c.l.b16 %v457
      %v811 = vunpack.c.h.b16 %v457
      %v812 = vunpack.c.l.b16 %v458
      %v813 = vunpack.c.h.b16 %v458
      %v814 = vunpack.c.l.b16 %v459
      %v815 = vunpack.c.h.b16 %v459
      %v816 = vunpack.c.l.b16 %v460
      %v817 = vunpack.c.h.b16 %v460
      %v818 = vunpack.c.l.b16 %v461
      %v819 = vunpack.c.h.b16 %v461
      %v820 = vunpack.c.l.b16 %v462
      %v821 = vunpack.c.h.b16 %v462
      %v822 = vunpack.c.l.b16 %v463
      %v823 = vunpack.c.h.b16 %v463
      %v824 = vunpack.c.l.b16 %v464
      %v825 = vunpack.c.h.b16 %v464
      %v826 = vunpack.c.l.b16 %v465
      %v827 = vunpack.c.h.b16 %v465
      %v828 = vunpack.c.l.b16 %v466
      %v829 = vunpack.c.h.b16 %v466
      %v830 = vunpack.c.l.b16 %v467
      %v831 = vunpack.c.h.b16 %v467
      %v832 = vunpack.c.l.b16 %v468
      %v833 = vunpack.c.h.b16 %v468
      %v834 = vunpack.c.l.b16 %v469
      %v835 = vunpack.c.h.b16 %v469
      %v836 = vunpack.c.l.b16 %v470
      %v837 = vunpack.c.h.b16 %v470
      %v838 = vunpack.c.l.b16 %v471
      %v839 = vunpack.c.h.b16 %v471
      %v840 = vunpack.c.l.b16 %v472
      %v841 = vunpack.c.h.b16 %v472
      %v842 = vunpack.c.l.b16 %v473
      %v843 = vunpack.c.h.b16 %v473
      %v844 = vunpack.c.l.b16 %v474
      %v845 = vunpack.c.h.b16 %v474
      %v846 = vunpack.c.l.b16 %v475
      %v847 = vunpack.c.h.b16 %v475
      %v848 = vunpack.c.l.b16 %v476
      %v849 = vunpack.c.h.b16 %v476
      %v850 = vunpack.c.l.b16 %v477
      %v851 = vunpack.c.h.b16 %v477
      %v852 = vunpack.c.l.b16 %v478
      %v853 = vunpack.c.h.b16 %v478
      %v854 = vunpack.c.l.b16 %v479
      %v855 = vunpack.c.h.b16 %v479
      %v856 = vunpack.c.l.b16 %v480
      %v857 = vunpack.c.h.b16 %v480
      %v858 = vunpack.c.l.b16 %v481
      %v859 = vunpack.c.h.b16 %v481
      %v860 = vunpack.c.l.b16 %v482
      %v861 = vunpack.c.h.b16 %v482
      %v862 = vunpack.c.l.b16 %v483
      %v863 = vunpack.c.h.b16 %v483
      %v864 = vunpack.c.l.b16 %v484
      %v865 = vunpack.c.h.b16 %v484
      %v866 = vunpack.c.l.b16 %v485
      %v867 = vunpack.c.h.b16 %v485
      %v868 = vunpack.c.l.b16 %v486
      %v869 = vunpack.c.h.b16 %v486
      %v870 = vunpack.c.l.b16 %v487
      %v871 = vunpack.c.h.b16 %v487
      %v872 = vunpack.c.l.b16 %v488
      %v873 = vunpack.c.h.b16 %v488
      %v874 = vunpack.c.l.b16 %v489
      %v875 = vunpack.c.h.b16 %v489
      %v876 = vunpack.c.l.b16 %v490
      %v877 = vunpack.c.h.b16 %v490
      %v878 = vunpack.c.l.b16 %v491
      %v879 = vunpack.c.h.b16 %v491
      %v880 = vunpack.c.l.b16 %v492
      %v881 = vunpack.c.h.b16 %v492
      %v882 = vunpack.c.l.b16 %v493
      %v883 = vunpack.c.h.b16 %v493
      %v884 = vunpack.c.l.b16 %v494
      %v885 = vunpack.c.h.b16 %v494
      %v886 = vunpack.c.l.b16 %v495
      %v887 = vunpack.c.h.b16 %v495
      %v888 = vunpack.c.l.b16 %v496
      %v889 = vunpack.c.h.b16 %v496
      %v890 = vunpack.c.l.b16 %v497
      %v891 = vunpack.c.h.b16 %v497
      %v892 = vunpack.c.l.b16 %v498
      %v893 = vunpack.c.h.b16 %v498
      %v894 = vunpack.c.l.b16 %v499
      %v895 = vunpack.c.h.b16 %v499
      %v896 = vunpack.c.l.b16 %v500
      %v897 = vunpack.c.h.b16 %v500
      %v898 = vunpack.c.l.b16 %v501
      %v899 = vunpack.c.h.b16 %v501
      %v900 = vunpack.c.l.b16 %v502
      %v901 = vunpack.c.h.b16 %v502
      %v902 = vunpack.c.l.b16 %v503
      %v903 = vunpack.c.h.b16 %v503
      %v904 = vunpack.c.l.b16 %v504
      %v905 = vunpack.c.h.b16 %v504
      %v906 = vunpack.c.l.b16 %v505
      %v907 = vunpack.c.h.b16 %v505
      %v908 = vunpack.c.l.b16 %v506
      %v909 = vunpack.c.h.b16 %v506
      %v910 = vunpack.c.l.b16 %v507
      %v911 = vunpack.c.h.b16 %v507
      %v912 = vunpack.c.l.b16 %v508
      %v913 = vunpack.c.h.b16 %v508
      %v914 = vunpack.c.l.b16 %v509
      %v915 = vunpack.c.h.b16 %v509
      %v916 = vunpack.c.l.b16 %v510
      %v917 = vunpack.c.h.b16 %v510
      %v918 = vunpack.c.l.b16 %v511
      %v919 = vunpack.c.h.b16 %v511
      %v920 = vunpack.c.l.b16 %v512
      %v921 = vunpack.c.h.b16 %v512
      %v922 = vunpack.c.l.b16 %v513
      %v923 = vunpack.c.h.b16 %v513
      %v924 = vunpack.c.l.b16 %v514
      %v925 = vunpack.c.h.b16 %v514
      %v926 = vunpack.c.l.b16 %v515
      %v927 = vunpack.c.h.b16 %v515
      %v928 = vunpack.c.l.b16 %v516
      %v929 = vunpack.c.h.b16 %v516
      %v930 = vunpack.c.l.b16 %v517
      %v931 = vunpack.c.h.b16 %v517
      %v932 = vunpack.c.l.b16 %v518
      %v933 = vunpack.c.h.b16 %v518
      %v934 = vunpack.c.l.b16 %v519
      %v935 = vunpack.c.h.b16 %v519
      %v936 = vunpack.c.l.b16 %v520
      %v937 = vunpack.c.h.b16 %v520
      %v938 = vunpack.c.l.b16 %v521
      %v939 = vunpack.c.h.b16 %v521
      %v940 = vunpack.c.l.b16 %v522
      %v941 = vunpack.c.h.b16 %v522
      %v942 = vunpack.c.l.b16 %v523
      %v943 = vunpack.c.h.b16 %v523
      %v944 = vunpack.c.l.b16 %v524
      %v945 = vunpack.c.h.b16 %v524
      %v946 = vunpack.c.l.b16 %v525
      %v947 = vunpack.c.h.b16 %v525
      %v948 = vunpack.c.l.b16 %v526
      %v949 = vunpack.c.h.b16 %v526
      %v950 = vunpack.c.l.b16 %v527
      %v951 = vunpack.c.h.b16 %v527
      %v952 = vunpack.c.l.b16 %v528
      %v953 = vunpack.c.h.b16 %v528
      %v954 = vunpack.c.l.b16 %v529
      %v955 = vunpack.c.h.b16 %v529
      %v956 = vunpack.c.l.b16 %v530
      %v957 = vunpack.c.h.b16 %v530
      %v958 = vunpack.c.l.b16 %v531
      %v959 = vunpack.c.h.b16 %v531
      %v960 = vunpack.c.l.b16 %v532
      %v961 = vunpack.c.h.b16 %v532
      %v962 = vunpack.c.l.b16 %v533
      %v963 = vunpack.c.h.b16 %v533
      %v964 = vunpack.c.l.b16 %v534
      %v965 = vunpack.c.h.b16 %v534
      %v966 = vunpack.c.l.b16 %v535
      %v967 = vunpack.c.h.b16 %v535
      %v968 = vunpack.c.l.b16 %v536
      %v969 = vunpack.c.h.b16 %v536
      %v970 = vunpack.c.l.b16 %v537
      %v971 = vunpack.c.h.b16 %v537
      %v972 = vunpack.c.l.b16 %v538
      %v973 = vunpack.c.h.b16 %v538
      %v974 = vunpack.c.l.b16 %v539
      %v975 = vunpack.c.h.b16 %v539
      %v976 = vunpack.c.l.b16 %v540
      %v977 = vunpack.c.h.b16 %v540
      %v978 = vunpack.c.l.b16 %v541
      %v979 = vunpack.c.h.b16 %v541
      %v980 = vunpack.c.l.b16 %v542
      %v981 = vunpack.c.h.b16 %v542
      %v982 = vunpack.c.l.b16 %v543
      %v983 = vunpack.c.h.b16 %v543
      %v984 = vunpack.c.l.b16 %v544
      %v985 = vunpack.c.h.b16 %v544
      %v986 = vunpack.c.l.b16 %v545
      %v987 = vunpack.c.h.b16 %v545
      %v988 = vunpack.c.l.b16 %v546
      %v989 = vunpack.c.h.b16 %v546
      %v990 = vunpack.c.l.b16 %v547
      %v991 = vunpack.c.h.b16 %v547
      %v992 = vunpack.c.l.b16 %v548
      %v993 = vunpack.c.h.b16 %v548
      %v994 = vunpack.c.l.b16 %v549
      %v995 = vunpack.c.h.b16 %v549
      %v996 = vunpack.c.l.b16 %v550
      %v997 = vunpack.c.h.b16 %v550
      %v998 = vunpack.c.l.b16 %v551
      %v999 = vunpack.c.h.b16 %v551
      %v1000 = vunpack.c.l.b16 %v552
      %v1001 = vunpack.c.h.b16 %v552
      %v1002 = vunpack.c.l.b16 %v553
      %v1003 = vunpack.c.h.b16 %v553
      %v1004 = vunpack.c.l.b16 %v554
      %v1005 = vunpack.c.h.b16 %v554
      %v1006 = vunpack.c.l.b16 %v555
      %v1007 = vunpack.c.h.b16 %v555
      %v1008 = vunpack.c.l.b16 %v556
      %v1009 = vunpack.c.h.b16 %v556
      %v1010 = vunpack.c.l.b16 %v557
      %v1011 = vunpack.c.h.b16 %v557
      %v1012 = vunpack.c.l.b16 %v558
      %v1013 = vunpack.c.h.b16 %v558
      %v1014 = vunpack.c.l.b16 %v559
      %v1015 = vunpack.c.h.b16 %v559
      %v1016 = vunpack.c.l.b16 %v560
      %v1017 = vunpack.c.h.b16 %v560
      %v1018 = vunpack.c.l.b16 %v561
      %v1019 = vunpack.c.h.b16 %v561
      %v1020 = vunpack.c.l.b16 %v562
      %v1021 = vunpack.c.h.b16 %v562
      %v1022 = vunpack.c.l.b16 %v563
      %v1023 = vunpack.c.h.b16 %v563
      %v1024 = vunpack.c.l.b16 %v564
      %v1025 = vunpack.c.h.b16 %v564
      %v1026 = vunpack.c.l.b16 %v565
      %v1027 = vunpack.c.h.b16 %v565
      %v1028 = vunpack.c.l.b16 %v566
      %v1029 = vunpack.c.h.b16 %v566
      %v1030 = vunpack.c.l.b16 %v567
      %v1031 = vunpack.c.h.b16 %v567
      %v1032 = vunpack.c.l.b16 %v568
      %v1033 = vunpack.c.h.b16 %v568
      %v1034 = vunpack.c.l.b16 %v569
      %v1035 = vunpack.c.h.b16 %v569
      %v1036 = vunpack.c.l.b16 %v570
      %v1037 = vunpack.c.h.b16 %v570
      %v1038 = vunpack.c.l.b16 %v571
      %v1039 = vunpack.c.h.b16 %v571
      %v1040 = vunpack.c.l.b16 %v572
      %v1041 = vunpack.c.h.b16 %v572
      %v1042 = vunpack.c.l.b16 %v573
      %v1043 = vunpack.c.h.b16 %v573
      %v1044 = vunpack.c.l.b16 %v574
      %v1045 = vunpack.c.h.b16 %v574
      %v1046 = vunpack.c.l.b16 %v575
      %v1047 = vunpack.c.h.b16 %v575
      %v1048 = vunpack.c.l.b16 %v576
      %v1049 = vunpack.c.h.b16 %v576
      %v1050 = vunpack.c.l.b16 %v577
      %v1051 = vunpack.c.h.b16 %v577
      %v1052 = vunpack.c.l.b16 %v578
      %v1053 = vunpack.c.h.b16 %v578
      %v1054 = vunpack.c.l.b16 %v579
      %v1055 = vunpack.c.h.b16 %v579
      %v1056 = vunpack.c.l.b16 %v580
      %v1057 = vunpack.c.h.b16 %v580
      %v1058 = vunpack.c.l.b16 %v581
      %v1059 = vunpack.c.h.b16 %v581
      %v1060 = vunpack.c.l.b16 %v582
      %v1061 = vunpack.c.h.b16 %v582
      %v1062 = vunpack.c.l.b16 %v583
      %v1063 = vunpack.c.h.b16 %v583
      %v1064 = vunpack.c.l.b16 %v584
      %v1065 = vunpack.c.h.b16 %v584
      %v1066 = vunpack.c.l.b16 %v585
      %v1067 = vunpack.c.h.b16 %v585
      %v1068 = vunpack.c.l.b16 %v586
      %v1069 = vunpack.c.h.b16 %v586
      %v1070 = vunpack.c.l.b16 %v587
      %v1071 = vunpack.c.h.b16 %v587
      %v1072 = vunpack.c.l.b16 %v588
      %v1073 = vunpack.c.h.b16 %v588
      %v1074 = vunpack.c.l.b16 %v589
      %v1075 = vunpack.c.h.b16 %v589
      %v1076 = vunpack.c.l.b16 %v590
      %v1077 = vunpack.c.h.b16 %v590
      %v1078 = vunpack.c.l.b16 %v591
      %v1079 = vunpack.c.h.b16 %v591
      %v1080 = vunpack.c.l.b16 %v592
      %v1081 = vunpack.c.h.b16 %v592
      %v1082 = vunpack.c.l.b16 %v593
      %v1083 = vunpack.c.h.b16 %v593
      %v1084 = vunpack.c.l.b16 %v594
      %v1085 = vunpack.c.h.b16 %v594
      %v1086 = vunpack.c.l.b16 %v595
      %v1087 = vunpack.c.h.b16 %v595
      %v1088 = vpack.c.b16 %v818, %v800
      %v1089 = vpack.c.b16 %v819, %v801
      %v1090 = vpack.c.b16 %v820, %v802
      %v1091 = vpack.c.b16 %v821, %v803
      %v1092 = vpack.c.b16 %v822, %v804
      %v1093 = vpack.c.b16 %v823, %v805
      %v1094 = vpack.c.b16 %v824, %v806
      %v1095 = vpack.c.b16 %v825, %v807
      %v1096 = vpack.c.b16 %v826, %v808
      %v1097 = vpack.c.b16 %v827, %v809
      %v1098 = vpack.c.b16 %v828, %v810
      %v1099 = vpack.c.b16 %v829, %v811
      %v1100 = vpack.c.b16 %v830, %v812
      %v1101 = vpack.c.b16 %v831, %v813
      %v1102 = vpack.c.b16 %v832, %v814
      %v1103 = vpack.c.b16 %v833, %v815
      %v1104 = vpack.c.b16 %v834, %v816
      %v1105 = vpack.c.b16 %v835, %v817
      %v1106 = vpack.c.b16 %v854, %v836
      %v1107 = vpack.c.b16 %v855, %v837
      %v1108 = vpack.c.b16 %v856, %v838
      %v1109 = vpack.c.b16 %v857, %v839
      %v1110 = vpack.c.b16 %v858, %v840
      %v1111 = vpack.c.b16 %v859, %v841
      %v1112 = vpack.c.b16 %v860, %v842
      %v1113 = vpack.c.b16 %v861, %v843
      %v1114 = vpack.c.b16 %v862, %v844
      %v1115 = vpack.c.b16 %v863, %v845
      %v1116 = vpack.c.b16 %v864, %v846
      %v1117 = vpack.c.b16 %v865, %v847
      %v1118 = vpack.c.b16 %v866, %v848
      %v1119 = vpack.c.b16 %v867, %v849
      %v1120 = vpack.c.b16 %v868, %v850
      %v1121 = vpack.c.b16 %v869, %v851
      %v1122 = vpack.c.b16 %v870, %v852
      %v1123 = vpack.c.b16 %v871, %v853
      %v1124 = vpack.c.b16 %v890, %v872
      %v1125 = vpack.c.b16 %v891, %v873
      %v1126 = vpack.c.b16 %v892, %v874
      %v1127 = vpack.c.b16 %v893, %v875
      %v1128 = vpack.c.b16 %v894, %v876
      %v1129 = vpack.c.b16 %v895, %v877
      %v1130 = vpack.c.b16 %v896, %v878
      %v1131 = vpack.c.b16 %v897, %v879
      %v1132 = vpack.c.b16 %v898, %v880
      %v1133 = vpack.c.b16 %v899, %v881
      %v1134 = vpack.c.b16 %v900, %v882
      %v1135 = vpack.c.b16 %v901, %v883
      %v1136 = vpack.c.b16 %v902, %v884
      %v1137 = vpack.c.b16 %v903, %v885
      %v1138 = vpack.c.b16 %v904, %v886
      %v1139 = vpack.c.b16 %v905, %v887
      %v1140 = vpack.c.b16 %v906, %v888
      %v1141 = vpack.c.b16 %v907, %v889
      %v1142 = vpack.c.b16 %v926, %v908
      %v1143 = vpack.c.b16 %v927, %v909
      %v1144 = vpack.c.b16 %v928, %v910
      %v1145 = vpack.c.b16 %v929, %v911
      %v1146 = vpack.c.b16 %v930, %v912
      %v1147 = vpack.c.b16 %v931, %v913
      %v1148 = vpack.c.b16 %v932, %v914
      %v1149 = vpack.c.b16 %v933, %v915
      %v1150 = vpack.c.b16 %v934, %v916
      %v1151 = vpack.c.b16 %v935, %v917
      %v1152 = vpack.c.b16 %v936, %v918
      %v1153 = vpack.c.b16 %v937, %v919
      %v1154 = vpack.c.b16 %v938, %v920
      %v1155 = vpack.c.b16 %v939, %v921
      %v1156 = vpack.c.b16 %v940, %v922
      %v1157 = vpack.c.b16 %v941, %v923
      %v1158 = vpack.c.b16 %v942, %v924
      %v1159 = vpack.c.b16 %v943, %v925
      %v1160 = vpack.c.b16 %v962, %v944
      %v1161 = vpack.c.b16 %v963, %v945
      %v1162 = vpack.c.b16 %v964, %v946
      %v1163 = vpack.c.b16 %v965, %v947
      %v1164 = vpack.c.b16 %v966, %v948
      %v1165 = vpack.c.b16 %v967, %v949
      %v1166 = vpack.c.b16 %v968, %v950
      %v1167 = vpack.c.b16 %v969, %v951
      %v1168 = vpack.c.b16 %v970, %v952
      %v1169 = vpack.c.b16 %v971, %v953
      %v1170 = vpack.c.b16 %v972, %v954
      %v1171 = vpack.c.b16 %v973, %v955
      %v1172 = vpack.c.b16 %v974, %v956
      %v1173 = vpack.c.b16 %v975, %v957
      %v1174 = vpack.c.b16 %v976, %v958
      %v1175 = vpack.c.b16 %v977, %v959
      %v1176 = vpack.c.b16 %v978, %v960
      %v1177 = vpack.c.b16 %v979, %v961
      %v1178 = vpack.c.b16 %v998, %v980
      %v1179 = vpack.c.b16 %v999, %v981
      %v1180 = vpack.c.b16 %v1000, %v982
      %v1181 = vpack.c.b16 %v1001, %v983
      %v1182 = vpack.c.b16 %v1002, %v984
      %v1183 = vpack.c.b16 %v1003, %v985
      %v1184 = vpack.c.b16 %v1004, %v986
      %v1185 = vpack.c.b16 %v1005, %v987
      %v1186 = vpack.c.b16 %v1006, %v988
      %v1187 = vpack.c.b16 %v1007, %v989
      %v1188 = vpack.c.b16 %v1008, %v990
      %v1189 = vpack.c.b16 %v1009, %v991
      %v1190 = vpack.c.b16 %v1010, %v992
      %v1191 = vpack.c.b16 %v1011, %v993
      %v1192 = vpack.c.b16 %v1012, %v994
      %v1193 = vpack.c.b16 %v1013, %v995
      %v1194 = vpack.c.b16 %v1014, %v996
      %v1195 = vpack.c.b16 %v1015, %v997
      %v1196 = vpack.c.b16 %v1034, %v1016
      %v1197 = vpack.c.b16 %v1035, %v1017
      %v1198 = vpack.c.b16 %v1036, %v1018
      %v1199 = vpack.c.b16 %v1037, %v1019
      %v1200 = vpack.c.b16 %v1038, %v1020
      %v1201 = vpack.c.b16 %v1039, %v1021
      %v1202 = vpack.c.b16 %v1040, %v1022
      %v1203 = vpack.c.b16 %v1041, %v1023
      %v1204 = vpack.c.b16 %v1042, %v1024
      %v1205 = vpack.c.b16 %v1043, %v1025
      %v1206 = vpack.c.b16 %v1044, %v1026
      %v1207 = vpack.c.b16 %v1045, %v1027
      %v1208 = vpack.c.b16 %v1046, %v1028
      %v1209 = vpack.c.b16 %v1047, %v1029
      %v1210 = vpack.c.b16 %v1048, %v1030
      %v1211 = vpack.c.b16 %v1049, %v1031
      %v1212 = vpack.c.b16 %v1050, %v1032
      %v1213 = vpack.c.b16 %v1051, %v1033
      %v1214 = vpack.c.b16 %v1070, %v1052
      %v1215 = vpack.c.b16 %v1071, %v1053
      %v1216 = vpack.c.b16 %v1072, %v1054
      %v1217 = vpack.c.b16 %v1073, %v1055
      %v1218 = vpack.c.b16 %v1074, %v1056
      %v1219 = vpack.c.b16 %v1075, %v1057
      %v1220 = vpack.c.b16 %v1076, %v1058
      %v1221 = vpack.c.b16 %v1077, %v1059
      %v1222 = vpack.c.b16 %v1078, %v1060
      %v1223 = vpack.c.b16 %v1079, %v1061
      %v1224 = vpack.c.b16 %v1080, %v1062
      %v1225 = vpack.c.b16 %v1081, %v1063
      %v1226 = vpack.c.b16 %v1082, %v1064
      %v1227 = vpack.c.b16 %v1083, %v1065
      %v1228 = vpack.c.b16 %v1084, %v1066
      %v1229 = vpack.c.b16 %v1085, %v1067
      %v1230 = vpack.c.b16 %v1086, %v1068
      %v1231 = vpack.c.b16 %v1087, %v1069
      %1376 = vmatpush.bf16.msra.mxu0 %v1214
      %1377 = vmatpush.bf16.msra.mxu0 %v1196
      %1378 = vmatpush.bf16.msra.mxu0 %v1178
      %1379 = vmatpush.bf16.msra.mxu0 %v1160
      %1380 = vmatpush.bf16.msra.mxu0 %v1142
      %1381 = vmatpush.bf16.msra.mxu0 %v1124
      %1382 = vmatpush.bf16.msra.mxu0 %v1106
      %1383 = vmatpush.bf16.msra.mxu0 %v1088
      %1384 = vmatmul.bf16.gmra.mxu0 %v636
      %v1385 = vpop.f32.mrf.mxu0
      %v1386 = vadd.f32 0.0, %v1385
      %v1387 = vpop.f32.mrf.mxu0
      %v1388 = vadd.f32 0.0, %v1387
      %1389 = vmatmul.bf16.gmra.mxu0 %v637
      %v1390 = vpop.f32.mrf.mxu0
      %v1391 = vadd.f32 0.0, %v1390
      %v1392 = vpop.f32.mrf.mxu0
      %v1393 = vadd.f32 0.0, %v1392
      %1394 = vmatmul.bf16.gmra.mxu0 %v638
      %v1395 = vpop.f32.mrf.mxu0
      %v1396 = vadd.f32 0.0, %v1395
      %v1397 = vpop.f32.mrf.mxu0
      %v1398 = vadd.f32 0.0, %v1397
      %1399 = vmatmul.bf16.gmra.mxu0 %v639
      %v1400 = vpop.f32.mrf.mxu0
      %v1401 = vadd.f32 0.0, %v1400
      %v1402 = vpop.f32.mrf.mxu0
      %v1403 = vadd.f32 0.0, %v1402
      %1404 = vmatmul.bf16.gmra.mxu0 %v640
      %v1405 = vpop.f32.mrf.mxu0
      %v1406 = vadd.f32 0.0, %v1405
      %v1407 = vpop.f32.mrf.mxu0
      %v1408 = vadd.f32 0.0, %v1407
      %1409 = vmatmul.bf16.gmra.mxu0 %v641
      %v1410 = vpop.f32.mrf.mxu0
      %v1411 = vadd.f32 0.0, %v1410
      %v1412 = vpop.f32.mrf.mxu0
      %v1413 = vadd.f32 0.0, %v1412
      %1414 = vmatmul.bf16.gmra.mxu0 %v642
      %v1415 = vpop.f32.mrf.mxu0
      %v1416 = vadd.f32 0.0, %v1415
      %v1417 = vpop.f32.mrf.mxu0
      %v1418 = vadd.f32 0.0, %v1417
      %1419 = vmatmul.bf16.gmra.mxu0 %v643
      %v1420 = vpop.f32.mrf.mxu0
      %v1421 = vadd.f32 0.0, %v1420
      %v1422 = vpop.f32.mrf.mxu0
      %v1423 = vadd.f32 0.0, %v1422
      %1424 = vmatmul.bf16.gmra.mxu0 %v644
      %v1425 = vpop.f32.mrf.mxu0
      %v1426 = vadd.f32 0.0, %v1425
      %v1427 = vpop.f32.mrf.mxu0
      %v1428 = vadd.f32 0.0, %v1427
      %1429 = vmatmul.bf16.gmra.mxu0 %v645
      %v1430 = vpop.f32.mrf.mxu0
      %v1431 = vadd.f32 0.0, %v1430
      %v1432 = vpop.f32.mrf.mxu0
      %v1433 = vadd.f32 0.0, %v1432
      %1434 = vdwg.mxu0
      %1435 = vmatpush.bf16.msra.mxu0 %v1215
      %1436 = vmatpush.bf16.msra.mxu0 %v1197
      %1437 = vmatpush.bf16.msra.mxu0 %v1179
      %1438 = vmatpush.bf16.msra.mxu0 %v1161
      %1439 = vmatpush.bf16.msra.mxu0 %v1143
      %1440 = vmatpush.bf16.msra.mxu0 %v1125
      %1441 = vmatpush.bf16.msra.mxu0 %v1107
      %1442 = vmatpush.bf16.msra.mxu0 %v1089
      %1443 = vmatmul.bf16.gmra.mxu0 %v636
      %v1444 = vpop.f32.mrf.mxu0
      %v1445 = vadd.f32 0.0, %v1444
      %v1446 = vpop.f32.mrf.mxu0
      %v1447 = vadd.f32 0.0, %v1446
      %1448 = vmatmul.bf16.gmra.mxu0 %v637
      %v1449 = vpop.f32.mrf.mxu0
      %v1450 = vadd.f32 0.0, %v1449
      %v1451 = vpop.f32.mrf.mxu0
      %v1452 = vadd.f32 0.0, %v1451
      %1453 = vmatmul.bf16.gmra.mxu0 %v638
      %v1454 = vpop.f32.mrf.mxu0
      %v1455 = vadd.f32 0.0, %v1454
      %v1456 = vpop.f32.mrf.mxu0
      %v1457 = vadd.f32 0.0, %v1456
      %1458 = vmatmul.bf16.gmra.mxu0 %v639
      %v1459 = vpop.f32.mrf.mxu0
      %v1460 = vadd.f32 0.0, %v1459
      %v1461 = vpop.f32.mrf.mxu0
      %v1462 = vadd.f32 0.0, %v1461
      %1463 = vmatmul.bf16.gmra.mxu0 %v640
      %v1464 = vpop.f32.mrf.mxu0
      %v1465 = vadd.f32 0.0, %v1464
      %v1466 = vpop.f32.mrf.mxu0
      %v1467 = vadd.f32 0.0, %v1466
      %1468 = vmatmul.bf16.gmra.mxu0 %v641
      %v1469 = vpop.f32.mrf.mxu0
      %v1470 = vadd.f32 0.0, %v1469
      %v1471 = vpop.f32.mrf.mxu0
      %v1472 = vadd.f32 0.0, %v1471
      %1473 = vmatmul.bf16.gmra.mxu0 %v642
      %v1474 = vpop.f32.mrf.mxu0
      %v1475 = vadd.f32 0.0, %v1474
      %v1476 = vpop.f32.mrf.mxu0
      %v1477 = vadd.f32 0.0, %v1476
      %1478 = vmatmul.bf16.gmra.mxu0 %v643
      %v1479 = vpop.f32.mrf.mxu0
      %v1480 = vadd.f32 0.0, %v1479
      %v1481 = vpop.f32.mrf.mxu0
      %v1482 = vadd.f32 0.0, %v1481
      %1483 = vmatmul.bf16.gmra.mxu0 %v644
      %v1484 = vpop.f32.mrf.mxu0
      %v1485 = vadd.f32 0.0, %v1484
      %v1486 = vpop.f32.mrf.mxu0
      %v1487 = vadd.f32 0.0, %v1486
      %1488 = vmatmul.bf16.gmra.mxu0 %v645
      %v1489 = vpop.f32.mrf.mxu0
      %v1490 = vadd.f32 0.0, %v1489
      %v1491 = vpop.f32.mrf.mxu0
      %v1492 = vadd.f32 0.0, %v1491
      %1493 = vdwg.mxu0
      %1494 = vmatpush.bf16.msra.mxu0 %v1216
      %1495 = vmatpush.bf16.msra.mxu0 %v1198
      %1496 = vmatpush.bf16.msra.mxu0 %v1180
      %1497 = vmatpush.bf16.msra.mxu0 %v1162
      %1498 = vmatpush.bf16.msra.mxu0 %v1144
      %1499 = vmatpush.bf16.msra.mxu0 %v1126
      %1500 = vmatpush.bf16.msra.mxu0 %v1108
      %1501 = vmatpush.bf16.msra.mxu0 %v1090
      %1502 = vmatmul.bf16.gmra.mxu0 %v636
      %v1503 = vpop.f32.mrf.mxu0
      %v1504 = vadd.f32 0.0, %v1503
      %v1505 = vpop.f32.mrf.mxu0
      %v1506 = vadd.f32 0.0, %v1505
      %1507 = vmatmul.bf16.gmra.mxu0 %v637
      %v1508 = vpop.f32.mrf.mxu0
      %v1509 = vadd.f32 0.0, %v1508
      %v1510 = vpop.f32.mrf.mxu0
      %v1511 = vadd.f32 0.0, %v1510
      %1512 = vmatmul.bf16.gmra.mxu0 %v638
      %v1513 = vpop.f32.mrf.mxu0
      %v1514 = vadd.f32 0.0, %v1513
      %v1515 = vpop.f32.mrf.mxu0
      %v1516 = vadd.f32 0.0, %v1515
      %1517 = vmatmul.bf16.gmra.mxu0 %v639
      %v1518 = vpop.f32.mrf.mxu0
      %v1519 = vadd.f32 0.0, %v1518
      %v1520 = vpop.f32.mrf.mxu0
      %v1521 = vadd.f32 0.0, %v1520
      %1522 = vmatmul.bf16.gmra.mxu0 %v640
      %v1523 = vpop.f32.mrf.mxu0
      %v1524 = vadd.f32 0.0, %v1523
      %v1525 = vpop.f32.mrf.mxu0
      %v1526 = vadd.f32 0.0, %v1525
      %1527 = vmatmul.bf16.gmra.mxu0 %v641
      %v1528 = vpop.f32.mrf.mxu0
      %v1529 = vadd.f32 0.0, %v1528
      %v1530 = vpop.f32.mrf.mxu0
      %v1531 = vadd.f32 0.0, %v1530
      %1532 = vmatmul.bf16.gmra.mxu0 %v642
      %v1533 = vpop.f32.mrf.mxu0
      %v1534 = vadd.f32 0.0, %v1533
      %v1535 = vpop.f32.mrf.mxu0
      %v1536 = vadd.f32 0.0, %v1535
      %1537 = vmatmul.bf16.gmra.mxu0 %v643
      %v1538 = vpop.f32.mrf.mxu0
      %v1539 = vadd.f32 0.0, %v1538
      %v1540 = vpop.f32.mrf.mxu0
      %v1541 = vadd.f32 0.0, %v1540
      %1542 = vmatmul.bf16.gmra.mxu0 %v644
      %v1543 = vpop.f32.mrf.mxu0
      %v1544 = vadd.f32 0.0, %v1543
      %v1545 = vpop.f32.mrf.mxu0
      %v1546 = vadd.f32 0.0, %v1545
      %1547 = vmatmul.bf16.gmra.mxu0 %v645
      %v1548 = vpop.f32.mrf.mxu0
      %v1549 = vadd.f32 0.0, %v1548
      %v1550 = vpop.f32.mrf.mxu0
      %v1551 = vadd.f32 0.0, %v1550
      %1552 = vdwg.mxu0
      %1553 = vmatpush.bf16.msra.mxu0 %v1217
      %1554 = vmatpush.bf16.msra.mxu0 %v1199
      %1555 = vmatpush.bf16.msra.mxu0 %v1181
      %1556 = vmatpush.bf16.msra.mxu0 %v1163
      %1557 = vmatpush.bf16.msra.mxu0 %v1145
      %1558 = vmatpush.bf16.msra.mxu0 %v1127
      %1559 = vmatpush.bf16.msra.mxu0 %v1109
      %1560 = vmatpush.bf16.msra.mxu0 %v1091
      %1561 = vmatmul.bf16.gmra.mxu0 %v636
      %v1562 = vpop.f32.mrf.mxu0
      %v1563 = vadd.f32 0.0, %v1562
      %v1564 = vpop.f32.mrf.mxu0
      %v1565 = vadd.f32 0.0, %v1564
      %1566 = vmatmul.bf16.gmra.mxu0 %v637
      %v1567 = vpop.f32.mrf.mxu0
      %v1568 = vadd.f32 0.0, %v1567
      %v1569 = vpop.f32.mrf.mxu0
      %v1570 = vadd.f32 0.0, %v1569
      %1571 = vmatmul.bf16.gmra.mxu0 %v638
      %v1572 = vpop.f32.mrf.mxu0
      %v1573 = vadd.f32 0.0, %v1572
      %v1574 = vpop.f32.mrf.mxu0
      %v1575 = vadd.f32 0.0, %v1574
      %1576 = vmatmul.bf16.gmra.mxu0 %v639
      %v1577 = vpop.f32.mrf.mxu0
      %v1578 = vadd.f32 0.0, %v1577
      %v1579 = vpop.f32.mrf.mxu0
      %v1580 = vadd.f32 0.0, %v1579
      %1581 = vmatmul.bf16.gmra.mxu0 %v640
      %v1582 = vpop.f32.mrf.mxu0
      %v1583 = vadd.f32 0.0, %v1582
      %v1584 = vpop.f32.mrf.mxu0
      %v1585 = vadd.f32 0.0, %v1584
      %1586 = vmatmul.bf16.gmra.mxu0 %v641
      %v1587 = vpop.f32.mrf.mxu0
      %v1588 = vadd.f32 0.0, %v1587
      %v1589 = vpop.f32.mrf.mxu0
      %v1590 = vadd.f32 0.0, %v1589
      %1591 = vmatmul.bf16.gmra.mxu0 %v642
      %v1592 = vpop.f32.mrf.mxu0
      %v1593 = vadd.f32 0.0, %v1592
      %v1594 = vpop.f32.mrf.mxu0
      %v1595 = vadd.f32 0.0, %v1594
      %1596 = vmatmul.bf16.gmra.mxu0 %v643
      %v1597 = vpop.f32.mrf.mxu0
      %v1598 = vadd.f32 0.0, %v1597
      %v1599 = vpop.f32.mrf.mxu0
      %v1600 = vadd.f32 0.0, %v1599
      %1601 = vmatmul.bf16.gmra.mxu0 %v644
      %v1602 = vpop.f32.mrf.mxu0
      %v1603 = vadd.f32 0.0, %v1602
      %v1604 = vpop.f32.mrf.mxu0
      %v1605 = vadd.f32 0.0, %v1604
      %1606 = vmatmul.bf16.gmra.mxu0 %v645
      %v1607 = vpop.f32.mrf.mxu0
      %v1608 = vadd.f32 0.0, %v1607
      %v1609 = vpop.f32.mrf.mxu0
      %v1610 = vadd.f32 0.0, %v1609
      %1611 = vdwg.mxu0
      %1612 = vmatpush.bf16.msra.mxu0 %v1218
      %1613 = vmatpush.bf16.msra.mxu0 %v1200
      %1614 = vmatpush.bf16.msra.mxu0 %v1182
      %1615 = vmatpush.bf16.msra.mxu0 %v1164
      %1616 = vmatpush.bf16.msra.mxu0 %v1146
      %1617 = vmatpush.bf16.msra.mxu0 %v1128
      %1618 = vmatpush.bf16.msra.mxu0 %v1110
      %1619 = vmatpush.bf16.msra.mxu0 %v1092
      %1620 = vmatmul.bf16.gmra.mxu0 %v636
      %v1621 = vpop.f32.mrf.mxu0
      %v1622 = vadd.f32 0.0, %v1621
      %v1623 = vpop.f32.mrf.mxu0
      %v1624 = vadd.f32 0.0, %v1623
      %1625 = vmatmul.bf16.gmra.mxu0 %v637
      %v1626 = vpop.f32.mrf.mxu0
      %v1627 = vadd.f32 0.0, %v1626
      %v1628 = vpop.f32.mrf.mxu0
      %v1629 = vadd.f32 0.0, %v1628
      %1630 = vmatmul.bf16.gmra.mxu0 %v638
      %v1631 = vpop.f32.mrf.mxu0
      %v1632 = vadd.f32 0.0, %v1631
      %v1633 = vpop.f32.mrf.mxu0
      %v1634 = vadd.f32 0.0, %v1633
      %1635 = vmatmul.bf16.gmra.mxu0 %v639
      %v1636 = vpop.f32.mrf.mxu0
      %v1637 = vadd.f32 0.0, %v1636
      %v1638 = vpop.f32.mrf.mxu0
      %v1639 = vadd.f32 0.0, %v1638
      %1640 = vmatmul.bf16.gmra.mxu0 %v640
      %v1641 = vpop.f32.mrf.mxu0
      %v1642 = vadd.f32 0.0, %v1641
      %v1643 = vpop.f32.mrf.mxu0
      %v1644 = vadd.f32 0.0, %v1643
      %1645 = vmatmul.bf16.gmra.mxu0 %v641
      %v1646 = vpop.f32.mrf.mxu0
      %v1647 = vadd.f32 0.0, %v1646
      %v1648 = vpop.f32.mrf.mxu0
      %v1649 = vadd.f32 0.0, %v1648
      %1650 = vmatmul.bf16.gmra.mxu0 %v642
      %v1651 = vpop.f32.mrf.mxu0
      %v1652 = vadd.f32 0.0, %v1651
      %v1653 = vpop.f32.mrf.mxu0
      %v1654 = vadd.f32 0.0, %v1653
      %1655 = vmatmul.bf16.gmra.mxu0 %v643
      %v1656 = vpop.f32.mrf.mxu0
      %v1657 = vadd.f32 0.0, %v1656
      %v1658 = vpop.f32.mrf.mxu0
      %v1659 = vadd.f32 0.0, %v1658
      %1660 = vmatmul.bf16.gmra.mxu0 %v644
      %v1661 = vpop.f32.mrf.mxu0
      %v1662 = vadd.f32 0.0, %v1661
      %v1663 = vpop.f32.mrf.mxu0
      %v1664 = vadd.f32 0.0, %v1663
      %1665 = vmatmul.bf16.gmra.mxu0 %v645
      %v1666 = vpop.f32.mrf.mxu0
      %v1667 = vadd.f32 0.0, %v1666
      %v1668 = vpop.f32.mrf.mxu0
      %v1669 = vadd.f32 0.0, %v1668
      %1670 = vdwg.mxu0
      %1671 = vmatpush.bf16.msra.mxu0 %v1219
      %1672 = vmatpush.bf16.msra.mxu0 %v1201
      %1673 = vmatpush.bf16.msra.mxu0 %v1183
      %1674 = vmatpush.bf16.msra.mxu0 %v1165
      %1675 = vmatpush.bf16.msra.mxu0 %v1147
      %1676 = vmatpush.bf16.msra.mxu0 %v1129
      %1677 = vmatpush.bf16.msra.mxu0 %v1111
      %1678 = vmatpush.bf16.msra.mxu0 %v1093
      %1679 = vmatmul.bf16.gmra.mxu0 %v636
      %v1680 = vpop.f32.mrf.mxu0
      %v1681 = vadd.f32 0.0, %v1680
      %v1682 = vpop.f32.mrf.mxu0
      %v1683 = vadd.f32 0.0, %v1682
      %1684 = vmatmul.bf16.gmra.mxu0 %v637
      %v1685 = vpop.f32.mrf.mxu0
      %v1686 = vadd.f32 0.0, %v1685
      %v1687 = vpop.f32.mrf.mxu0
      %v1688 = vadd.f32 0.0, %v1687
      %1689 = vmatmul.bf16.gmra.mxu0 %v638
      %v1690 = vpop.f32.mrf.mxu0
      %v1691 = vadd.f32 0.0, %v1690
      %v1692 = vpop.f32.mrf.mxu0
      %v1693 = vadd.f32 0.0, %v1692
      %1694 = vmatmul.bf16.gmra.mxu0 %v639
      %v1695 = vpop.f32.mrf.mxu0
      %v1696 = vadd.f32 0.0, %v1695
      %v1697 = vpop.f32.mrf.mxu0
      %v1698 = vadd.f32 0.0, %v1697
      %1699 = vmatmul.bf16.gmra.mxu0 %v640
      %v1700 = vpop.f32.mrf.mxu0
      %v1701 = vadd.f32 0.0, %v1700
      %v1702 = vpop.f32.mrf.mxu0
      %v1703 = vadd.f32 0.0, %v1702
      %1704 = vmatmul.bf16.gmra.mxu0 %v641
      %v1705 = vpop.f32.mrf.mxu0
      %v1706 = vadd.f32 0.0, %v1705
      %v1707 = vpop.f32.mrf.mxu0
      %v1708 = vadd.f32 0.0, %v1707
      %1709 = vmatmul.bf16.gmra.mxu0 %v642
      %v1710 = vpop.f32.mrf.mxu0
      %v1711 = vadd.f32 0.0, %v1710
      %v1712 = vpop.f32.mrf.mxu0
      %v1713 = vadd.f32 0.0, %v1712
      %1714 = vmatmul.bf16.gmra.mxu0 %v643
      %v1715 = vpop.f32.mrf.mxu0
      %v1716 = vadd.f32 0.0, %v1715
      %v1717 = vpop.f32.mrf.mxu0
      %v1718 = vadd.f32 0.0, %v1717
      %1719 = vmatmul.bf16.gmra.mxu0 %v644
      %v1720 = vpop.f32.mrf.mxu0
      %v1721 = vadd.f32 0.0, %v1720
      %v1722 = vpop.f32.mrf.mxu0
      %v1723 = vadd.f32 0.0, %v1722
      %1724 = vmatmul.bf16.gmra.mxu0 %v645
      %v1725 = vpop.f32.mrf.mxu0
      %v1726 = vadd.f32 0.0, %v1725
      %v1727 = vpop.f32.mrf.mxu0
      %v1728 = vadd.f32 0.0, %v1727
      %1729 = vdwg.mxu0
      %1730 = vmatpush.bf16.msra.mxu0 %v1220
      %1731 = vmatpush.bf16.msra.mxu0 %v1202
      %1732 = vmatpush.bf16.msra.mxu0 %v1184
      %1733 = vmatpush.bf16.msra.mxu0 %v1166
      %1734 = vmatpush.bf16.msra.mxu0 %v1148
      %1735 = vmatpush.bf16.msra.mxu0 %v1130
      %1736 = vmatpush.bf16.msra.mxu0 %v1112
      %1737 = vmatpush.bf16.msra.mxu0 %v1094
      %1738 = vmatmul.bf16.gmra.mxu0 %v636
      %v1739 = vpop.f32.mrf.mxu0
      %v1740 = vadd.f32 0.0, %v1739
      %v1741 = vpop.f32.mrf.mxu0
      %v1742 = vadd.f32 0.0, %v1741
      %1743 = vmatmul.bf16.gmra.mxu0 %v637
      %v1744 = vpop.f32.mrf.mxu0
      %v1745 = vadd.f32 0.0, %v1744
      %v1746 = vpop.f32.mrf.mxu0
      %v1747 = vadd.f32 0.0, %v1746
      %1748 = vmatmul.bf16.gmra.mxu0 %v638
      %v1749 = vpop.f32.mrf.mxu0
      %v1750 = vadd.f32 0.0, %v1749
      %v1751 = vpop.f32.mrf.mxu0
      %v1752 = vadd.f32 0.0, %v1751
      %1753 = vmatmul.bf16.gmra.mxu0 %v639
      %v1754 = vpop.f32.mrf.mxu0
      %v1755 = vadd.f32 0.0, %v1754
      %v1756 = vpop.f32.mrf.mxu0
      %v1757 = vadd.f32 0.0, %v1756
      %1758 = vmatmul.bf16.gmra.mxu0 %v640
      %v1759 = vpop.f32.mrf.mxu0
      %v1760 = vadd.f32 0.0, %v1759
      %v1761 = vpop.f32.mrf.mxu0
      %v1762 = vadd.f32 0.0, %v1761
      %1763 = vmatmul.bf16.gmra.mxu0 %v641
      %v1764 = vpop.f32.mrf.mxu0
      %v1765 = vadd.f32 0.0, %v1764
      %v1766 = vpop.f32.mrf.mxu0
      %v1767 = vadd.f32 0.0, %v1766
      %1768 = vmatmul.bf16.gmra.mxu0 %v642
      %v1769 = vpop.f32.mrf.mxu0
      %v1770 = vadd.f32 0.0, %v1769
      %v1771 = vpop.f32.mrf.mxu0
      %v1772 = vadd.f32 0.0, %v1771
      %1773 = vmatmul.bf16.gmra.mxu0 %v643
      %v1774 = vpop.f32.mrf.mxu0
      %v1775 = vadd.f32 0.0, %v1774
      %v1776 = vpop.f32.mrf.mxu0
      %v1777 = vadd.f32 0.0, %v1776
      %1778 = vmatmul.bf16.gmra.mxu0 %v644
      %v1779 = vpop.f32.mrf.mxu0
      %v1780 = vadd.f32 0.0, %v1779
      %v1781 = vpop.f32.mrf.mxu0
      %v1782 = vadd.f32 0.0, %v1781
      %1783 = vmatmul.bf16.gmra.mxu0 %v645
      %v1784 = vpop.f32.mrf.mxu0
      %v1785 = vadd.f32 0.0, %v1784
      %v1786 = vpop.f32.mrf.mxu0
      %v1787 = vadd.f32 0.0, %v1786
      %1788 = vdwg.mxu0
      %1789 = vmatpush.bf16.msra.mxu0 %v1221
      %1790 = vmatpush.bf16.msra.mxu0 %v1203
      %1791 = vmatpush.bf16.msra.mxu0 %v1185
      %1792 = vmatpush.bf16.msra.mxu0 %v1167
      %1793 = vmatpush.bf16.msra.mxu0 %v1149
      %1794 = vmatpush.bf16.msra.mxu0 %v1131
      %1795 = vmatpush.bf16.msra.mxu0 %v1113
      %1796 = vmatpush.bf16.msra.mxu0 %v1095
      %1797 = vmatmul.bf16.gmra.mxu0 %v636
      %v1798 = vpop.f32.mrf.mxu0
      %v1799 = vadd.f32 0.0, %v1798
      %v1800 = vpop.f32.mrf.mxu0
      %v1801 = vadd.f32 0.0, %v1800
      %1802 = vmatmul.bf16.gmra.mxu0 %v637
      %v1803 = vpop.f32.mrf.mxu0
      %v1804 = vadd.f32 0.0, %v1803
      %v1805 = vpop.f32.mrf.mxu0
      %v1806 = vadd.f32 0.0, %v1805
      %1807 = vmatmul.bf16.gmra.mxu0 %v638
      %v1808 = vpop.f32.mrf.mxu0
      %v1809 = vadd.f32 0.0, %v1808
      %v1810 = vpop.f32.mrf.mxu0
      %v1811 = vadd.f32 0.0, %v1810
      %1812 = vmatmul.bf16.gmra.mxu0 %v639
      %v1813 = vpop.f32.mrf.mxu0
      %v1814 = vadd.f32 0.0, %v1813
      %v1815 = vpop.f32.mrf.mxu0
      %v1816 = vadd.f32 0.0, %v1815
      %1817 = vmatmul.bf16.gmra.mxu0 %v640
      %v1818 = vpop.f32.mrf.mxu0
      %v1819 = vadd.f32 0.0, %v1818
      %v1820 = vpop.f32.mrf.mxu0
      %v1821 = vadd.f32 0.0, %v1820
      %1822 = vmatmul.bf16.gmra.mxu0 %v641
      %v1823 = vpop.f32.mrf.mxu0
      %v1824 = vadd.f32 0.0, %v1823
      %v1825 = vpop.f32.mrf.mxu0
      %v1826 = vadd.f32 0.0, %v1825
      %1827 = vmatmul.bf16.gmra.mxu0 %v642
      %v1828 = vpop.f32.mrf.mxu0
      %v1829 = vadd.f32 0.0, %v1828
      %v1830 = vpop.f32.mrf.mxu0
      %v1831 = vadd.f32 0.0, %v1830
      %1832 = vmatmul.bf16.gmra.mxu0 %v643
      %v1833 = vpop.f32.mrf.mxu0
      %v1834 = vadd.f32 0.0, %v1833
      %v1835 = vpop.f32.mrf.mxu0
      %v1836 = vadd.f32 0.0, %v1835
      %1837 = vmatmul.bf16.gmra.mxu0 %v644
      %v1838 = vpop.f32.mrf.mxu0
      %v1839 = vadd.f32 0.0, %v1838
      %v1840 = vpop.f32.mrf.mxu0
      %v1841 = vadd.f32 0.0, %v1840
      %1842 = vmatmul.bf16.gmra.mxu0 %v645
      %v1843 = vpop.f32.mrf.mxu0
      %v1844 = vadd.f32 0.0, %v1843
      %v1845 = vpop.f32.mrf.mxu0
      %v1846 = vadd.f32 0.0, %v1845
      %1847 = vdwg.mxu0
      %1848 = vmatpush.bf16.msra.mxu0 %v1222
      %1849 = vmatpush.bf16.msra.mxu0 %v1204
      %1850 = vmatpush.bf16.msra.mxu0 %v1186
      %1851 = vmatpush.bf16.msra.mxu0 %v1168
      %1852 = vmatpush.bf16.msra.mxu0 %v1150
      %1853 = vmatpush.bf16.msra.mxu0 %v1132
      %1854 = vmatpush.bf16.msra.mxu0 %v1114
      %1855 = vmatpush.bf16.msra.mxu0 %v1096
      %1856 = vmatmul.bf16.gmra.mxu0 %v636
      %v1857 = vpop.f32.mrf.mxu0
      %v1858 = vadd.f32 0.0, %v1857
      %v1859 = vpop.f32.mrf.mxu0
      %v1860 = vadd.f32 0.0, %v1859
      %1861 = vmatmul.bf16.gmra.mxu0 %v637
      %v1862 = vpop.f32.mrf.mxu0
      %v1863 = vadd.f32 0.0, %v1862
      %v1864 = vpop.f32.mrf.mxu0
      %v1865 = vadd.f32 0.0, %v1864
      %1866 = vmatmul.bf16.gmra.mxu0 %v638
      %v1867 = vpop.f32.mrf.mxu0
      %v1868 = vadd.f32 0.0, %v1867
      %v1869 = vpop.f32.mrf.mxu0
      %v1870 = vadd.f32 0.0, %v1869
      %1871 = vmatmul.bf16.gmra.mxu0 %v639
      %v1872 = vpop.f32.mrf.mxu0
      %v1873 = vadd.f32 0.0, %v1872
      %v1874 = vpop.f32.mrf.mxu0
      %v1875 = vadd.f32 0.0, %v1874
      %1876 = vmatmul.bf16.gmra.mxu0 %v640
      %v1877 = vpop.f32.mrf.mxu0
      %v1878 = vadd.f32 0.0, %v1877
      %v1879 = vpop.f32.mrf.mxu0
      %v1880 = vadd.f32 0.0, %v1879
      %1881 = vmatmul.bf16.gmra.mxu0 %v641
      %v1882 = vpop.f32.mrf.mxu0
      %v1883 = vadd.f32 0.0, %v1882
      %v1884 = vpop.f32.mrf.mxu0
      %v1885 = vadd.f32 0.0, %v1884
      %1886 = vmatmul.bf16.gmra.mxu0 %v642
      %v1887 = vpop.f32.mrf.mxu0
      %v1888 = vadd.f32 0.0, %v1887
      %v1889 = vpop.f32.mrf.mxu0
      %v1890 = vadd.f32 0.0, %v1889
      %1891 = vmatmul.bf16.gmra.mxu0 %v643
      %v1892 = vpop.f32.mrf.mxu0
      %v1893 = vadd.f32 0.0, %v1892
      %v1894 = vpop.f32.mrf.mxu0
      %v1895 = vadd.f32 0.0, %v1894
      %1896 = vmatmul.bf16.gmra.mxu0 %v644
      %v1897 = vpop.f32.mrf.mxu0
      %v1898 = vadd.f32 0.0, %v1897
      %v1899 = vpop.f32.mrf.mxu0
      %v1900 = vadd.f32 0.0, %v1899
      %1901 = vmatmul.bf16.gmra.mxu0 %v645
      %v1902 = vpop.f32.mrf.mxu0
      %v1903 = vadd.f32 0.0, %v1902
      %v1904 = vpop.f32.mrf.mxu0
      %v1905 = vadd.f32 0.0, %v1904
      %1906 = vdwg.mxu0
      %1907 = vmatpush.bf16.msra.mxu0 %v1223
      %1908 = vmatpush.bf16.msra.mxu0 %v1205
      %1909 = vmatpush.bf16.msra.mxu0 %v1187
      %1910 = vmatpush.bf16.msra.mxu0 %v1169
      %1911 = vmatpush.bf16.msra.mxu0 %v1151
      %1912 = vmatpush.bf16.msra.mxu0 %v1133
      %1913 = vmatpush.bf16.msra.mxu0 %v1115
      %1914 = vmatpush.bf16.msra.mxu0 %v1097
      %1915 = vmatmul.bf16.gmra.mxu0 %v636
      %v1916 = vpop.f32.mrf.mxu0
      %v1917 = vadd.f32 0.0, %v1916
      %v1918 = vpop.f32.mrf.mxu0
      %v1919 = vadd.f32 0.0, %v1918
      %1920 = vmatmul.bf16.gmra.mxu0 %v637
      %v1921 = vpop.f32.mrf.mxu0
      %v1922 = vadd.f32 0.0, %v1921
      %v1923 = vpop.f32.mrf.mxu0
      %v1924 = vadd.f32 0.0, %v1923
      %1925 = vmatmul.bf16.gmra.mxu0 %v638
      %v1926 = vpop.f32.mrf.mxu0
      %v1927 = vadd.f32 0.0, %v1926
      %v1928 = vpop.f32.mrf.mxu0
      %v1929 = vadd.f32 0.0, %v1928
      %1930 = vmatmul.bf16.gmra.mxu0 %v639
      %v1931 = vpop.f32.mrf.mxu0
      %v1932 = vadd.f32 0.0, %v1931
      %v1933 = vpop.f32.mrf.mxu0
      %v1934 = vadd.f32 0.0, %v1933
      %1935 = vmatmul.bf16.gmra.mxu0 %v640
      %v1936 = vpop.f32.mrf.mxu0
      %v1937 = vadd.f32 0.0, %v1936
      %v1938 = vpop.f32.mrf.mxu0
      %v1939 = vadd.f32 0.0, %v1938
      %1940 = vmatmul.bf16.gmra.mxu0 %v641
      %v1941 = vpop.f32.mrf.mxu0
      %v1942 = vadd.f32 0.0, %v1941
      %v1943 = vpop.f32.mrf.mxu0
      %v1944 = vadd.f32 0.0, %v1943
      %1945 = vmatmul.bf16.gmra.mxu0 %v642
      %v1946 = vpop.f32.mrf.mxu0
      %v1947 = vadd.f32 0.0, %v1946
      %v1948 = vpop.f32.mrf.mxu0
      %v1949 = vadd.f32 0.0, %v1948
      %1950 = vmatmul.bf16.gmra.mxu0 %v643
      %v1951 = vpop.f32.mrf.mxu0
      %v1952 = vadd.f32 0.0, %v1951
      %v1953 = vpop.f32.mrf.mxu0
      %v1954 = vadd.f32 0.0, %v1953
      %1955 = vmatmul.bf16.gmra.mxu0 %v644
      %v1956 = vpop.f32.mrf.mxu0
      %v1957 = vadd.f32 0.0, %v1956
      %v1958 = vpop.f32.mrf.mxu0
      %v1959 = vadd.f32 0.0, %v1958
      %1960 = vmatmul.bf16.gmra.mxu0 %v645
      %v1961 = vpop.f32.mrf.mxu0
      %v1962 = vadd.f32 0.0, %v1961
      %v1963 = vpop.f32.mrf.mxu0
      %v1964 = vadd.f32 0.0, %v1963
      %1965 = vdwg.mxu0
      %1966 = vmatpush.bf16.msra.mxu0 %v1224
      %1967 = vmatpush.bf16.msra.mxu0 %v1206
      %1968 = vmatpush.bf16.msra.mxu0 %v1188
      %1969 = vmatpush.bf16.msra.mxu0 %v1170
      %1970 = vmatpush.bf16.msra.mxu0 %v1152
      %1971 = vmatpush.bf16.msra.mxu0 %v1134
      %1972 = vmatpush.bf16.msra.mxu0 %v1116
      %1973 = vmatpush.bf16.msra.mxu0 %v1098
      %1974 = vmatmul.bf16.gmra.mxu0 %v636
      %v1975 = vpop.f32.mrf.mxu0
      %v1976 = vadd.f32 0.0, %v1975
      %v1977 = vpop.f32.mrf.mxu0
      %v1978 = vadd.f32 0.0, %v1977
      %1979 = vmatmul.bf16.gmra.mxu0 %v637
      %v1980 = vpop.f32.mrf.mxu0
      %v1981 = vadd.f32 0.0, %v1980
      %v1982 = vpop.f32.mrf.mxu0
      %v1983 = vadd.f32 0.0, %v1982
      %1984 = vmatmul.bf16.gmra.mxu0 %v638
      %v1985 = vpop.f32.mrf.mxu0
      %v1986 = vadd.f32 0.0, %v1985
      %v1987 = vpop.f32.mrf.mxu0
      %v1988 = vadd.f32 0.0, %v1987
      %1989 = vmatmul.bf16.gmra.mxu0 %v639
      %v1990 = vpop.f32.mrf.mxu0
      %v1991 = vadd.f32 0.0, %v1990
      %v1992 = vpop.f32.mrf.mxu0
      %v1993 = vadd.f32 0.0, %v1992
      %1994 = vmatmul.bf16.gmra.mxu0 %v640
      %v1995 = vpop.f32.mrf.mxu0
      %v1996 = vadd.f32 0.0, %v1995
      %v1997 = vpop.f32.mrf.mxu0
      %v1998 = vadd.f32 0.0, %v1997
      %1999 = vmatmul.bf16.gmra.mxu0 %v641
      %v2000 = vpop.f32.mrf.mxu0
      %v2001 = vadd.f32 0.0, %v2000
      %v2002 = vpop.f32.mrf.mxu0
      %v2003 = vadd.f32 0.0, %v2002
      %2004 = vmatmul.bf16.gmra.mxu0 %v642
      %v2005 = vpop.f32.mrf.mxu0
      %v2006 = vadd.f32 0.0, %v2005
      %v2007 = vpop.f32.mrf.mxu0
      %v2008 = vadd.f32 0.0, %v2007
      %2009 = vmatmul.bf16.gmra.mxu0 %v643
      %v2010 = vpop.f32.mrf.mxu0
      %v2011 = vadd.f32 0.0, %v2010
      %v2012 = vpop.f32.mrf.mxu0
      %v2013 = vadd.f32 0.0, %v2012
      %2014 = vmatmul.bf16.gmra.mxu0 %v644
      %v2015 = vpop.f32.mrf.mxu0
      %v2016 = vadd.f32 0.0, %v2015
      %v2017 = vpop.f32.mrf.mxu0
      %v2018 = vadd.f32 0.0, %v2017
      %2019 = vmatmul.bf16.gmra.mxu0 %v645
      %v2020 = vpop.f32.mrf.mxu0
      %v2021 = vadd.f32 0.0, %v2020
      %v2022 = vpop.f32.mrf.mxu0
      %v2023 = vadd.f32 0.0, %v2022
      %2024 = vdwg.mxu0
      %2025 = vmatpush.bf16.msra.mxu0 %v1225
      %2026 = vmatpush.bf16.msra.mxu0 %v1207
      %2027 = vmatpush.bf16.msra.mxu0 %v1189
      %2028 = vmatpush.bf16.msra.mxu0 %v1171
      %2029 = vmatpush.bf16.msra.mxu0 %v1153
      %2030 = vmatpush.bf16.msra.mxu0 %v1135
      %2031 = vmatpush.bf16.msra.mxu0 %v1117
      %2032 = vmatpush.bf16.msra.mxu0 %v1099
      %2033 = vmatmul.bf16.gmra.mxu0 %v636
      %v2034 = vpop.f32.mrf.mxu0
      %v2035 = vadd.f32 0.0, %v2034
      %v2036 = vpop.f32.mrf.mxu0
      %v2037 = vadd.f32 0.0, %v2036
      %2038 = vmatmul.bf16.gmra.mxu0 %v637
      %v2039 = vpop.f32.mrf.mxu0
      %v2040 = vadd.f32 0.0, %v2039
      %v2041 = vpop.f32.mrf.mxu0
      %v2042 = vadd.f32 0.0, %v2041
      %2043 = vmatmul.bf16.gmra.mxu0 %v638
      %v2044 = vpop.f32.mrf.mxu0
      %v2045 = vadd.f32 0.0, %v2044
      %v2046 = vpop.f32.mrf.mxu0
      %v2047 = vadd.f32 0.0, %v2046
      %2048 = vmatmul.bf16.gmra.mxu0 %v639
      %v2049 = vpop.f32.mrf.mxu0
      %v2050 = vadd.f32 0.0, %v2049
      %v2051 = vpop.f32.mrf.mxu0
      %v2052 = vadd.f32 0.0, %v2051
      %2053 = vmatmul.bf16.gmra.mxu0 %v640
      %v2054 = vpop.f32.mrf.mxu0
      %v2055 = vadd.f32 0.0, %v2054
      %v2056 = vpop.f32.mrf.mxu0
      %v2057 = vadd.f32 0.0, %v2056
      %2058 = vmatmul.bf16.gmra.mxu0 %v641
      %v2059 = vpop.f32.mrf.mxu0
      %v2060 = vadd.f32 0.0, %v2059
      %v2061 = vpop.f32.mrf.mxu0
      %v2062 = vadd.f32 0.0, %v2061
      %2063 = vmatmul.bf16.gmra.mxu0 %v642
      %v2064 = vpop.f32.mrf.mxu0
      %v2065 = vadd.f32 0.0, %v2064
      %v2066 = vpop.f32.mrf.mxu0
      %v2067 = vadd.f32 0.0, %v2066
      %2068 = vmatmul.bf16.gmra.mxu0 %v643
      %v2069 = vpop.f32.mrf.mxu0
      %v2070 = vadd.f32 0.0, %v2069
      %v2071 = vpop.f32.mrf.mxu0
      %v2072 = vadd.f32 0.0, %v2071
      %2073 = vmatmul.bf16.gmra.mxu0 %v644
      %v2074 = vpop.f32.mrf.mxu0
      %v2075 = vadd.f32 0.0, %v2074
      %v2076 = vpop.f32.mrf.mxu0
      %v2077 = vadd.f32 0.0, %v2076
      %2078 = vmatmul.bf16.gmra.mxu0 %v645
      %v2079 = vpop.f32.mrf.mxu0
      %v2080 = vadd.f32 0.0, %v2079
      %v2081 = vpop.f32.mrf.mxu0
      %v2082 = vadd.f32 0.0, %v2081
      %2083 = vdwg.mxu0
      %2084 = vmatpush.bf16.msra.mxu0 %v1226
      %2085 = vmatpush.bf16.msra.mxu0 %v1208
      %2086 = vmatpush.bf16.msra.mxu0 %v1190
      %2087 = vmatpush.bf16.msra.mxu0 %v1172
      %2088 = vmatpush.bf16.msra.mxu0 %v1154
      %2089 = vmatpush.bf16.msra.mxu0 %v1136
      %2090 = vmatpush.bf16.msra.mxu0 %v1118
      %2091 = vmatpush.bf16.msra.mxu0 %v1100
      %2092 = vmatmul.bf16.gmra.mxu0 %v636
      %v2093 = vpop.f32.mrf.mxu0
      %v2094 = vadd.f32 0.0, %v2093
      %v2095 = vpop.f32.mrf.mxu0
      %v2096 = vadd.f32 0.0, %v2095
      %2097 = vmatmul.bf16.gmra.mxu0 %v637
      %v2098 = vpop.f32.mrf.mxu0
      %v2099 = vadd.f32 0.0, %v2098
      %v2100 = vpop.f32.mrf.mxu0
      %v2101 = vadd.f32 0.0, %v2100
      %2102 = vmatmul.bf16.gmra.mxu0 %v638
      %v2103 = vpop.f32.mrf.mxu0
      %v2104 = vadd.f32 0.0, %v2103
      %v2105 = vpop.f32.mrf.mxu0
      %v2106 = vadd.f32 0.0, %v2105
      %2107 = vmatmul.bf16.gmra.mxu0 %v639
      %v2108 = vpop.f32.mrf.mxu0
      %v2109 = vadd.f32 0.0, %v2108
      %v2110 = vpop.f32.mrf.mxu0
      %v2111 = vadd.f32 0.0, %v2110
      %2112 = vmatmul.bf16.gmra.mxu0 %v640
      %v2113 = vpop.f32.mrf.mxu0
      %v2114 = vadd.f32 0.0, %v2113
      %v2115 = vpop.f32.mrf.mxu0
      %v2116 = vadd.f32 0.0, %v2115
      %2117 = vmatmul.bf16.gmra.mxu0 %v641
      %v2118 = vpop.f32.mrf.mxu0
      %v2119 = vadd.f32 0.0, %v2118
      %v2120 = vpop.f32.mrf.mxu0
      %v2121 = vadd.f32 0.0, %v2120
      %2122 = vmatmul.bf16.gmra.mxu0 %v642
      %v2123 = vpop.f32.mrf.mxu0
      %v2124 = vadd.f32 0.0, %v2123
      %v2125 = vpop.f32.mrf.mxu0
      %v2126 = vadd.f32 0.0, %v2125
      %2127 = vmatmul.bf16.gmra.mxu0 %v643
      %v2128 = vpop.f32.mrf.mxu0
      %v2129 = vadd.f32 0.0, %v2128
      %v2130 = vpop.f32.mrf.mxu0
      %v2131 = vadd.f32 0.0, %v2130
      %2132 = vmatmul.bf16.gmra.mxu0 %v644
      %v2133 = vpop.f32.mrf.mxu0
      %v2134 = vadd.f32 0.0, %v2133
      %v2135 = vpop.f32.mrf.mxu0
      %v2136 = vadd.f32 0.0, %v2135
      %2137 = vmatmul.bf16.gmra.mxu0 %v645
      %v2138 = vpop.f32.mrf.mxu0
      %v2139 = vadd.f32 0.0, %v2138
      %v2140 = vpop.f32.mrf.mxu0
      %v2141 = vadd.f32 0.0, %v2140
      %2142 = vdwg.mxu0
      %2143 = vmatpush.bf16.msra.mxu0 %v1227
      %2144 = vmatpush.bf16.msra.mxu0 %v1209
      %2145 = vmatpush.bf16.msra.mxu0 %v1191
      %2146 = vmatpush.bf16.msra.mxu0 %v1173
      %2147 = vmatpush.bf16.msra.mxu0 %v1155
      %2148 = vmatpush.bf16.msra.mxu0 %v1137
      %2149 = vmatpush.bf16.msra.mxu0 %v1119
      %2150 = vmatpush.bf16.msra.mxu0 %v1101
      %2151 = vmatmul.bf16.gmra.mxu0 %v636
      %v2152 = vpop.f32.mrf.mxu0
      %v2153 = vadd.f32 0.0, %v2152
      %v2154 = vpop.f32.mrf.mxu0
      %v2155 = vadd.f32 0.0, %v2154
      %2156 = vmatmul.bf16.gmra.mxu0 %v637
      %v2157 = vpop.f32.mrf.mxu0
      %v2158 = vadd.f32 0.0, %v2157
      %v2159 = vpop.f32.mrf.mxu0
      %v2160 = vadd.f32 0.0, %v2159
      %2161 = vmatmul.bf16.gmra.mxu0 %v638
      %v2162 = vpop.f32.mrf.mxu0
      %v2163 = vadd.f32 0.0, %v2162
      %v2164 = vpop.f32.mrf.mxu0
      %v2165 = vadd.f32 0.0, %v2164
      %2166 = vmatmul.bf16.gmra.mxu0 %v639
      %v2167 = vpop.f32.mrf.mxu0
      %v2168 = vadd.f32 0.0, %v2167
      %v2169 = vpop.f32.mrf.mxu0
      %v2170 = vadd.f32 0.0, %v2169
      %2171 = vmatmul.bf16.gmra.mxu0 %v640
      %v2172 = vpop.f32.mrf.mxu0
      %v2173 = vadd.f32 0.0, %v2172
      %v2174 = vpop.f32.mrf.mxu0
      %v2175 = vadd.f32 0.0, %v2174
      %2176 = vmatmul.bf16.gmra.mxu0 %v641
      %v2177 = vpop.f32.mrf.mxu0
      %v2178 = vadd.f32 0.0, %v2177
      %v2179 = vpop.f32.mrf.mxu0
      %v2180 = vadd.f32 0.0, %v2179
      %2181 = vmatmul.bf16.gmra.mxu0 %v642
      %v2182 = vpop.f32.mrf.mxu0
      %v2183 = vadd.f32 0.0, %v2182
      %v2184 = vpop.f32.mrf.mxu0
      %v2185 = vadd.f32 0.0, %v2184
      %2186 = vmatmul.bf16.gmra.mxu0 %v643
      %v2187 = vpop.f32.mrf.mxu0
      %v2188 = vadd.f32 0.0, %v2187
      %v2189 = vpop.f32.mrf.mxu0
      %v2190 = vadd.f32 0.0, %v2189
      %2191 = vmatmul.bf16.gmra.mxu0 %v644
      %v2192 = vpop.f32.mrf.mxu0
      %v2193 = vadd.f32 0.0, %v2192
      %v2194 = vpop.f32.mrf.mxu0
      %v2195 = vadd.f32 0.0, %v2194
      %2196 = vmatmul.bf16.gmra.mxu0 %v645
      %v2197 = vpop.f32.mrf.mxu0
      %v2198 = vadd.f32 0.0, %v2197
      %v2199 = vpop.f32.mrf.mxu0
      %v2200 = vadd.f32 0.0, %v2199
      %2201 = vdwg.mxu0
      %2202 = vmatpush.bf16.msra.mxu0 %v1228
      %2203 = vmatpush.bf16.msra.mxu0 %v1210
      %2204 = vmatpush.bf16.msra.mxu0 %v1192
      %2205 = vmatpush.bf16.msra.mxu0 %v1174
      %2206 = vmatpush.bf16.msra.mxu0 %v1156
      %2207 = vmatpush.bf16.msra.mxu0 %v1138
      %2208 = vmatpush.bf16.msra.mxu0 %v1120
      %2209 = vmatpush.bf16.msra.mxu0 %v1102
      %2210 = vmatmul.bf16.gmra.mxu0 %v636
      %v2211 = vpop.f32.mrf.mxu0
      %v2212 = vadd.f32 0.0, %v2211
      %v2213 = vpop.f32.mrf.mxu0
      %v2214 = vadd.f32 0.0, %v2213
      %2215 = vmatmul.bf16.gmra.mxu0 %v637
      %v2216 = vpop.f32.mrf.mxu0
      %v2217 = vadd.f32 0.0, %v2216
      %v2218 = vpop.f32.mrf.mxu0
      %v2219 = vadd.f32 0.0, %v2218
      %2220 = vmatmul.bf16.gmra.mxu0 %v638
      %v2221 = vpop.f32.mrf.mxu0
      %v2222 = vadd.f32 0.0, %v2221
      %v2223 = vpop.f32.mrf.mxu0
      %v2224 = vadd.f32 0.0, %v2223
      %2225 = vmatmul.bf16.gmra.mxu0 %v639
      %v2226 = vpop.f32.mrf.mxu0
      %v2227 = vadd.f32 0.0, %v2226
      %v2228 = vpop.f32.mrf.mxu0
      %v2229 = vadd.f32 0.0, %v2228
      %2230 = vmatmul.bf16.gmra.mxu0 %v640
      %v2231 = vpop.f32.mrf.mxu0
      %v2232 = vadd.f32 0.0, %v2231
      %v2233 = vpop.f32.mrf.mxu0
      %v2234 = vadd.f32 0.0, %v2233
      %2235 = vmatmul.bf16.gmra.mxu0 %v641
      %v2236 = vpop.f32.mrf.mxu0
      %v2237 = vadd.f32 0.0, %v2236
      %v2238 = vpop.f32.mrf.mxu0
      %v2239 = vadd.f32 0.0, %v2238
      %2240 = vmatmul.bf16.gmra.mxu0 %v642
      %v2241 = vpop.f32.mrf.mxu0
      %v2242 = vadd.f32 0.0, %v2241
      %v2243 = vpop.f32.mrf.mxu0
      %v2244 = vadd.f32 0.0, %v2243
      %2245 = vmatmul.bf16.gmra.mxu0 %v643
      %v2246 = vpop.f32.mrf.mxu0
      %v2247 = vadd.f32 0.0, %v2246
      %v2248 = vpop.f32.mrf.mxu0
      %v2249 = vadd.f32 0.0, %v2248
      %2250 = vmatmul.bf16.gmra.mxu0 %v644
      %v2251 = vpop.f32.mrf.mxu0
      %v2252 = vadd.f32 0.0, %v2251
      %v2253 = vpop.f32.mrf.mxu0
      %v2254 = vadd.f32 0.0, %v2253
      %2255 = vmatmul.bf16.gmra.mxu0 %v645
      %v2256 = vpop.f32.mrf.mxu0
      %v2257 = vadd.f32 0.0, %v2256
      %v2258 = vpop.f32.mrf.mxu0
      %v2259 = vadd.f32 0.0, %v2258
      %2260 = vdwg.mxu0
      %2261 = vmatpush.bf16.msra.mxu0 %v1229
      %2262 = vmatpush.bf16.msra.mxu0 %v1211
      %2263 = vmatpush.bf16.msra.mxu0 %v1193
      %2264 = vmatpush.bf16.msra.mxu0 %v1175
      %2265 = vmatpush.bf16.msra.mxu0 %v1157
      %2266 = vmatpush.bf16.msra.mxu0 %v1139
      %2267 = vmatpush.bf16.msra.mxu0 %v1121
      %2268 = vmatpush.bf16.msra.mxu0 %v1103
      %2269 = vmatmul.bf16.gmra.mxu0 %v636
      %v2270 = vpop.f32.mrf.mxu0
      %v2271 = vadd.f32 0.0, %v2270
      %v2272 = vpop.f32.mrf.mxu0
      %v2273 = vadd.f32 0.0, %v2272
      %2274 = vmatmul.bf16.gmra.mxu0 %v637
      %v2275 = vpop.f32.mrf.mxu0
      %v2276 = vadd.f32 0.0, %v2275
      %v2277 = vpop.f32.mrf.mxu0
      %v2278 = vadd.f32 0.0, %v2277
      %2279 = vmatmul.bf16.gmra.mxu0 %v638
      %v2280 = vpop.f32.mrf.mxu0
      %v2281 = vadd.f32 0.0, %v2280
      %v2282 = vpop.f32.mrf.mxu0
      %v2283 = vadd.f32 0.0, %v2282
      %2284 = vmatmul.bf16.gmra.mxu0 %v639
      %v2285 = vpop.f32.mrf.mxu0
      %v2286 = vadd.f32 0.0, %v2285
      %v2287 = vpop.f32.mrf.mxu0
      %v2288 = vadd.f32 0.0, %v2287
      %2289 = vmatmul.bf16.gmra.mxu0 %v640
      %v2290 = vpop.f32.mrf.mxu0
      %v2291 = vadd.f32 0.0, %v2290
      %v2292 = vpop.f32.mrf.mxu0
      %v2293 = vadd.f32 0.0, %v2292
      %2294 = vmatmul.bf16.gmra.mxu0 %v641
      %v2295 = vpop.f32.mrf.mxu0
      %v2296 = vadd.f32 0.0, %v2295
      %v2297 = vpop.f32.mrf.mxu0
      %v2298 = vadd.f32 0.0, %v2297
      %2299 = vmatmul.bf16.gmra.mxu0 %v642
      %v2300 = vpop.f32.mrf.mxu0
      %v2301 = vadd.f32 0.0, %v2300
      %v2302 = vpop.f32.mrf.mxu0
      %v2303 = vadd.f32 0.0, %v2302
      %2304 = vmatmul.bf16.gmra.mxu0 %v643
      %v2305 = vpop.f32.mrf.mxu0
      %v2306 = vadd.f32 0.0, %v2305
      %v2307 = vpop.f32.mrf.mxu0
      %v2308 = vadd.f32 0.0, %v2307
      %2309 = vmatmul.bf16.gmra.mxu0 %v644
      %v2310 = vpop.f32.mrf.mxu0
      %v2311 = vadd.f32 0.0, %v2310
      %v2312 = vpop.f32.mrf.mxu0
      %v2313 = vadd.f32 0.0, %v2312
      %2314 = vmatmul.bf16.gmra.mxu0 %v645
      %v2315 = vpop.f32.mrf.mxu0
      %v2316 = vadd.f32 0.0, %v2315
      %v2317 = vpop.f32.mrf.mxu0
      %v2318 = vadd.f32 0.0, %v2317
      %2319 = vdwg.mxu0
      %2320 = vmatpush.bf16.msra.mxu0 %v1230
      %2321 = vmatpush.bf16.msra.mxu0 %v1212
      %2322 = vmatpush.bf16.msra.mxu0 %v1194
      %2323 = vmatpush.bf16.msra.mxu0 %v1176
      %2324 = vmatpush.bf16.msra.mxu0 %v1158
      %2325 = vmatpush.bf16.msra.mxu0 %v1140
      %2326 = vmatpush.bf16.msra.mxu0 %v1122
      %2327 = vmatpush.bf16.msra.mxu0 %v1104
      %2328 = vmatmul.bf16.gmra.mxu0 %v636
      %v2329 = vpop.f32.mrf.mxu0
      %v2330 = vadd.f32 0.0, %v2329
      %v2331 = vpop.f32.mrf.mxu0
      %v2332 = vadd.f32 0.0, %v2331
      %2333 = vmatmul.bf16.gmra.mxu0 %v637
      %v2334 = vpop.f32.mrf.mxu0
      %v2335 = vadd.f32 0.0, %v2334
      %v2336 = vpop.f32.mrf.mxu0
      %v2337 = vadd.f32 0.0, %v2336
      %2338 = vmatmul.bf16.gmra.mxu0 %v638
      %v2339 = vpop.f32.mrf.mxu0
      %v2340 = vadd.f32 0.0, %v2339
      %v2341 = vpop.f32.mrf.mxu0
      %v2342 = vadd.f32 0.0, %v2341
      %2343 = vmatmul.bf16.gmra.mxu0 %v639
      %v2344 = vpop.f32.mrf.mxu0
      %v2345 = vadd.f32 0.0, %v2344
      %v2346 = vpop.f32.mrf.mxu0
      %v2347 = vadd.f32 0.0, %v2346
      %2348 = vmatmul.bf16.gmra.mxu0 %v640
      %v2349 = vpop.f32.mrf.mxu0
      %v2350 = vadd.f32 0.0, %v2349
      %v2351 = vpop.f32.mrf.mxu0
      %v2352 = vadd.f32 0.0, %v2351
      %2353 = vmatmul.bf16.gmra.mxu0 %v641
      %v2354 = vpop.f32.mrf.mxu0
      %v2355 = vadd.f32 0.0, %v2354
      %v2356 = vpop.f32.mrf.mxu0
      %v2357 = vadd.f32 0.0, %v2356
      %2358 = vmatmul.bf16.gmra.mxu0 %v642
      %v2359 = vpop.f32.mrf.mxu0
      %v2360 = vadd.f32 0.0, %v2359
      %v2361 = vpop.f32.mrf.mxu0
      %v2362 = vadd.f32 0.0, %v2361
      %2363 = vmatmul.bf16.gmra.mxu0 %v643
      %v2364 = vpop.f32.mrf.mxu0
      %v2365 = vadd.f32 0.0, %v2364
      %v2366 = vpop.f32.mrf.mxu0
      %v2367 = vadd.f32 0.0, %v2366
      %2368 = vmatmul.bf16.gmra.mxu0 %v644
      %v2369 = vpop.f32.mrf.mxu0
      %v2370 = vadd.f32 0.0, %v2369
      %v2371 = vpop.f32.mrf.mxu0
      %v2372 = vadd.f32 0.0, %v2371
      %2373 = vmatmul.bf16.gmra.mxu0 %v645
      %v2374 = vpop.f32.mrf.mxu0
      %v2375 = vadd.f32 0.0, %v2374
      %v2376 = vpop.f32.mrf.mxu0
      %v2377 = vadd.f32 0.0, %v2376
      %2378 = vdwg.mxu0
      %2379 = vmatpush.bf16.msra.mxu0 %v1231
      %2380 = vmatpush.bf16.msra.mxu0 %v1213
      %2381 = vmatpush.bf16.msra.mxu0 %v1195
      %2382 = vmatpush.bf16.msra.mxu0 %v1177
      %2383 = vmatpush.bf16.msra.mxu0 %v1159
      %2384 = vmatpush.bf16.msra.mxu0 %v1141
      %2385 = vmatpush.bf16.msra.mxu0 %v1123
      %2386 = vmatpush.bf16.msra.mxu0 %v1105
      %2387 = vmatmul.bf16.gmra.mxu0 %v636
      %v2388 = vpop.f32.mrf.mxu0
      %v2389 = vadd.f32 0.0, %v2388
      %v2390 = vpop.f32.mrf.mxu0
      %v2391 = vadd.f32 0.0, %v2390
      %2392 = vmatmul.bf16.gmra.mxu0 %v637
      %v2393 = vpop.f32.mrf.mxu0
      %v2394 = vadd.f32 0.0, %v2393
      %v2395 = vpop.f32.mrf.mxu0
      %v2396 = vadd.f32 0.0, %v2395
      %2397 = vmatmul.bf16.gmra.mxu0 %v638
      %v2398 = vpop.f32.mrf.mxu0
      %v2399 = vadd.f32 0.0, %v2398
      %v2400 = vpop.f32.mrf.mxu0
      %v2401 = vadd.f32 0.0, %v2400
      %2402 = vmatmul.bf16.gmra.mxu0 %v639
      %v2403 = vpop.f32.mrf.mxu0
      %v2404 = vadd.f32 0.0, %v2403
      %v2405 = vpop.f32.mrf.mxu0
      %v2406 = vadd.f32 0.0, %v2405
      %2407 = vmatmul.bf16.gmra.mxu0 %v640
      %v2408 = vpop.f32.mrf.mxu0
      %v2409 = vadd.f32 0.0, %v2408
      %v2410 = vpop.f32.mrf.mxu0
      %v2411 = vadd.f32 0.0, %v2410
      %2412 = vmatmul.bf16.gmra.mxu0 %v641
      %v2413 = vpop.f32.mrf.mxu0
      %v2414 = vadd.f32 0.0, %v2413
      %v2415 = vpop.f32.mrf.mxu0
      %v2416 = vadd.f32 0.0, %v2415
      %2417 = vmatmul.bf16.gmra.mxu0 %v642
      %v2418 = vpop.f32.mrf.mxu0
      %v2419 = vadd.f32 0.0, %v2418
      %v2420 = vpop.f32.mrf.mxu0
      %v2421 = vadd.f32 0.0, %v2420
      %2422 = vmatmul.bf16.gmra.mxu0 %v643
      %v2423 = vpop.f32.mrf.mxu0
      %v2424 = vadd.f32 0.0, %v2423
      %v2425 = vpop.f32.mrf.mxu0
      %v2426 = vadd.f32 0.0, %v2425
      %2427 = vmatmul.bf16.gmra.mxu0 %v644
      %v2428 = vpop.f32.mrf.mxu0
      %v2429 = vadd.f32 0.0, %v2428
      %v2430 = vpop.f32.mrf.mxu0
      %v2431 = vadd.f32 0.0, %v2430
      %2432 = vmatmul.bf16.gmra.mxu0 %v645
      %v2433 = vpop.f32.mrf.mxu0
      %v2434 = vadd.f32 0.0, %v2433
      %v2435 = vpop.f32.mrf.mxu0
      %v2436 = vadd.f32 0.0, %v2435
      %2437 = vdwg.mxu0
      %v2438 = vunpack.c.l.bf16 %v412
      %v2439 = vunpack.c.l.bf16 %v413
      %v2440 = vunpack.c.l.bf16 %v414
      %v2441 = vunpack.c.l.bf16 %v415
      %v2442 = vunpack.c.l.bf16 %v416
      %v2443 = vunpack.c.l.bf16 %v417
      %v2444 = vunpack.c.l.bf16 %v418
      %v2445 = vunpack.c.l.bf16 %v419
      %v2446 = vunpack.c.l.bf16 %v420
      %v2447 = vunpack.c.l.bf16 %v421
      %v2448 = vunpack.c.l.bf16 %v422
      %v2449 = vunpack.c.l.bf16 %v423
      %v2450 = vunpack.c.l.bf16 %v424
      %v2451 = vunpack.c.l.bf16 %v425
      %v2452 = vunpack.c.l.bf16 %v426
      %v2453 = vunpack.c.l.bf16 %v427
      %v2454 = vunpack.c.l.bf16 %v428
      %v2455 = vunpack.c.l.bf16 %v429
      %v2456 = vunpack.c.l.bf16 %v430
      %v2457 = vunpack.c.l.bf16 %v431
      %v2458 = vmul.f32 %v2438, %v2438
      %v2459 = vmul.f32 %v2439, %v2439
      %v2460 = vmul.f32 %v2440, %v2440
      %v2461 = vmul.f32 %v2441, %v2441
      %v2462 = vmul.f32 %v2442, %v2442
      %v2463 = vmul.f32 %v2443, %v2443
      %v2464 = vmul.f32 %v2444, %v2444
      %v2465 = vmul.f32 %v2445, %v2445
      %v2466 = vmul.f32 %v2446, %v2446
      %v2467 = vmul.f32 %v2447, %v2447
      %v2468 = vmul.f32 %v2448, %v2448
      %v2469 = vmul.f32 %v2449, %v2449
      %v2470 = vmul.f32 %v2450, %v2450
      %v2471 = vmul.f32 %v2451, %v2451
      %v2472 = vmul.f32 %v2452, %v2452
      %v2473 = vmul.f32 %v2453, %v2453
      %v2474 = vmul.f32 %v2454, %v2454
      %v2475 = vmul.f32 %v2455, %v2455
      %v2476 = vmul.f32 %v2456, %v2456
      %v2477 = vmul.f32 %v2457, %v2457
      %v2478 = vpack.c.bf16 %v2459, %v2458
      %v2479 = vpack.c.bf16 %v2461, %v2460
      %v2480 = vpack.c.bf16 %v2463, %v2462
      %v2481 = vpack.c.bf16 %v2465, %v2464
      %v2482 = vpack.c.bf16 %v2467, %v2466
      %v2483 = vpack.c.bf16 %v2469, %v2468
      %v2484 = vpack.c.bf16 %v2471, %v2470
      %v2485 = vpack.c.bf16 %v2473, %v2472
      %v2486 = vpack.c.bf16 %v2475, %v2474
      %v2487 = vpack.c.bf16 %v2477, %v2476
      %v2488 = vld [vmem:[%s3] sm:$0xf]
      %v2489 = vld [vmem:[%s3 + $0x4] sm:$0xf]
      %v2490 = vld [vmem:[%s3 + $0x8] sm:$0xf]
      %v2491 = vld [vmem:[%s3 + $0xc] sm:$0xf]
      %v2492 = vld [vmem:[%s3 + $0x10] sm:$0xf]
      %v2493 = vld [vmem:[%s3 + $0x14] sm:$0xf]
      %v2494 = vld [vmem:[%s3 + $0x18] sm:$0xf]
      %v2495 = vld [vmem:[%s3 + $0x1c] sm:$0xf]
      %v2496 = vld [vmem:[%s3 + $0x20] sm:$0xf]
      %v2497 = vld [vmem:[%s3 + $0x24] sm:$0xf]
      %v2498 = vld [vmem:[%s3 + $0x28] sm:$0xf]
      %v2499 = vld [vmem:[%s3 + $0x2c] sm:$0xf]
      %v2500 = vld [vmem:[%s3 + $0x30] sm:$0xf]
      %v2501 = vld [vmem:[%s3 + $0x34] sm:$0xf]
      %v2502 = vld [vmem:[%s3 + $0x38] sm:$0xf]
      %v2503 = vld [vmem:[%s3 + $0x3c] sm:$0xf]
      %v2520 = vunpack.c.l.b16 %v2488
      %v2521 = vunpack.c.l.b16 %v2489
      %v2522 = vunpack.c.l.b16 %v2490
      %v2523 = vunpack.c.l.b16 %v2491
      %v2524 = vunpack.c.l.b16 %v2492
      %v2525 = vunpack.c.l.b16 %v2493
      %v2526 = vunpack.c.l.b16 %v2494
      %v2527 = vunpack.c.l.b16 %v2495
      %v2528 = vunpack.c.l.b16 %v2496
      %v2529 = vunpack.c.l.b16 %v2497
      %v2530 = vunpack.c.l.b16 %v2498
      %v2531 = vunpack.c.l.b16 %v2499
      %v2532 = vunpack.c.l.b16 %v2500
      %v2533 = vunpack.c.l.b16 %v2501
      %v2534 = vunpack.c.l.b16 %v2502
      %v2535 = vunpack.c.l.b16 %v2503
      %v2536 = vpack.c.b16 %v2521, %v2520
      %v2537 = vpack.c.b16 %v2523, %v2522
      %v2538 = vpack.c.b16 %v2525, %v2524
      %v2539 = vpack.c.b16 %v2527, %v2526
      %v2540 = vpack.c.b16 %v2529, %v2528
      %v2541 = vpack.c.b16 %v2531, %v2530
      %v2542 = vpack.c.b16 %v2533, %v2532
      %v2543 = vpack.c.b16 %v2535, %v2534
      %2552 = vmatpush.bf16.msra.mxu0 %v2543
      %2553 = vmatpush.bf16.msra.mxu0 %v2542
      %2554 = vmatpush.bf16.msra.mxu0 %v2541
      %2555 = vmatpush.bf16.msra.mxu0 %v2540
      %2556 = vmatpush.bf16.msra.mxu0 %v2539
      %2557 = vmatpush.bf16.msra.mxu0 %v2538
      %2558 = vmatpush.bf16.msra.mxu0 %v2537
      %2559 = vmatpush.bf16.msra.mxu0 %v2536
      %2560 = vmatmul.bf16.gmra.mxu0 %v2478
      %v2561 = vpop.f32.mrf.mxu0
      %v2562 = vadd.f32 0.0, %v2561
      %v2563 = vpop.f32.mrf.mxu0
      %v2564 = vadd.f32 0.0, %v2563
      %2565 = vmatmul.bf16.gmra.mxu0 %v2479
      %v2566 = vpop.f32.mrf.mxu0
      %v2567 = vadd.f32 0.0, %v2566
      %v2568 = vpop.f32.mrf.mxu0
      %v2569 = vadd.f32 0.0, %v2568
      %2570 = vmatmul.bf16.gmra.mxu0 %v2480
      %v2571 = vpop.f32.mrf.mxu0
      %v2572 = vadd.f32 0.0, %v2571
      %v2573 = vpop.f32.mrf.mxu0
      %v2574 = vadd.f32 0.0, %v2573
      %2575 = vmatmul.bf16.gmra.mxu0 %v2481
      %v2576 = vpop.f32.mrf.mxu0
      %v2577 = vadd.f32 0.0, %v2576
      %v2578 = vpop.f32.mrf.mxu0
      %v2579 = vadd.f32 0.0, %v2578
      %2580 = vmatmul.bf16.gmra.mxu0 %v2482
      %v2581 = vpop.f32.mrf.mxu0
      %v2582 = vadd.f32 0.0, %v2581
      %v2583 = vpop.f32.mrf.mxu0
      %v2584 = vadd.f32 0.0, %v2583
      %2585 = vmatmul.bf16.gmra.mxu0 %v2483
      %v2586 = vpop.f32.mrf.mxu0
      %v2587 = vadd.f32 0.0, %v2586
      %v2588 = vpop.f32.mrf.mxu0
      %v2589 = vadd.f32 0.0, %v2588
      %2590 = vmatmul.bf16.gmra.mxu0 %v2484
      %v2591 = vpop.f32.mrf.mxu0
      %v2592 = vadd.f32 0.0, %v2591
      %v2593 = vpop.f32.mrf.mxu0
      %v2594 = vadd.f32 0.0, %v2593
      %2595 = vmatmul.bf16.gmra.mxu0 %v2485
      %v2596 = vpop.f32.mrf.mxu0
      %v2597 = vadd.f32 0.0, %v2596
      %v2598 = vpop.f32.mrf.mxu0
      %v2599 = vadd.f32 0.0, %v2598
      %2600 = vmatmul.bf16.gmra.mxu0 %v2486
      %v2601 = vpop.f32.mrf.mxu0
      %v2602 = vadd.f32 0.0, %v2601
      %v2603 = vpop.f32.mrf.mxu0
      %v2604 = vadd.f32 0.0, %v2603
      %2605 = vmatmul.bf16.gmra.mxu0 %v2487
      %v2606 = vpop.f32.mrf.mxu0
      %v2607 = vadd.f32 0.0, %v2606
      %v2608 = vpop.f32.mrf.mxu0
      %v2609 = vadd.f32 0.0, %v2608
      %2610 = vdwg.mxu0
      %v2611 = vmul.f32 %v2330, %v2330
      %v2612 = vmul.f32 %v2332, %v2332
      %v2613 = vmul.f32 %v2335, %v2335
      %v2614 = vmul.f32 %v2337, %v2337
      %v2615 = vmul.f32 %v2340, %v2340
      %v2616 = vmul.f32 %v2342, %v2342
      %v2617 = vmul.f32 %v2345, %v2345
      %v2618 = vmul.f32 %v2347, %v2347
      %v2619 = vmul.f32 %v2350, %v2350
      %v2620 = vmul.f32 %v2352, %v2352
      %v2621 = vmul.f32 %v2355, %v2355
      %v2622 = vmul.f32 %v2357, %v2357
      %v2623 = vmul.f32 %v2360, %v2360
      %v2624 = vmul.f32 %v2362, %v2362
      %v2625 = vmul.f32 %v2365, %v2365
      %v2626 = vmul.f32 %v2367, %v2367
      %v2627 = vmul.f32 %v2370, %v2370
      %v2628 = vmul.f32 %v2372, %v2372
      %v2629 = vmul.f32 %v2375, %v2375
      %v2630 = vmul.f32 %v2377, %v2377
      %v2631 = vsub.f32 %v2611, %v2562
      %v2632 = vsub.f32 %v2612, %v2564
      %v2633 = vsub.f32 %v2613, %v2567
      %v2634 = vsub.f32 %v2614, %v2569
      %v2635 = vsub.f32 %v2615, %v2572
      %v2636 = vsub.f32 %v2616, %v2574
      %v2637 = vsub.f32 %v2617, %v2577
      %v2638 = vsub.f32 %v2618, %v2579
      %v2639 = vsub.f32 %v2619, %v2582
      %v2640 = vsub.f32 %v2620, %v2584
      %v2641 = vsub.f32 %v2621, %v2587
      %v2642 = vsub.f32 %v2622, %v2589
      %v2643 = vsub.f32 %v2623, %v2592
      %v2644 = vsub.f32 %v2624, %v2594
      %v2645 = vsub.f32 %v2625, %v2597
      %v2646 = vsub.f32 %v2626, %v2599
      %v2647 = vsub.f32 %v2627, %v2602
      %v2648 = vsub.f32 %v2628, %v2604
      %v2649 = vsub.f32 %v2629, %v2607
      %v2650 = vsub.f32 %v2630, %v2609
      %2651 = vadd.xlane.f32.xlu0 %v2631
      %v2652 = vpop.xlane.xlu0 %2651
      %2653 = vadd.xlane.f32.xlu0 %v2632
      %v2654 = vpop.xlane.xlu0 %2653
      %2655 = vadd.xlane.f32.xlu0 %v2633
      %v2656 = vpop.xlane.xlu0 %2655
      %2657 = vadd.xlane.f32.xlu0 %v2634
      %v2658 = vpop.xlane.xlu0 %2657
      %2659 = vadd.xlane.f32.xlu0 %v2635
      %v2660 = vpop.xlane.xlu0 %2659
      %2661 = vadd.xlane.f32.xlu0 %v2636
      %v2662 = vpop.xlane.xlu0 %2661
      %2663 = vadd.xlane.f32.xlu0 %v2637
      %v2664 = vpop.xlane.xlu0 %2663
      %2665 = vadd.xlane.f32.xlu0 %v2638
      %v2666 = vpop.xlane.xlu0 %2665
      %2667 = vadd.xlane.f32.xlu0 %v2639
      %v2668 = vpop.xlane.xlu0 %2667
      %2669 = vadd.xlane.f32.xlu0 %v2640
      %v2670 = vpop.xlane.xlu0 %2669
      %2671 = vadd.xlane.f32.xlu0 %v2641
      %v2672 = vpop.xlane.xlu0 %2671
      %2673 = vadd.xlane.f32.xlu0 %v2642
      %v2674 = vpop.xlane.xlu0 %2673
      %2675 = vadd.xlane.f32.xlu0 %v2643
      %v2676 = vpop.xlane.xlu0 %2675
      %2677 = vadd.xlane.f32.xlu0 %v2644
      %v2678 = vpop.xlane.xlu0 %2677
      %2679 = vadd.xlane.f32.xlu0 %v2645
      %v2680 = vpop.xlane.xlu0 %2679
      %2681 = vadd.xlane.f32.xlu0 %v2646
      %v2682 = vpop.xlane.xlu0 %2681
      %2683 = vadd.xlane.f32.xlu0 %v2647
      %v2684 = vpop.xlane.xlu0 %2683
      %2685 = vadd.xlane.f32.xlu0 %v2648
      %v2686 = vpop.xlane.xlu0 %2685
      %2687 = vadd.xlane.f32.xlu0 %v2649
      %v2688 = vpop.xlane.xlu0 %2687
      %2689 = vadd.xlane.f32.xlu0 %v2650
      %v2690 = vpop.xlane.xlu0 %2689
      %v2691 = vmul.f32 %v2652, 0.5
      %v2692 = vmul.f32 %v2654, 0.5
      %v2693 = vmul.f32 %v2656, 0.5
      %v2694 = vmul.f32 %v2658, 0.5
      %v2695 = vmul.f32 %v2660, 0.5
      %v2696 = vmul.f32 %v2662, 0.5
      %v2697 = vmul.f32 %v2664, 0.5
      %v2698 = vmul.f32 %v2666, 0.5
      %v2699 = vmul.f32 %v2668, 0.5
      %v2700 = vmul.f32 %v2670, 0.5
      %v2701 = vmul.f32 %v2672, 0.5
      %v2702 = vmul.f32 %v2674, 0.5
      %v2703 = vmul.f32 %v2676, 0.5
      %v2704 = vmul.f32 %v2678, 0.5
      %v2705 = vmul.f32 %v2680, 0.5
      %v2706 = vmul.f32 %v2682, 0.5
      %v2707 = vmul.f32 %v2684, 0.5
      %v2708 = vmul.f32 %v2686, 0.5
      %v2709 = vmul.f32 %v2688, 0.5
      %v2710 = vmul.f32 %v2690, 0.5
      %v2711 = vadd.f32 %v432, %v2691
      %v2712 = vadd.f32 %v433, %v2692
      %v2713 = vadd.f32 %v434, %v2693
      %v2714 = vadd.f32 %v435, %v2694
      %v2715 = vadd.f32 %v436, %v2695
      %v2716 = vadd.f32 %v437, %v2696
      %v2717 = vadd.f32 %v438, %v2697
      %v2718 = vadd.f32 %v439, %v2698
      %v2719 = vadd.f32 %v440, %v2699
      %v2720 = vadd.f32 %v441, %v2700
      %v2721 = vadd.f32 %v442, %v2701
      %v2722 = vadd.f32 %v443, %v2702
      %v2723 = vadd.f32 %v444, %v2703
      %v2724 = vadd.f32 %v445, %v2704
      %v2725 = vadd.f32 %v446, %v2705
      %v2726 = vadd.f32 %v447, %v2706
      %v2727 = vadd.f32 %v448, %v2707
      %v2728 = vadd.f32 %v449, %v2708
      %v2729 = vadd.f32 %v450, %v2709
      %v2730 = vadd.f32 %v451, %v2710
      %v2731 = vld [vmem:[%s4] sm:$0x1]
      %v2733 = vperm.slane %v2731, 0
      %v2735 = vadd.f32 %v2389, %v2733
      %v2736 = vadd.f32 %v2391, %v2733
      %v2737 = vadd.f32 %v2394, %v2733
      %v2738 = vadd.f32 %v2396, %v2733
      %v2739 = vadd.f32 %v2399, %v2733
      %v2740 = vadd.f32 %v2401, %v2733
      %v2741 = vadd.f32 %v2404, %v2733
      %v2742 = vadd.f32 %v2406, %v2733
      %v2743 = vadd.f32 %v2409, %v2733
      %v2744 = vadd.f32 %v2411, %v2733
      %v2745 = vadd.f32 %v2414, %v2733
      %v2746 = vadd.f32 %v2416, %v2733
      %v2747 = vadd.f32 %v2419, %v2733
      %v2748 = vadd.f32 %v2421, %v2733
      %v2749 = vadd.f32 %v2424, %v2733
      %v2750 = vadd.f32 %v2426, %v2733
      %v2751 = vadd.f32 %v2429, %v2733
      %v2752 = vadd.f32 %v2431, %v2733
      %v2753 = vadd.f32 %v2434, %v2733
      %v2754 = vadd.f32 %v2436, %v2733
      %v2755 = vmax.f32 %v2735, 0.0
      %v2756 = vmax.f32 %v2736, 0.0
      %v2757 = vmax.f32 %v2737, 0.0
      %v2758 = vmax.f32 %v2738, 0.0
      %v2759 = vmax.f32 %v2739, 0.0
      %v2760 = vmax.f32 %v2740, 0.0
      %v2761 = vmax.f32 %v2741, 0.0
      %v2762 = vmax.f32 %v2742, 0.0
      %v2763 = vmax.f32 %v2743, 0.0
      %v2764 = vmax.f32 %v2744, 0.0
      %v2765 = vmax.f32 %v2745, 0.0
      %v2766 = vmax.f32 %v2746, 0.0
      %v2767 = vmax.f32 %v2747, 0.0
      %v2768 = vmax.f32 %v2748, 0.0
      %v2769 = vmax.f32 %v2749, 0.0
      %v2770 = vmax.f32 %v2750, 0.0
      %v2771 = vmax.f32 %v2751, 0.0
      %v2772 = vmax.f32 %v2752, 0.0
      %v2773 = vmax.f32 %v2753, 0.0
      %v2774 = vmax.f32 %v2754, 0.0
      %v2775 = vpack.c.bf16 %v2756, %v2755
      %v2776 = vpack.c.bf16 %v2758, %v2757
      %v2777 = vpack.c.bf16 %v2760, %v2759
      %v2778 = vpack.c.bf16 %v2762, %v2761
      %v2779 = vpack.c.bf16 %v2764, %v2763
      %v2780 = vpack.c.bf16 %v2766, %v2765
      %v2781 = vpack.c.bf16 %v2768, %v2767
      %v2782 = vpack.c.bf16 %v2770, %v2769
      %v2783 = vpack.c.bf16 %v2772, %v2771
      %v2784 = vpack.c.bf16 %v2774, %v2773
      %v2785 = vld [vmem:[%s5] sm:$0xf]
      %v2786 = vld [vmem:[%s5 + $0x4] sm:$0xf]
      %v2787 = vld [vmem:[%s5 + $0x8] sm:$0xf]
      %v2788 = vld [vmem:[%s5 + $0xc] sm:$0xf]
      %v2789 = vld [vmem:[%s5 + $0x10] sm:$0xf]
      %v2790 = vld [vmem:[%s5 + $0x14] sm:$0xf]
      %v2791 = vld [vmem:[%s5 + $0x18] sm:$0xf]
      %v2792 = vld [vmem:[%s5 + $0x1c] sm:$0xf]
      %v2793 = vld [vmem:[%s5 + $0x20] sm:$0xf]
      %v2794 = vld [vmem:[%s5 + $0x24] sm:$0xf]
      %v2795 = vld [vmem:[%s5 + $0x28] sm:$0xf]
      %v2796 = vld [vmem:[%s5 + $0x2c] sm:$0xf]
      %v2797 = vld [vmem:[%s5 + $0x30] sm:$0xf]
      %v2798 = vld [vmem:[%s5 + $0x34] sm:$0xf]
      %v2799 = vld [vmem:[%s5 + $0x38] sm:$0xf]
      %v2800 = vld [vmem:[%s5 + $0x3c] sm:$0xf]
      %v2801 = vld [vmem:[%s6] sm:$0x1]
      %v2803 = vperm.slane %v2801, 0
      %v2821 = vunpack.c.l.b16 %v2785
      %v2822 = vunpack.c.l.b16 %v2786
      %v2823 = vunpack.c.l.b16 %v2787
      %v2824 = vunpack.c.l.b16 %v2788
      %v2825 = vunpack.c.l.b16 %v2789
      %v2826 = vunpack.c.l.b16 %v2790
      %v2827 = vunpack.c.l.b16 %v2791
      %v2828 = vunpack.c.l.b16 %v2792
      %v2829 = vunpack.c.l.b16 %v2793
      %v2830 = vunpack.c.l.b16 %v2794
      %v2831 = vunpack.c.l.b16 %v2795
      %v2832 = vunpack.c.l.b16 %v2796
      %v2833 = vunpack.c.l.b16 %v2797
      %v2834 = vunpack.c.l.b16 %v2798
      %v2835 = vunpack.c.l.b16 %v2799
      %v2836 = vunpack.c.l.b16 %v2800
      %v2837 = vpack.c.b16 %v2822, %v2821
      %v2838 = vpack.c.b16 %v2824, %v2823
      %v2839 = vpack.c.b16 %v2826, %v2825
      %v2840 = vpack.c.b16 %v2828, %v2827
      %v2841 = vpack.c.b16 %v2830, %v2829
      %v2842 = vpack.c.b16 %v2832, %v2831
      %v2843 = vpack.c.b16 %v2834, %v2833
      %v2844 = vpack.c.b16 %v2836, %v2835
      %2853 = vmatpush.bf16.msra.mxu0 %v2844
      %2854 = vmatpush.bf16.msra.mxu0 %v2843
      %2855 = vmatpush.bf16.msra.mxu0 %v2842
      %2856 = vmatpush.bf16.msra.mxu0 %v2841
      %2857 = vmatpush.bf16.msra.mxu0 %v2840
      %2858 = vmatpush.bf16.msra.mxu0 %v2839
      %2859 = vmatpush.bf16.msra.mxu0 %v2838
      %2860 = vmatpush.bf16.msra.mxu0 %v2837
      %2861 = vmatmul.bf16.gmra.mxu0 %v2775
      %v2862 = vpop.f32.mrf.mxu0
      %v2863 = vadd.f32 %v2803, %v2862
      %v2864 = vpop.f32.mrf.mxu0
      %v2865 = vadd.f32 %v2803, %v2864
      %2866 = vmatmul.bf16.gmra.mxu0 %v2776
      %v2867 = vpop.f32.mrf.mxu0
      %v2868 = vadd.f32 %v2803, %v2867
      %v2869 = vpop.f32.mrf.mxu0
      %v2870 = vadd.f32 %v2803, %v2869
      %2871 = vmatmul.bf16.gmra.mxu0 %v2777
      %v2872 = vpop.f32.mrf.mxu0
      %v2873 = vadd.f32 %v2803, %v2872
      %v2874 = vpop.f32.mrf.mxu0
      %v2875 = vadd.f32 %v2803, %v2874
      %2876 = vmatmul.bf16.gmra.mxu0 %v2778
      %v2877 = vpop.f32.mrf.mxu0
      %v2878 = vadd.f32 %v2803, %v2877
      %v2879 = vpop.f32.mrf.mxu0
      %v2880 = vadd.f32 %v2803, %v2879
      %2881 = vmatmul.bf16.gmra.mxu0 %v2779
      %v2882 = vpop.f32.mrf.mxu0
      %v2883 = vadd.f32 %v2803, %v2882
      %v2884 = vpop.f32.mrf.mxu0
      %v2885 = vadd.f32 %v2803, %v2884
      %2886 = vmatmul.bf16.gmra.mxu0 %v2780
      %v2887 = vpop.f32.mrf.mxu0
      %v2888 = vadd.f32 %v2803, %v2887
      %v2889 = vpop.f32.mrf.mxu0
      %v2890 = vadd.f32 %v2803, %v2889
      %2891 = vmatmul.bf16.gmra.mxu0 %v2781
      %v2892 = vpop.f32.mrf.mxu0
      %v2893 = vadd.f32 %v2803, %v2892
      %v2894 = vpop.f32.mrf.mxu0
      %v2895 = vadd.f32 %v2803, %v2894
      %2896 = vmatmul.bf16.gmra.mxu0 %v2782
      %v2897 = vpop.f32.mrf.mxu0
      %v2898 = vadd.f32 %v2803, %v2897
      %v2899 = vpop.f32.mrf.mxu0
      %v2900 = vadd.f32 %v2803, %v2899
      %2901 = vmatmul.bf16.gmra.mxu0 %v2783
      %v2902 = vpop.f32.mrf.mxu0
      %v2903 = vadd.f32 %v2803, %v2902
      %v2904 = vpop.f32.mrf.mxu0
      %v2905 = vadd.f32 %v2803, %v2904
      %2906 = vmatmul.bf16.gmra.mxu0 %v2784
      %v2907 = vpop.f32.mrf.mxu0
      %v2908 = vadd.f32 %v2803, %v2907
      %v2909 = vpop.f32.mrf.mxu0
      %v2910 = vadd.f32 %v2803, %v2909
      %2911 = vdwg.mxu0
      %v2912 = vmax.f32 %v2863, 0.0
      %v2913 = vmax.f32 %v2865, 0.0
      %v2914 = vmax.f32 %v2868, 0.0
      %v2915 = vmax.f32 %v2870, 0.0
      %v2916 = vmax.f32 %v2873, 0.0
      %v2917 = vmax.f32 %v2875, 0.0
      %v2918 = vmax.f32 %v2878, 0.0
      %v2919 = vmax.f32 %v2880, 0.0
      %v2920 = vmax.f32 %v2883, 0.0
      %v2921 = vmax.f32 %v2885, 0.0
      %v2922 = vmax.f32 %v2888, 0.0
      %v2923 = vmax.f32 %v2890, 0.0
      %v2924 = vmax.f32 %v2893, 0.0
      %v2925 = vmax.f32 %v2895, 0.0
      %v2926 = vmax.f32 %v2898, 0.0
      %v2927 = vmax.f32 %v2900, 0.0
      %v2928 = vmax.f32 %v2903, 0.0
      %v2929 = vmax.f32 %v2905, 0.0
      %v2930 = vmax.f32 %v2908, 0.0
      %v2931 = vmax.f32 %v2910, 0.0
      %v2932 = vpack.c.bf16 %v2913, %v2912
      %v2933 = vpack.c.bf16 %v2915, %v2914
      %v2934 = vpack.c.bf16 %v2917, %v2916
      %v2935 = vpack.c.bf16 %v2919, %v2918
      %v2936 = vpack.c.bf16 %v2921, %v2920
      %v2937 = vpack.c.bf16 %v2923, %v2922
      %v2938 = vpack.c.bf16 %v2925, %v2924
      %v2939 = vpack.c.bf16 %v2927, %v2926
      %v2940 = vpack.c.bf16 %v2929, %v2928
      %v2941 = vpack.c.bf16 %v2931, %v2930
      %v2942 = vld [vmem:[%s7] sm:$0xf]
      %v2943 = vld [vmem:[%s7 + $0x4] sm:$0xf]
      %v2944 = vld [vmem:[%s7 + $0x8] sm:$0xf]
      %v2945 = vld [vmem:[%s7 + $0xc] sm:$0xf]
      %v2946 = vld [vmem:[%s7 + $0x10] sm:$0xf]
      %v2947 = vld [vmem:[%s7 + $0x14] sm:$0xf]
      %v2948 = vld [vmem:[%s7 + $0x18] sm:$0xf]
      %v2949 = vld [vmem:[%s7 + $0x1c] sm:$0xf]
      %v2950 = vld [vmem:[%s7 + $0x20] sm:$0xf]
      %v2951 = vld [vmem:[%s7 + $0x24] sm:$0xf]
      %v2952 = vld [vmem:[%s7 + $0x28] sm:$0xf]
      %v2953 = vld [vmem:[%s7 + $0x2c] sm:$0xf]
      %v2954 = vld [vmem:[%s7 + $0x30] sm:$0xf]
      %v2955 = vld [vmem:[%s7 + $0x34] sm:$0xf]
      %v2956 = vld [vmem:[%s7 + $0x38] sm:$0xf]
      %v2957 = vld [vmem:[%s7 + $0x3c] sm:$0xf]
      %v2974 = vunpack.c.l.b16 %v2942
      %v2975 = vunpack.c.l.b16 %v2943
      %v2976 = vunpack.c.l.b16 %v2944
      %v2977 = vunpack.c.l.b16 %v2945
      %v2978 = vunpack.c.l.b16 %v2946
      %v2979 = vunpack.c.l.b16 %v2947
      %v2980 = vunpack.c.l.b16 %v2948
      %v2981 = vunpack.c.l.b16 %v2949
      %v2982 = vunpack.c.l.b16 %v2950
      %v2983 = vunpack.c.l.b16 %v2951
      %v2984 = vunpack.c.l.b16 %v2952
      %v2985 = vunpack.c.l.b16 %v2953
      %v2986 = vunpack.c.l.b16 %v2954
      %v2987 = vunpack.c.l.b16 %v2955
      %v2988 = vunpack.c.l.b16 %v2956
      %v2989 = vunpack.c.l.b16 %v2957
      %v2990 = vpack.c.b16 %v2975, %v2974
      %v2991 = vpack.c.b16 %v2977, %v2976
      %v2992 = vpack.c.b16 %v2979, %v2978
      %v2993 = vpack.c.b16 %v2981, %v2980
      %v2994 = vpack.c.b16 %v2983, %v2982
      %v2995 = vpack.c.b16 %v2985, %v2984
      %v2996 = vpack.c.b16 %v2987, %v2986
      %v2997 = vpack.c.b16 %v2989, %v2988
      %3006 = vmatpush.bf16.msra.mxu0 %v2997
      %3007 = vmatpush.bf16.msra.mxu0 %v2996
      %3008 = vmatpush.bf16.msra.mxu0 %v2995
      %3009 = vmatpush.bf16.msra.mxu0 %v2994
      %3010 = vmatpush.bf16.msra.mxu0 %v2993
      %3011 = vmatpush.bf16.msra.mxu0 %v2992
      %3012 = vmatpush.bf16.msra.mxu0 %v2991
      %3013 = vmatpush.bf16.msra.mxu0 %v2990
      %3014 = vmatmul.bf16.gmra.mxu0 %v2932
      %v3015 = vpop.f32.mrf.mxu0
      %v3016 = vadd.f32 0.0, %v3015
      %v3017 = vpop.f32.mrf.mxu0
      %v3018 = vadd.f32 0.0, %v3017
      %3019 = vmatmul.bf16.gmra.mxu0 %v2933
      %v3020 = vpop.f32.mrf.mxu0
      %v3021 = vadd.f32 0.0, %v3020
      %v3022 = vpop.f32.mrf.mxu0
      %v3023 = vadd.f32 0.0, %v3022
      %3024 = vmatmul.bf16.gmra.mxu0 %v2934
      %v3025 = vpop.f32.mrf.mxu0
      %v3026 = vadd.f32 0.0, %v3025
      %v3027 = vpop.f32.mrf.mxu0
      %v3028 = vadd.f32 0.0, %v3027
      %3029 = vmatmul.bf16.gmra.mxu0 %v2935
      %v3030 = vpop.f32.mrf.mxu0
      %v3031 = vadd.f32 0.0, %v3030
      %v3032 = vpop.f32.mrf.mxu0
      %v3033 = vadd.f32 0.0, %v3032
      %3034 = vmatmul.bf16.gmra.mxu0 %v2936
      %v3035 = vpop.f32.mrf.mxu0
      %v3036 = vadd.f32 0.0, %v3035
      %v3037 = vpop.f32.mrf.mxu0
      %v3038 = vadd.f32 0.0, %v3037
      %3039 = vmatmul.bf16.gmra.mxu0 %v2937
      %v3040 = vpop.f32.mrf.mxu0
      %v3041 = vadd.f32 0.0, %v3040
      %v3042 = vpop.f32.mrf.mxu0
      %v3043 = vadd.f32 0.0, %v3042
      %3044 = vmatmul.bf16.gmra.mxu0 %v2938
      %v3045 = vpop.f32.mrf.mxu0
      %v3046 = vadd.f32 0.0, %v3045
      %v3047 = vpop.f32.mrf.mxu0
      %v3048 = vadd.f32 0.0, %v3047
      %3049 = vmatmul.bf16.gmra.mxu0 %v2939
      %v3050 = vpop.f32.mrf.mxu0
      %v3051 = vadd.f32 0.0, %v3050
      %v3052 = vpop.f32.mrf.mxu0
      %v3053 = vadd.f32 0.0, %v3052
      %3054 = vmatmul.bf16.gmra.mxu0 %v2940
      %v3055 = vpop.f32.mrf.mxu0
      %v3056 = vadd.f32 0.0, %v3055
      %v3057 = vpop.f32.mrf.mxu0
      %v3058 = vadd.f32 0.0, %v3057
      %3059 = vmatmul.bf16.gmra.mxu0 %v2941
      %v3060 = vpop.f32.mrf.mxu0
      %v3061 = vadd.f32 0.0, %v3060
      %v3062 = vpop.f32.mrf.mxu0
      %v3063 = vadd.f32 0.0, %v3062
      %3064 = vdwg.mxu0
      %v3065 = vadd.f32 %v2711, %v3016
      %v3066 = vadd.f32 %v2712, %v3018
      %v3067 = vadd.f32 %v2713, %v3021
      %v3068 = vadd.f32 %v2714, %v3023
      %v3069 = vadd.f32 %v2715, %v3026
      %v3070 = vadd.f32 %v2716, %v3028
      %v3071 = vadd.f32 %v2717, %v3031
      %v3072 = vadd.f32 %v2718, %v3033
      %v3073 = vadd.f32 %v2719, %v3036
      %v3074 = vadd.f32 %v2720, %v3038
      %v3075 = vadd.f32 %v2721, %v3041
      %v3076 = vadd.f32 %v2722, %v3043
      %v3077 = vadd.f32 %v2723, %v3046
      %v3078 = vadd.f32 %v2724, %v3048
      %v3079 = vadd.f32 %v2725, %v3051
      %v3080 = vadd.f32 %v2726, %v3053
      %v3081 = vadd.f32 %v2727, %v3056
      %v3082 = vadd.f32 %v2728, %v3058
      %v3083 = vadd.f32 %v2729, %v3061
      %v3084 = vadd.f32 %v2730, %v3063
      %v3085 = vunpack.c.l.bf16 %v636
      %v3086 = vunpack.c.h.bf16 %v636
      %v3087 = vunpack.c.l.bf16 %v637
      %v3088 = vunpack.c.h.bf16 %v637
      %v3089 = vunpack.c.l.bf16 %v638
      %v3090 = vunpack.c.h.bf16 %v638
      %v3091 = vunpack.c.l.bf16 %v639
      %v3092 = vunpack.c.h.bf16 %v639
      %v3093 = vunpack.c.l.bf16 %v640
      %v3094 = vunpack.c.h.bf16 %v640
      %v3095 = vunpack.c.l.bf16 %v641
      %v3096 = vunpack.c.h.bf16 %v641
      %v3097 = vunpack.c.l.bf16 %v642
      %v3098 = vunpack.c.h.bf16 %v642
      %v3099 = vunpack.c.l.bf16 %v643
      %v3100 = vunpack.c.h.bf16 %v643
      %v3101 = vunpack.c.l.bf16 %v644
      %v3102 = vunpack.c.h.bf16 %v644
      %v3103 = vunpack.c.l.bf16 %v645
      %v3104 = vunpack.c.h.bf16 %v645
      %v3105 = vmul.f32 %v3085, %v1386
      %v3106 = vmul.f32 %v3085, %v1445
      %v3107 = vmul.f32 %v3085, %v1504
      %v3108 = vmul.f32 %v3085, %v1563
      %v3109 = vmul.f32 %v3085, %v1622
      %v3110 = vmul.f32 %v3085, %v1681
      %v3111 = vmul.f32 %v3085, %v1740
      %v3112 = vmul.f32 %v3085, %v1799
      %v3113 = vmul.f32 %v3086, %v1388
      %v3114 = vmul.f32 %v3086, %v1447
      %v3115 = vmul.f32 %v3086, %v1506
      %v3116 = vmul.f32 %v3086, %v1565
      %v3117 = vmul.f32 %v3086, %v1624
      %v3118 = vmul.f32 %v3086, %v1683
      %v3119 = vmul.f32 %v3086, %v1742
      %v3120 = vmul.f32 %v3086, %v1801
      %v3121 = vmul.f32 %v3087, %v1391
      %v3122 = vmul.f32 %v3087, %v1450
      %v3123 = vmul.f32 %v3087, %v1509
      %v3124 = vmul.f32 %v3087, %v1568
      %v3125 = vmul.f32 %v3087, %v1627
      %v3126 = vmul.f32 %v3087, %v1686
      %v3127 = vmul.f32 %v3087, %v1745
      %v3128 = vmul.f32 %v3087, %v1804
      %v3129 = vmul.f32 %v3088, %v1393
      %v3130 = vmul.f32 %v3088, %v1452
      %v3131 = vmul.f32 %v3088, %v1511
      %v3132 = vmul.f32 %v3088, %v1570
      %v3133 = vmul.f32 %v3088, %v1629
      %v3134 = vmul.f32 %v3088, %v1688
      %v3135 = vmul.f32 %v3088, %v1747
      %v3136 = vmul.f32 %v3088, %v1806
      %v3137 = vmul.f32 %v3089, %v1396
      %v3138 = vmul.f32 %v3089, %v1455
      %v3139 = vmul.f32 %v3089, %v1514
      %v3140 = vmul.f32 %v3089, %v1573
      %v3141 = vmul.f32 %v3089, %v1632
      %v3142 = vmul.f32 %v3089, %v1691
      %v3143 = vmul.f32 %v3089, %v1750
      %v3144 = vmul.f32 %v3089, %v1809
      %v3145 = vmul.f32 %v3090, %v1398
      %v3146 = vmul.f32 %v3090, %v1457
      %v3147 = vmul.f32 %v3090, %v1516
      %v3148 = vmul.f32 %v3090, %v1575
      %v3149 = vmul.f32 %v3090, %v1634
      %v3150 = vmul.f32 %v3090, %v1693
      %v3151 = vmul.f32 %v3090, %v1752
      %v3152 = vmul.f32 %v3090, %v1811
      %v3153 = vmul.f32 %v3091, %v1401
      %v3154 = vmul.f32 %v3091, %v1460
      %v3155 = vmul.f32 %v3091, %v1519
      %v3156 = vmul.f32 %v3091, %v1578
      %v3157 = vmul.f32 %v3091, %v1637
      %v3158 = vmul.f32 %v3091, %v1696
      %v3159 = vmul.f32 %v3091, %v1755
      %v3160 = vmul.f32 %v3091, %v1814
      %v3161 = vmul.f32 %v3092, %v1403
      %v3162 = vmul.f32 %v3092, %v1462
      %v3163 = vmul.f32 %v3092, %v1521
      %v3164 = vmul.f32 %v3092, %v1580
      %v3165 = vmul.f32 %v3092, %v1639
      %v3166 = vmul.f32 %v3092, %v1698
      %v3167 = vmul.f32 %v3092, %v1757
      %v3168 = vmul.f32 %v3092, %v1816
      %v3169 = vmul.f32 %v3093, %v1406
      %v3170 = vmul.f32 %v3093, %v1465
      %v3171 = vmul.f32 %v3093, %v1524
      %v3172 = vmul.f32 %v3093, %v1583
      %v3173 = vmul.f32 %v3093, %v1642
      %v3174 = vmul.f32 %v3093, %v1701
      %v3175 = vmul.f32 %v3093, %v1760
      %v3176 = vmul.f32 %v3093, %v1819
      %v3177 = vmul.f32 %v3094, %v1408
      %v3178 = vmul.f32 %v3094, %v1467
      %v3179 = vmul.f32 %v3094, %v1526
      %v3180 = vmul.f32 %v3094, %v1585
      %v3181 = vmul.f32 %v3094, %v1644
      %v3182 = vmul.f32 %v3094, %v1703
      %v3183 = vmul.f32 %v3094, %v1762
      %v3184 = vmul.f32 %v3094, %v1821
      %v3185 = vmul.f32 %v3095, %v1411
      %v3186 = vmul.f32 %v3095, %v1470
      %v3187 = vmul.f32 %v3095, %v1529
      %v3188 = vmul.f32 %v3095, %v1588
      %v3189 = vmul.f32 %v3095, %v1647
      %v3190 = vmul.f32 %v3095, %v1706
      %v3191 = vmul.f32 %v3095, %v1765
      %v3192 = vmul.f32 %v3095, %v1824
      %v3193 = vmul.f32 %v3096, %v1413
      %v3194 = vmul.f32 %v3096, %v1472
      %v3195 = vmul.f32 %v3096, %v1531
      %v3196 = vmul.f32 %v3096, %v1590
      %v3197 = vmul.f32 %v3096, %v1649
      %v3198 = vmul.f32 %v3096, %v1708
      %v3199 = vmul.f32 %v3096, %v1767
      %v3200 = vmul.f32 %v3096, %v1826
      %v3201 = vmul.f32 %v3097, %v1416
      %v3202 = vmul.f32 %v3097, %v1475
      %v3203 = vmul.f32 %v3097, %v1534
      %v3204 = vmul.f32 %v3097, %v1593
      %v3205 = vmul.f32 %v3097, %v1652
      %v3206 = vmul.f32 %v3097, %v1711
      %v3207 = vmul.f32 %v3097, %v1770
      %v3208 = vmul.f32 %v3097, %v1829
      %v3209 = vmul.f32 %v3098, %v1418
      %v3210 = vmul.f32 %v3098, %v1477
      %v3211 = vmul.f32 %v3098, %v1536
      %v3212 = vmul.f32 %v3098, %v1595
      %v3213 = vmul.f32 %v3098, %v1654
      %v3214 = vmul.f32 %v3098, %v1713
      %v3215 = vmul.f32 %v3098, %v1772
      %v3216 = vmul.f32 %v3098, %v1831
      %v3217 = vmul.f32 %v3099, %v1421
      %v3218 = vmul.f32 %v3099, %v1480
      %v3219 = vmul.f32 %v3099, %v1539
      %v3220 = vmul.f32 %v3099, %v1598
      %v3221 = vmul.f32 %v3099, %v1657
      %v3222 = vmul.f32 %v3099, %v1716
      %v3223 = vmul.f32 %v3099, %v1775
      %v3224 = vmul.f32 %v3099, %v1834
      %v3225 = vmul.f32 %v3100, %v1423
      %v3226 = vmul.f32 %v3100, %v1482
      %v3227 = vmul.f32 %v3100, %v1541
      %v3228 = vmul.f32 %v3100, %v1600
      %v3229 = vmul.f32 %v3100, %v1659
      %v3230 = vmul.f32 %v3100, %v1718
      %v3231 = vmul.f32 %v3100, %v1777
      %v3232 = vmul.f32 %v3100, %v1836
      %v3233 = vmul.f32 %v3101, %v1426
      %v3234 = vmul.f32 %v3101, %v1485
      %v3235 = vmul.f32 %v3101, %v1544
      %v3236 = vmul.f32 %v3101, %v1603
      %v3237 = vmul.f32 %v3101, %v1662
      %v3238 = vmul.f32 %v3101, %v1721
      %v3239 = vmul.f32 %v3101, %v1780
      %v3240 = vmul.f32 %v3101, %v1839
      %v3241 = vmul.f32 %v3102, %v1428
      %v3242 = vmul.f32 %v3102, %v1487
      %v3243 = vmul.f32 %v3102, %v1546
      %v3244 = vmul.f32 %v3102, %v1605
      %v3245 = vmul.f32 %v3102, %v1664
      %v3246 = vmul.f32 %v3102, %v1723
      %v3247 = vmul.f32 %v3102, %v1782
      %v3248 = vmul.f32 %v3102, %v1841
      %v3249 = vmul.f32 %v3103, %v1431
      %v3250 = vmul.f32 %v3103, %v1490
      %v3251 = vmul.f32 %v3103, %v1549
      %v3252 = vmul.f32 %v3103, %v1608
      %v3253 = vmul.f32 %v3103, %v1667
      %v3254 = vmul.f32 %v3103, %v1726
      %v3255 = vmul.f32 %v3103, %v1785
      %v3256 = vmul.f32 %v3103, %v1844
      %v3257 = vmul.f32 %v3104, %v1433
      %v3258 = vmul.f32 %v3104, %v1492
      %v3259 = vmul.f32 %v3104, %v1551
      %v3260 = vmul.f32 %v3104, %v1610
      %v3261 = vmul.f32 %v3104, %v1669
      %v3262 = vmul.f32 %v3104, %v1728
      %v3263 = vmul.f32 %v3104, %v1787
      %v3264 = vmul.f32 %v3104, %v1846
      %v3265 = vpack.c.bf16 %v3113, %v3105
      %v3266 = vpack.c.bf16 %v3114, %v3106
      %v3267 = vpack.c.bf16 %v3115, %v3107
      %v3268 = vpack.c.bf16 %v3116, %v3108
      %v3269 = vpack.c.bf16 %v3117, %v3109
      %v3270 = vpack.c.bf16 %v3118, %v3110
      %v3271 = vpack.c.bf16 %v3119, %v3111
      %v3272 = vpack.c.bf16 %v3120, %v3112
      %v3273 = vpack.c.bf16 %v3129, %v3121
      %v3274 = vpack.c.bf16 %v3130, %v3122
      %v3275 = vpack.c.bf16 %v3131, %v3123
      %v3276 = vpack.c.bf16 %v3132, %v3124
      %v3277 = vpack.c.bf16 %v3133, %v3125
      %v3278 = vpack.c.bf16 %v3134, %v3126
      %v3279 = vpack.c.bf16 %v3135, %v3127
      %v3280 = vpack.c.bf16 %v3136, %v3128
      %v3281 = vpack.c.bf16 %v3145, %v3137
      %v3282 = vpack.c.bf16 %v3146, %v3138
      %v3283 = vpack.c.bf16 %v3147, %v3139
      %v3284 = vpack.c.bf16 %v3148, %v3140
      %v3285 = vpack.c.bf16 %v3149, %v3141
      %v3286 = vpack.c.bf16 %v3150, %v3142
      %v3287 = vpack.c.bf16 %v3151, %v3143
      %v3288 = vpack.c.bf16 %v3152, %v3144
      %v3289 = vpack.c.bf16 %v3161, %v3153
      %v3290 = vpack.c.bf16 %v3162, %v3154
      %v3291 = vpack.c.bf16 %v3163, %v3155
      %v3292 = vpack.c.bf16 %v3164, %v3156
      %v3293 = vpack.c.bf16 %v3165, %v3157
      %v3294 = vpack.c.bf16 %v3166, %v3158
      %v3295 = vpack.c.bf16 %v3167, %v3159
      %v3296 = vpack.c.bf16 %v3168, %v3160
      %v3297 = vpack.c.bf16 %v3177, %v3169
      %v3298 = vpack.c.bf16 %v3178, %v3170
      %v3299 = vpack.c.bf16 %v3179, %v3171
      %v3300 = vpack.c.bf16 %v3180, %v3172
      %v3301 = vpack.c.bf16 %v3181, %v3173
      %v3302 = vpack.c.bf16 %v3182, %v3174
      %v3303 = vpack.c.bf16 %v3183, %v3175
      %v3304 = vpack.c.bf16 %v3184, %v3176
      %v3305 = vpack.c.bf16 %v3193, %v3185
      %v3306 = vpack.c.bf16 %v3194, %v3186
      %v3307 = vpack.c.bf16 %v3195, %v3187
      %v3308 = vpack.c.bf16 %v3196, %v3188
      %v3309 = vpack.c.bf16 %v3197, %v3189
      %v3310 = vpack.c.bf16 %v3198, %v3190
      %v3311 = vpack.c.bf16 %v3199, %v3191
      %v3312 = vpack.c.bf16 %v3200, %v3192
      %v3313 = vpack.c.bf16 %v3209, %v3201
      %v3314 = vpack.c.bf16 %v3210, %v3202
      %v3315 = vpack.c.bf16 %v3211, %v3203
      %v3316 = vpack.c.bf16 %v3212, %v3204
      %v3317 = vpack.c.bf16 %v3213, %v3205
      %v3318 = vpack.c.bf16 %v3214, %v3206
      %v3319 = vpack.c.bf16 %v3215, %v3207
      %v3320 = vpack.c.bf16 %v3216, %v3208
      %v3321 = vpack.c.bf16 %v3225, %v3217
      %v3322 = vpack.c.bf16 %v3226, %v3218
      %v3323 = vpack.c.bf16 %v3227, %v3219
      %v3324 = vpack.c.bf16 %v3228, %v3220
      %v3325 = vpack.c.bf16 %v3229, %v3221
      %v3326 = vpack.c.bf16 %v3230, %v3222
      %v3327 = vpack.c.bf16 %v3231, %v3223
      %v3328 = vpack.c.bf16 %v3232, %v3224
      %v3329 = vpack.c.bf16 %v3241, %v3233
      %v3330 = vpack.c.bf16 %v3242, %v3234
      %v3331 = vpack.c.bf16 %v3243, %v3235
      %v3332 = vpack.c.bf16 %v3244, %v3236
      %v3333 = vpack.c.bf16 %v3245, %v3237
      %v3334 = vpack.c.bf16 %v3246, %v3238
      %v3335 = vpack.c.bf16 %v3247, %v3239
      %v3336 = vpack.c.bf16 %v3248, %v3240
      %v3337 = vpack.c.bf16 %v3257, %v3249
      %v3338 = vpack.c.bf16 %v3258, %v3250
      %v3339 = vpack.c.bf16 %v3259, %v3251
      %v3340 = vpack.c.bf16 %v3260, %v3252
      %v3341 = vpack.c.bf16 %v3261, %v3253
      %v3342 = vpack.c.bf16 %v3262, %v3254
      %v3343 = vpack.c.bf16 %v3263, %v3255
      %v3344 = vpack.c.bf16 %v3264, %v3256
      %v3345 = vld [vmem:[%s8] sm:$0xf]
      %v3346 = vld [vmem:[%s8 + $0x4] sm:$0xf]
      %v3347 = vld [vmem:[%s8 + $0x8] sm:$0xf]
      %v3348 = vld [vmem:[%s8 + $0xc] sm:$0xf]
      %v3349 = vld [vmem:[%s8 + $0x10] sm:$0xf]
      %v3350 = vld [vmem:[%s8 + $0x14] sm:$0xf]
      %v3351 = vld [vmem:[%s8 + $0x18] sm:$0xf]
      %v3352 = vld [vmem:[%s8 + $0x1c] sm:$0xf]
      %v3353 = vld [vmem:[%s8 + $0x20] sm:$0xf]
      %v3354 = vld [vmem:[%s8 + $0x24] sm:$0xf]
      %v3355 = vld [vmem:[%s8 + $0x28] sm:$0xf]
      %v3356 = vld [vmem:[%s8 + $0x2c] sm:$0xf]
      %v3357 = vld [vmem:[%s8 + $0x30] sm:$0xf]
      %v3358 = vld [vmem:[%s8 + $0x34] sm:$0xf]
      %v3359 = vld [vmem:[%s8 + $0x38] sm:$0xf]
      %v3360 = vld [vmem:[%s8 + $0x3c] sm:$0xf]
      %v3361 = vld [vmem:[%s8 + $0x40] sm:$0xf]
      %v3362 = vld [vmem:[%s8 + $0x44] sm:$0xf]
      %v3363 = vld [vmem:[%s8 + $0x48] sm:$0xf]
      %v3364 = vld [vmem:[%s8 + $0x4c] sm:$0xf]
      %v3365 = vld [vmem:[%s8 + $0x50] sm:$0xf]
      %v3366 = vld [vmem:[%s8 + $0x54] sm:$0xf]
      %v3367 = vld [vmem:[%s8 + $0x58] sm:$0xf]
      %v3368 = vld [vmem:[%s8 + $0x5c] sm:$0xf]
      %v3369 = vld [vmem:[%s8 + $0x60] sm:$0xf]
      %v3370 = vld [vmem:[%s8 + $0x64] sm:$0xf]
      %v3371 = vld [vmem:[%s8 + $0x68] sm:$0xf]
      %v3372 = vld [vmem:[%s8 + $0x6c] sm:$0xf]
      %v3373 = vld [vmem:[%s8 + $0x70] sm:$0xf]
      %v3374 = vld [vmem:[%s8 + $0x74] sm:$0xf]
      %v3375 = vld [vmem:[%s8 + $0x78] sm:$0xf]
      %v3376 = vld [vmem:[%s8 + $0x7c] sm:$0xf]
      %v3377 = vld [vmem:[%s8 + $0x80] sm:$0xf]
      %v3378 = vld [vmem:[%s8 + $0x84] sm:$0xf]
      %v3379 = vld [vmem:[%s8 + $0x88] sm:$0xf]
      %v3380 = vld [vmem:[%s8 + $0x8c] sm:$0xf]
      %v3381 = vld [vmem:[%s8 + $0x90] sm:$0xf]
      %v3382 = vld [vmem:[%s8 + $0x94] sm:$0xf]
      %v3383 = vld [vmem:[%s8 + $0x98] sm:$0xf]
      %v3384 = vld [vmem:[%s8 + $0x9c] sm:$0xf]
      %v3385 = vld [vmem:[%s8 + $0xa0] sm:$0xf]
      %v3386 = vld [vmem:[%s8 + $0xa4] sm:$0xf]
      %v3387 = vld [vmem:[%s8 + $0xa8] sm:$0xf]
      %v3388 = vld [vmem:[%s8 + $0xac] sm:$0xf]
      %v3389 = vld [vmem:[%s8 + $0xb0] sm:$0xf]
      %v3390 = vld [vmem:[%s8 + $0xb4] sm:$0xf]
      %v3391 = vld [vmem:[%s8 + $0xb8] sm:$0xf]
      %v3392 = vld [vmem:[%s8 + $0xbc] sm:$0xf]
      %v3393 = vld [vmem:[%s8 + $0xc0] sm:$0xf]
      %v3394 = vld [vmem:[%s8 + $0xc4] sm:$0xf]
      %v3395 = vld [vmem:[%s8 + $0xc8] sm:$0xf]
      %v3396 = vld [vmem:[%s8 + $0xcc] sm:$0xf]
      %v3397 = vld [vmem:[%s8 + $0xd0] sm:$0xf]
      %v3398 = vld [vmem:[%s8 + $0xd4] sm:$0xf]
      %v3399 = vld [vmem:[%s8 + $0xd8] sm:$0xf]
      %v3400 = vld [vmem:[%s8 + $0xdc] sm:$0xf]
      %v3401 = vld [vmem:[%s8 + $0xe0] sm:$0xf]
      %v3402 = vld [vmem:[%s8 + $0xe4] sm:$0xf]
      %v3403 = vld [vmem:[%s8 + $0xe8] sm:$0xf]
      %v3404 = vld [vmem:[%s8 + $0xec] sm:$0xf]
      %v3405 = vld [vmem:[%s8 + $0xf0] sm:$0xf]
      %v3406 = vld [vmem:[%s8 + $0xf4] sm:$0xf]
      %v3407 = vld [vmem:[%s8 + $0xf8] sm:$0xf]
      %v3408 = vld [vmem:[%s8 + $0xfc] sm:$0xf]
      %v3409 = vld [vmem:[%s8 + $0x100] sm:$0xf]
      %v3410 = vld [vmem:[%s8 + $0x104] sm:$0xf]
      %v3411 = vld [vmem:[%s8 + $0x108] sm:$0xf]
      %v3412 = vld [vmem:[%s8 + $0x10c] sm:$0xf]
      %v3413 = vld [vmem:[%s8 + $0x110] sm:$0xf]
      %v3414 = vld [vmem:[%s8 + $0x114] sm:$0xf]
      %v3415 = vld [vmem:[%s8 + $0x118] sm:$0xf]
      %v3416 = vld [vmem:[%s8 + $0x11c] sm:$0xf]
      %v3417 = vld [vmem:[%s8 + $0x120] sm:$0xf]
      %v3418 = vld [vmem:[%s8 + $0x124] sm:$0xf]
      %v3419 = vld [vmem:[%s8 + $0x128] sm:$0xf]
      %v3420 = vld [vmem:[%s8 + $0x12c] sm:$0xf]
      %v3421 = vld [vmem:[%s8 + $0x130] sm:$0xf]
      %v3422 = vld [vmem:[%s8 + $0x134] sm:$0xf]
      %v3423 = vld [vmem:[%s8 + $0x138] sm:$0xf]
      %v3424 = vld [vmem:[%s8 + $0x13c] sm:$0xf]
      %v3425 = vld [vmem:[%s8 + $0x140] sm:$0xf]
      %v3426 = vld [vmem:[%s8 + $0x144] sm:$0xf]
      %v3427 = vld [vmem:[%s8 + $0x148] sm:$0xf]
      %v3428 = vld [vmem:[%s8 + $0x14c] sm:$0xf]
      %v3429 = vld [vmem:[%s8 + $0x150] sm:$0xf]
      %v3430 = vld [vmem:[%s8 + $0x154] sm:$0xf]
      %v3431 = vld [vmem:[%s8 + $0x158] sm:$0xf]
      %v3432 = vld [vmem:[%s8 + $0x15c] sm:$0xf]
      %v3433 = vld [vmem:[%s8 + $0x160] sm:$0xf]
      %v3434 = vld [vmem:[%s8 + $0x164] sm:$0xf]
      %v3435 = vld [vmem:[%s8 + $0x168] sm:$0xf]
      %v3436 = vld [vmem:[%s8 + $0x16c] sm:$0xf]
      %v3437 = vld [vmem:[%s8 + $0x170] sm:$0xf]
      %v3438 = vld [vmem:[%s8 + $0x174] sm:$0xf]
      %v3439 = vld [vmem:[%s8 + $0x178] sm:$0xf]
      %v3440 = vld [vmem:[%s8 + $0x17c] sm:$0xf]
      %v3441 = vld [vmem:[%s8 + $0x180] sm:$0xf]
      %v3442 = vld [vmem:[%s8 + $0x184] sm:$0xf]
      %v3443 = vld [vmem:[%s8 + $0x188] sm:$0xf]
      %v3444 = vld [vmem:[%s8 + $0x18c] sm:$0xf]
      %v3445 = vld [vmem:[%s8 + $0x190] sm:$0xf]
      %v3446 = vld [vmem:[%s8 + $0x194] sm:$0xf]
      %v3447 = vld [vmem:[%s8 + $0x198] sm:$0xf]
      %v3448 = vld [vmem:[%s8 + $0x19c] sm:$0xf]
      %v3449 = vld [vmem:[%s8 + $0x1a0] sm:$0xf]
      %v3450 = vld [vmem:[%s8 + $0x1a4] sm:$0xf]
      %v3451 = vld [vmem:[%s8 + $0x1a8] sm:$0xf]
      %v3452 = vld [vmem:[%s8 + $0x1ac] sm:$0xf]
      %v3453 = vld [vmem:[%s8 + $0x1b0] sm:$0xf]
      %v3454 = vld [vmem:[%s8 + $0x1b4] sm:$0xf]
      %v3455 = vld [vmem:[%s8 + $0x1b8] sm:$0xf]
      %v3456 = vld [vmem:[%s8 + $0x1bc] sm:$0xf]
      %v3457 = vld [vmem:[%s8 + $0x1c0] sm:$0xf]
      %v3458 = vld [vmem:[%s8 + $0x1c4] sm:$0xf]
      %v3459 = vld [vmem:[%s8 + $0x1c8] sm:$0xf]
      %v3460 = vld [vmem:[%s8 + $0x1cc] sm:$0xf]
      %v3461 = vld [vmem:[%s8 + $0x1d0] sm:$0xf]
      %v3462 = vld [vmem:[%s8 + $0x1d4] sm:$0xf]
      %v3463 = vld [vmem:[%s8 + $0x1d8] sm:$0xf]
      %v3464 = vld [vmem:[%s8 + $0x1dc] sm:$0xf]
      %v3465 = vld [vmem:[%s8 + $0x1e0] sm:$0xf]
      %v3466 = vld [vmem:[%s8 + $0x1e4] sm:$0xf]
      %v3467 = vld [vmem:[%s8 + $0x1e8] sm:$0xf]
      %v3468 = vld [vmem:[%s8 + $0x1ec] sm:$0xf]
      %v3469 = vld [vmem:[%s8 + $0x1f0] sm:$0xf]
      %v3470 = vld [vmem:[%s8 + $0x1f4] sm:$0xf]
      %v3471 = vld [vmem:[%s8 + $0x1f8] sm:$0xf]
      %v3472 = vld [vmem:[%s8 + $0x1fc] sm:$0xf]
      %v3601 = vunpack.c.l.b16 %v3345
      %v3602 = vunpack.c.l.b16 %v3346
      %v3603 = vunpack.c.l.b16 %v3347
      %v3604 = vunpack.c.l.b16 %v3348
      %v3605 = vunpack.c.l.b16 %v3349
      %v3606 = vunpack.c.l.b16 %v3350
      %v3607 = vunpack.c.l.b16 %v3351
      %v3608 = vunpack.c.l.b16 %v3352
      %v3609 = vunpack.c.l.b16 %v3353
      %v3610 = vunpack.c.l.b16 %v3354
      %v3611 = vunpack.c.l.b16 %v3355
      %v3612 = vunpack.c.l.b16 %v3356
      %v3613 = vunpack.c.l.b16 %v3357
      %v3614 = vunpack.c.l.b16 %v3358
      %v3615 = vunpack.c.l.b16 %v3359
      %v3616 = vunpack.c.l.b16 %v3360
      %v3617 = vunpack.c.l.b16 %v3361
      %v3618 = vunpack.c.l.b16 %v3362
      %v3619 = vunpack.c.l.b16 %v3363
      %v3620 = vunpack.c.l.b16 %v3364
      %v3621 = vunpack.c.l.b16 %v3365
      %v3622 = vunpack.c.l.b16 %v3366
      %v3623 = vunpack.c.l.b16 %v3367
      %v3624 = vunpack.c.l.b16 %v3368
      %v3625 = vunpack.c.l.b16 %v3369
      %v3626 = vunpack.c.l.b16 %v3370
      %v3627 = vunpack.c.l.b16 %v3371
      %v3628 = vunpack.c.l.b16 %v3372
      %v3629 = vunpack.c.l.b16 %v3373
      %v3630 = vunpack.c.l.b16 %v3374
      %v3631 = vunpack.c.l.b16 %v3375
      %v3632 = vunpack.c.l.b16 %v3376
      %v3633 = vunpack.c.l.b16 %v3377
      %v3634 = vunpack.c.l.b16 %v3378
      %v3635 = vunpack.c.l.b16 %v3379
      %v3636 = vunpack.c.l.b16 %v3380
      %v3637 = vunpack.c.l.b16 %v3381
      %v3638 = vunpack.c.l.b16 %v3382
      %v3639 = vunpack.c.l.b16 %v3383
      %v3640 = vunpack.c.l.b16 %v3384
      %v3641 = vunpack.c.l.b16 %v3385
      %v3642 = vunpack.c.l.b16 %v3386
      %v3643 = vunpack.c.l.b16 %v3387
      %v3644 = vunpack.c.l.b16 %v3388
      %v3645 = vunpack.c.l.b16 %v3389
      %v3646 = vunpack.c.l.b16 %v3390
      %v3647 = vunpack.c.l.b16 %v3391
      %v3648 = vunpack.c.l.b16 %v3392
      %v3649 = vunpack.c.l.b16 %v3393
      %v3650 = vunpack.c.l.b16 %v3394
      %v3651 = vunpack.c.l.b16 %v3395
      %v3652 = vunpack.c.l.b16 %v3396
      %v3653 = vunpack.c.l.b16 %v3397
      %v3654 = vunpack.c.l.b16 %v3398
      %v3655 = vunpack.c.l.b16 %v3399
      %v3656 = vunpack.c.l.b16 %v3400
      %v3657 = vunpack.c.l.b16 %v3401
      %v3658 = vunpack.c.l.b16 %v3402
      %v3659 = vunpack.c.l.b16 %v3403
      %v3660 = vunpack.c.l.b16 %v3404
      %v3661 = vunpack.c.l.b16 %v3405
      %v3662 = vunpack.c.l.b16 %v3406
      %v3663 = vunpack.c.l.b16 %v3407
      %v3664 = vunpack.c.l.b16 %v3408
      %v3665 = vunpack.c.l.b16 %v3409
      %v3666 = vunpack.c.l.b16 %v3410
      %v3667 = vunpack.c.l.b16 %v3411
      %v3668 = vunpack.c.l.b16 %v3412
      %v3669 = vunpack.c.l.b16 %v3413
      %v3670 = vunpack.c.l.b16 %v3414
      %v3671 = vunpack.c.l.b16 %v3415
      %v3672 = vunpack.c.l.b16 %v3416
      %v3673 = vunpack.c.l.b16 %v3417
      %v3674 = vunpack.c.l.b16 %v3418
      %v3675 = vunpack.c.l.b16 %v3419
      %v3676 = vunpack.c.l.b16 %v3420
      %v3677 = vunpack.c.l.b16 %v3421
      %v3678 = vunpack.c.l.b16 %v3422
      %v3679 = vunpack.c.l.b16 %v3423
      %v3680 = vunpack.c.l.b16 %v3424
      %v3681 = vunpack.c.l.b16 %v3425
      %v3682 = vunpack.c.l.b16 %v3426
      %v3683 = vunpack.c.l.b16 %v3427
      %v3684 = vunpack.c.l.b16 %v3428
      %v3685 = vunpack.c.l.b16 %v3429
      %v3686 = vunpack.c.l.b16 %v3430
      %v3687 = vunpack.c.l.b16 %v3431
      %v3688 = vunpack.c.l.b16 %v3432
      %v3689 = vunpack.c.l.b16 %v3433
      %v3690 = vunpack.c.l.b16 %v3434
      %v3691 = vunpack.c.l.b16 %v3435
      %v3692 = vunpack.c.l.b16 %v3436
      %v3693 = vunpack.c.l.b16 %v3437
      %v3694 = vunpack.c.l.b16 %v3438
      %v3695 = vunpack.c.l.b16 %v3439
      %v3696 = vunpack.c.l.b16 %v3440
      %v3697 = vunpack.c.l.b16 %v3441
      %v3698 = vunpack.c.l.b16 %v3442
      %v3699 = vunpack.c.l.b16 %v3443
      %v3700 = vunpack.c.l.b16 %v3444
      %v3701 = vunpack.c.l.b16 %v3445
      %v3702 = vunpack.c.l.b16 %v3446
      %v3703 = vunpack.c.l.b16 %v3447
      %v3704 = vunpack.c.l.b16 %v3448
      %v3705 = vunpack.c.l.b16 %v3449
      %v3706 = vunpack.c.l.b16 %v3450
      %v3707 = vunpack.c.l.b16 %v3451
      %v3708 = vunpack.c.l.b16 %v3452
      %v3709 = vunpack.c.l.b16 %v3453
      %v3710 = vunpack.c.l.b16 %v3454
      %v3711 = vunpack.c.l.b16 %v3455
      %v3712 = vunpack.c.l.b16 %v3456
      %v3713 = vunpack.c.l.b16 %v3457
      %v3714 = vunpack.c.l.b16 %v3458
      %v3715 = vunpack.c.l.b16 %v3459
      %v3716 = vunpack.c.l.b16 %v3460
      %v3717 = vunpack.c.l.b16 %v3461
      %v3718 = vunpack.c.l.b16 %v3462
      %v3719 = vunpack.c.l.b16 %v3463
      %v3720 = vunpack.c.l.b16 %v3464
      %v3721 = vunpack.c.l.b16 %v3465
      %v3722 = vunpack.c.l.b16 %v3466
      %v3723 = vunpack.c.l.b16 %v3467
      %v3724 = vunpack.c.l.b16 %v3468
      %v3725 = vunpack.c.l.b16 %v3469
      %v3726 = vunpack.c.l.b16 %v3470
      %v3727 = vunpack.c.l.b16 %v3471
      %v3728 = vunpack.c.l.b16 %v3472
      %v3729 = vpack.c.b16 %v3602, %v3601
      %v3730 = vpack.c.b16 %v3604, %v3603
      %v3731 = vpack.c.b16 %v3606, %v3605
      %v3732 = vpack.c.b16 %v3608, %v3607
      %v3733 = vpack.c.b16 %v3610, %v3609
      %v3734 = vpack.c.b16 %v3612, %v3611
      %v3735 = vpack.c.b16 %v3614, %v3613
      %v3736 = vpack.c.b16 %v3616, %v3615
      %v3737 = vpack.c.b16 %v3618, %v3617
      %v3738 = vpack.c.b16 %v3620, %v3619
      %v3739 = vpack.c.b16 %v3622, %v3621
      %v3740 = vpack.c.b16 %v3624, %v3623
      %v3741 = vpack.c.b16 %v3626, %v3625
      %v3742 = vpack.c.b16 %v3628, %v3627
      %v3743 = vpack.c.b16 %v3630, %v3629
      %v3744 = vpack.c.b16 %v3632, %v3631
      %v3745 = vpack.c.b16 %v3634, %v3633
      %v3746 = vpack.c.b16 %v3636, %v3635
      %v3747 = vpack.c.b16 %v3638, %v3637
      %v3748 = vpack.c.b16 %v3640, %v3639
      %v3749 = vpack.c.b16 %v3642, %v3641
      %v3750 = vpack.c.b16 %v3644, %v3643
      %v3751 = vpack.c.b16 %v3646, %v3645
      %v3752 = vpack.c.b16 %v3648, %v3647
      %v3753 = vpack.c.b16 %v3650, %v3649
      %v3754 = vpack.c.b16 %v3652, %v3651
      %v3755 = vpack.c.b16 %v3654, %v3653
      %v3756 = vpack.c.b16 %v3656, %v3655
      %v3757 = vpack.c.b16 %v3658, %v3657
      %v3758 = vpack.c.b16 %v3660, %v3659
      %v3759 = vpack.c.b16 %v3662, %v3661
      %v3760 = vpack.c.b16 %v3664, %v3663
      %v3761 = vpack.c.b16 %v3666, %v3665
      %v3762 = vpack.c.b16 %v3668, %v3667
      %v3763 = vpack.c.b16 %v3670, %v3669
      %v3764 = vpack.c.b16 %v3672, %v3671
      %v3765 = vpack.c.b16 %v3674, %v3673
      %v3766 = vpack.c.b16 %v3676, %v3675
      %v3767 = vpack.c.b16 %v3678, %v3677
      %v3768 = vpack.c.b16 %v3680, %v3679
      %v3769 = vpack.c.b16 %v3682, %v3681
      %v3770 = vpack.c.b16 %v3684, %v3683
      %v3771 = vpack.c.b16 %v3686, %v3685
      %v3772 = vpack.c.b16 %v3688, %v3687
      %v3773 = vpack.c.b16 %v3690, %v3689
      %v3774 = vpack.c.b16 %v3692, %v3691
      %v3775 = vpack.c.b16 %v3694, %v3693
      %v3776 = vpack.c.b16 %v3696, %v3695
      %v3777 = vpack.c.b16 %v3698, %v3697
      %v3778 = vpack.c.b16 %v3700, %v3699
      %v3779 = vpack.c.b16 %v3702, %v3701
      %v3780 = vpack.c.b16 %v3704, %v3703
      %v3781 = vpack.c.b16 %v3706, %v3705
      %v3782 = vpack.c.b16 %v3708, %v3707
      %v3783 = vpack.c.b16 %v3710, %v3709
      %v3784 = vpack.c.b16 %v3712, %v3711
      %v3785 = vpack.c.b16 %v3714, %v3713
      %v3786 = vpack.c.b16 %v3716, %v3715
      %v3787 = vpack.c.b16 %v3718, %v3717
      %v3788 = vpack.c.b16 %v3720, %v3719
      %v3789 = vpack.c.b16 %v3722, %v3721
      %v3790 = vpack.c.b16 %v3724, %v3723
      %v3791 = vpack.c.b16 %v3726, %v3725
      %v3792 = vpack.c.b16 %v3728, %v3727
      %3857 = vmatpush.bf16.msra.mxu0 %v3736
      %3858 = vmatpush.bf16.msra.mxu0 %v3735
      %3859 = vmatpush.bf16.msra.mxu0 %v3734
      %3860 = vmatpush.bf16.msra.mxu0 %v3733
      %3861 = vmatpush.bf16.msra.mxu0 %v3732
      %3862 = vmatpush.bf16.msra.mxu0 %v3731
      %3863 = vmatpush.bf16.msra.mxu0 %v3730
      %3864 = vmatpush.bf16.msra.mxu0 %v3729
      %3865 = vmatmul.bf16.gmra.mxu0 %v3265
      %v3866 = vpop.f32.mrf.mxu0
      %v3867 = vadd.f32 0.0, %v3866
      %v3868 = vpop.f32.mrf.mxu0
      %v3869 = vadd.f32 0.0, %v3868
      %3870 = vmatmul.bf16.gmra.mxu0 %v3273
      %v3871 = vpop.f32.mrf.mxu0
      %v3872 = vadd.f32 0.0, %v3871
      %v3873 = vpop.f32.mrf.mxu0
      %v3874 = vadd.f32 0.0, %v3873
      %3875 = vmatmul.bf16.gmra.mxu0 %v3281
      %v3876 = vpop.f32.mrf.mxu0
      %v3877 = vadd.f32 0.0, %v3876
      %v3878 = vpop.f32.mrf.mxu0
      %v3879 = vadd.f32 0.0, %v3878
      %3880 = vmatmul.bf16.gmra.mxu0 %v3289
      %v3881 = vpop.f32.mrf.mxu0
      %v3882 = vadd.f32 0.0, %v3881
      %v3883 = vpop.f32.mrf.mxu0
      %v3884 = vadd.f32 0.0, %v3883
      %3885 = vmatmul.bf16.gmra.mxu0 %v3297
      %v3886 = vpop.f32.mrf.mxu0
      %v3887 = vadd.f32 0.0, %v3886
      %v3888 = vpop.f32.mrf.mxu0
      %v3889 = vadd.f32 0.0, %v3888
      %3890 = vmatmul.bf16.gmra.mxu0 %v3305
      %v3891 = vpop.f32.mrf.mxu0
      %v3892 = vadd.f32 0.0, %v3891
      %v3893 = vpop.f32.mrf.mxu0
      %v3894 = vadd.f32 0.0, %v3893
      %3895 = vmatmul.bf16.gmra.mxu0 %v3313
      %v3896 = vpop.f32.mrf.mxu0
      %v3897 = vadd.f32 0.0, %v3896
      %v3898 = vpop.f32.mrf.mxu0
      %v3899 = vadd.f32 0.0, %v3898
      %3900 = vmatmul.bf16.gmra.mxu0 %v3321
      %v3901 = vpop.f32.mrf.mxu0
      %v3902 = vadd.f32 0.0, %v3901
      %v3903 = vpop.f32.mrf.mxu0
      %v3904 = vadd.f32 0.0, %v3903
      %3905 = vmatmul.bf16.gmra.mxu0 %v3329
      %v3906 = vpop.f32.mrf.mxu0
      %v3907 = vadd.f32 0.0, %v3906
      %v3908 = vpop.f32.mrf.mxu0
      %v3909 = vadd.f32 0.0, %v3908
      %3910 = vmatmul.bf16.gmra.mxu0 %v3337
      %v3911 = vpop.f32.mrf.mxu0
      %v3912 = vadd.f32 0.0, %v3911
      %v3913 = vpop.f32.mrf.mxu0
      %v3914 = vadd.f32 0.0, %v3913
      %3915 = vdwg.mxu0
      %3916 = vmatpush.bf16.msra.mxu0 %v3744
      %3917 = vmatpush.bf16.msra.mxu0 %v3743
      %3918 = vmatpush.bf16.msra.mxu0 %v3742
      %3919 = vmatpush.bf16.msra.mxu0 %v3741
      %3920 = vmatpush.bf16.msra.mxu0 %v3740
      %3921 = vmatpush.bf16.msra.mxu0 %v3739
      %3922 = vmatpush.bf16.msra.mxu0 %v3738
      %3923 = vmatpush.bf16.msra.mxu0 %v3737
      %3924 = vmatmul.bf16.gmra.mxu0 %v3266
      %v3925 = vpop.f32.mrf.mxu0
      %v3926 = vadd.f32 %v3867, %v3925
      %v3927 = vpop.f32.mrf.mxu0
      %v3928 = vadd.f32 %v3869, %v3927
      %3929 = vmatmul.bf16.gmra.mxu0 %v3274
      %v3930 = vpop.f32.mrf.mxu0
      %v3931 = vadd.f32 %v3872, %v3930
      %v3932 = vpop.f32.mrf.mxu0
      %v3933 = vadd.f32 %v3874, %v3932
      %3934 = vmatmul.bf16.gmra.mxu0 %v3282
      %v3935 = vpop.f32.mrf.mxu0
      %v3936 = vadd.f32 %v3877, %v3935
      %v3937 = vpop.f32.mrf.mxu0
      %v3938 = vadd.f32 %v3879, %v3937
      %3939 = vmatmul.bf16.gmra.mxu0 %v3290
      %v3940 = vpop.f32.mrf.mxu0
      %v3941 = vadd.f32 %v3882, %v3940
      %v3942 = vpop.f32.mrf.mxu0
      %v3943 = vadd.f32 %v3884, %v3942
      %3944 = vmatmul.bf16.gmra.mxu0 %v3298
      %v3945 = vpop.f32.mrf.mxu0
      %v3946 = vadd.f32 %v3887, %v3945
      %v3947 = vpop.f32.mrf.mxu0
      %v3948 = vadd.f32 %v3889, %v3947
      %3949 = vmatmul.bf16.gmra.mxu0 %v3306
      %v3950 = vpop.f32.mrf.mxu0
      %v3951 = vadd.f32 %v3892, %v3950
      %v3952 = vpop.f32.mrf.mxu0
      %v3953 = vadd.f32 %v3894, %v3952
      %3954 = vmatmul.bf16.gmra.mxu0 %v3314
      %v3955 = vpop.f32.mrf.mxu0
      %v3956 = vadd.f32 %v3897, %v3955
      %v3957 = vpop.f32.mrf.mxu0
      %v3958 = vadd.f32 %v3899, %v3957
      %3959 = vmatmul.bf16.gmra.mxu0 %v3322
      %v3960 = vpop.f32.mrf.mxu0
      %v3961 = vadd.f32 %v3902, %v3960
      %v3962 = vpop.f32.mrf.mxu0
      %v3963 = vadd.f32 %v3904, %v3962
      %3964 = vmatmul.bf16.gmra.mxu0 %v3330
      %v3965 = vpop.f32.mrf.mxu0
      %v3966 = vadd.f32 %v3907, %v3965
      %v3967 = vpop.f32.mrf.mxu0
      %v3968 = vadd.f32 %v3909, %v3967
      %3969 = vmatmul.bf16.gmra.mxu0 %v3338
      %v3970 = vpop.f32.mrf.mxu0
      %v3971 = vadd.f32 %v3912, %v3970
      %v3972 = vpop.f32.mrf.mxu0
      %v3973 = vadd.f32 %v3914, %v3972
      %3974 = vdwg.mxu0
      %3975 = vmatpush.bf16.msra.mxu0 %v3752
      %3976 = vmatpush.bf16.msra.mxu0 %v3751
      %3977 = vmatpush.bf16.msra.mxu0 %v3750
      %3978 = vmatpush.bf16.msra.mxu0 %v3749
      %3979 = vmatpush.bf16.msra.mxu0 %v3748
      %3980 = vmatpush.bf16.msra.mxu0 %v3747
      %3981 = vmatpush.bf16.msra.mxu0 %v3746
      %3982 = vmatpush.bf16.msra.mxu0 %v3745
      %3983 = vmatmul.bf16.gmra.mxu0 %v3267
      %v3984 = vpop.f32.mrf.mxu0
      %v3985 = vadd.f32 %v3926, %v3984
      %v3986 = vpop.f32.mrf.mxu0
      %v3987 = vadd.f32 %v3928, %v3986
      %3988 = vmatmul.bf16.gmra.mxu0 %v3275
      %v3989 = vpop.f32.mrf.mxu0
      %v3990 = vadd.f32 %v3931, %v3989
      %v3991 = vpop.f32.mrf.mxu0
      %v3992 = vadd.f32 %v3933, %v3991
      %3993 = vmatmul.bf16.gmra.mxu0 %v3283
      %v3994 = vpop.f32.mrf.mxu0
      %v3995 = vadd.f32 %v3936, %v3994
      %v3996 = vpop.f32.mrf.mxu0
      %v3997 = vadd.f32 %v3938, %v3996
      %3998 = vmatmul.bf16.gmra.mxu0 %v3291
      %v3999 = vpop.f32.mrf.mxu0
      %v4000 = vadd.f32 %v3941, %v3999
      %v4001 = vpop.f32.mrf.mxu0
      %v4002 = vadd.f32 %v3943, %v4001
      %4003 = vmatmul.bf16.gmra.mxu0 %v3299
      %v4004 = vpop.f32.mrf.mxu0
      %v4005 = vadd.f32 %v3946, %v4004
      %v4006 = vpop.f32.mrf.mxu0
      %v4007 = vadd.f32 %v3948, %v4006
      %4008 = vmatmul.bf16.gmra.mxu0 %v3307
      %v4009 = vpop.f32.mrf.mxu0
      %v4010 = vadd.f32 %v3951, %v4009
      %v4011 = vpop.f32.mrf.mxu0
      %v4012 = vadd.f32 %v3953, %v4011
      %4013 = vmatmul.bf16.gmra.mxu0 %v3315
      %v4014 = vpop.f32.mrf.mxu0
      %v4015 = vadd.f32 %v3956, %v4014
      %v4016 = vpop.f32.mrf.mxu0
      %v4017 = vadd.f32 %v3958, %v4016
      %4018 = vmatmul.bf16.gmra.mxu0 %v3323
      %v4019 = vpop.f32.mrf.mxu0
      %v4020 = vadd.f32 %v3961, %v4019
      %v4021 = vpop.f32.mrf.mxu0
      %v4022 = vadd.f32 %v3963, %v4021
      %4023 = vmatmul.bf16.gmra.mxu0 %v3331
      %v4024 = vpop.f32.mrf.mxu0
      %v4025 = vadd.f32 %v3966, %v4024
      %v4026 = vpop.f32.mrf.mxu0
      %v4027 = vadd.f32 %v3968, %v4026
      %4028 = vmatmul.bf16.gmra.mxu0 %v3339
      %v4029 = vpop.f32.mrf.mxu0
      %v4030 = vadd.f32 %v3971, %v4029
      %v4031 = vpop.f32.mrf.mxu0
      %v4032 = vadd.f32 %v3973, %v4031
      %4033 = vdwg.mxu0
      %4034 = vmatpush.bf16.msra.mxu0 %v3760
      %4035 = vmatpush.bf16.msra.mxu0 %v3759
      %4036 = vmatpush.bf16.msra.mxu0 %v3758
      %4037 = vmatpush.bf16.msra.mxu0 %v3757
      %4038 = vmatpush.bf16.msra.mxu0 %v3756
      %4039 = vmatpush.bf16.msra.mxu0 %v3755
      %4040 = vmatpush.bf16.msra.mxu0 %v3754
      %4041 = vmatpush.bf16.msra.mxu0 %v3753
      %4042 = vmatmul.bf16.gmra.mxu0 %v3268
      %v4043 = vpop.f32.mrf.mxu0
      %v4044 = vadd.f32 %v3985, %v4043
      %v4045 = vpop.f32.mrf.mxu0
      %v4046 = vadd.f32 %v3987, %v4045
      %4047 = vmatmul.bf16.gmra.mxu0 %v3276
      %v4048 = vpop.f32.mrf.mxu0
      %v4049 = vadd.f32 %v3990, %v4048
      %v4050 = vpop.f32.mrf.mxu0
      %v4051 = vadd.f32 %v3992, %v4050
      %4052 = vmatmul.bf16.gmra.mxu0 %v3284
      %v4053 = vpop.f32.mrf.mxu0
      %v4054 = vadd.f32 %v3995, %v4053
      %v4055 = vpop.f32.mrf.mxu0
      %v4056 = vadd.f32 %v3997, %v4055
      %4057 = vmatmul.bf16.gmra.mxu0 %v3292
      %v4058 = vpop.f32.mrf.mxu0
      %v4059 = vadd.f32 %v4000, %v4058
      %v4060 = vpop.f32.mrf.mxu0
      %v4061 = vadd.f32 %v4002, %v4060
      %4062 = vmatmul.bf16.gmra.mxu0 %v3300
      %v4063 = vpop.f32.mrf.mxu0
      %v4064 = vadd.f32 %v4005, %v4063
      %v4065 = vpop.f32.mrf.mxu0
      %v4066 = vadd.f32 %v4007, %v4065
      %4067 = vmatmul.bf16.gmra.mxu0 %v3308
      %v4068 = vpop.f32.mrf.mxu0
      %v4069 = vadd.f32 %v4010, %v4068
      %v4070 = vpop.f32.mrf.mxu0
      %v4071 = vadd.f32 %v4012, %v4070
      %4072 = vmatmul.bf16.gmra.mxu0 %v3316
      %v4073 = vpop.f32.mrf.mxu0
      %v4074 = vadd.f32 %v4015, %v4073
      %v4075 = vpop.f32.mrf.mxu0
      %v4076 = vadd.f32 %v4017, %v4075
      %4077 = vmatmul.bf16.gmra.mxu0 %v3324
      %v4078 = vpop.f32.mrf.mxu0
      %v4079 = vadd.f32 %v4020, %v4078
      %v4080 = vpop.f32.mrf.mxu0
      %v4081 = vadd.f32 %v4022, %v4080
      %4082 = vmatmul.bf16.gmra.mxu0 %v3332
      %v4083 = vpop.f32.mrf.mxu0
      %v4084 = vadd.f32 %v4025, %v4083
      %v4085 = vpop.f32.mrf.mxu0
      %v4086 = vadd.f32 %v4027, %v4085
      %4087 = vmatmul.bf16.gmra.mxu0 %v3340
      %v4088 = vpop.f32.mrf.mxu0
      %v4089 = vadd.f32 %v4030, %v4088
      %v4090 = vpop.f32.mrf.mxu0
      %v4091 = vadd.f32 %v4032, %v4090
      %4092 = vdwg.mxu0
      %4093 = vmatpush.bf16.msra.mxu0 %v3768
      %4094 = vmatpush.bf16.msra.mxu0 %v3767
      %4095 = vmatpush.bf16.msra.mxu0 %v3766
      %4096 = vmatpush.bf16.msra.mxu0 %v3765
      %4097 = vmatpush.bf16.msra.mxu0 %v3764
      %4098 = vmatpush.bf16.msra.mxu0 %v3763
      %4099 = vmatpush.bf16.msra.mxu0 %v3762
      %4100 = vmatpush.bf16.msra.mxu0 %v3761
      %4101 = vmatmul.bf16.gmra.mxu0 %v3269
      %v4102 = vpop.f32.mrf.mxu0
      %v4103 = vadd.f32 %v4044, %v4102
      %v4104 = vpop.f32.mrf.mxu0
      %v4105 = vadd.f32 %v4046, %v4104
      %4106 = vmatmul.bf16.gmra.mxu0 %v3277
      %v4107 = vpop.f32.mrf.mxu0
      %v4108 = vadd.f32 %v4049, %v4107
      %v4109 = vpop.f32.mrf.mxu0
      %v4110 = vadd.f32 %v4051, %v4109
      %4111 = vmatmul.bf16.gmra.mxu0 %v3285
      %v4112 = vpop.f32.mrf.mxu0
      %v4113 = vadd.f32 %v4054, %v4112
      %v4114 = vpop.f32.mrf.mxu0
      %v4115 = vadd.f32 %v4056, %v4114
      %4116 = vmatmul.bf16.gmra.mxu0 %v3293
      %v4117 = vpop.f32.mrf.mxu0
      %v4118 = vadd.f32 %v4059, %v4117
      %v4119 = vpop.f32.mrf.mxu0
      %v4120 = vadd.f32 %v4061, %v4119
      %4121 = vmatmul.bf16.gmra.mxu0 %v3301
      %v4122 = vpop.f32.mrf.mxu0
      %v4123 = vadd.f32 %v4064, %v4122
      %v4124 = vpop.f32.mrf.mxu0
      %v4125 = vadd.f32 %v4066, %v4124
      %4126 = vmatmul.bf16.gmra.mxu0 %v3309
      %v4127 = vpop.f32.mrf.mxu0
      %v4128 = vadd.f32 %v4069, %v4127
      %v4129 = vpop.f32.mrf.mxu0
      %v4130 = vadd.f32 %v4071, %v4129
      %4131 = vmatmul.bf16.gmra.mxu0 %v3317
      %v4132 = vpop.f32.mrf.mxu0
      %v4133 = vadd.f32 %v4074, %v4132
      %v4134 = vpop.f32.mrf.mxu0
      %v4135 = vadd.f32 %v4076, %v4134
      %4136 = vmatmul.bf16.gmra.mxu0 %v3325
      %v4137 = vpop.f32.mrf.mxu0
      %v4138 = vadd.f32 %v4079, %v4137
      %v4139 = vpop.f32.mrf.mxu0
      %v4140 = vadd.f32 %v4081, %v4139
      %4141 = vmatmul.bf16.gmra.mxu0 %v3333
      %v4142 = vpop.f32.mrf.mxu0
      %v4143 = vadd.f32 %v4084, %v4142
      %v4144 = vpop.f32.mrf.mxu0
      %v4145 = vadd.f32 %v4086, %v4144
      %4146 = vmatmul.bf16.gmra.mxu0 %v3341
      %v4147 = vpop.f32.mrf.mxu0
      %v4148 = vadd.f32 %v4089, %v4147
      %v4149 = vpop.f32.mrf.mxu0
      %v4150 = vadd.f32 %v4091, %v4149
      %4151 = vdwg.mxu0
      %4152 = vmatpush.bf16.msra.mxu0 %v3776
      %4153 = vmatpush.bf16.msra.mxu0 %v3775
      %4154 = vmatpush.bf16.msra.mxu0 %v3774
      %4155 = vmatpush.bf16.msra.mxu0 %v3773
      %4156 = vmatpush.bf16.msra.mxu0 %v3772
      %4157 = vmatpush.bf16.msra.mxu0 %v3771
      %4158 = vmatpush.bf16.msra.mxu0 %v3770
      %4159 = vmatpush.bf16.msra.mxu0 %v3769
      %4160 = vmatmul.bf16.gmra.mxu0 %v3270
      %v4161 = vpop.f32.mrf.mxu0
      %v4162 = vadd.f32 %v4103, %v4161
      %v4163 = vpop.f32.mrf.mxu0
      %v4164 = vadd.f32 %v4105, %v4163
      %4165 = vmatmul.bf16.gmra.mxu0 %v3278
      %v4166 = vpop.f32.mrf.mxu0
      %v4167 = vadd.f32 %v4108, %v4166
      %v4168 = vpop.f32.mrf.mxu0
      %v4169 = vadd.f32 %v4110, %v4168
      %4170 = vmatmul.bf16.gmra.mxu0 %v3286
      %v4171 = vpop.f32.mrf.mxu0
      %v4172 = vadd.f32 %v4113, %v4171
      %v4173 = vpop.f32.mrf.mxu0
      %v4174 = vadd.f32 %v4115, %v4173
      %4175 = vmatmul.bf16.gmra.mxu0 %v3294
      %v4176 = vpop.f32.mrf.mxu0
      %v4177 = vadd.f32 %v4118, %v4176
      %v4178 = vpop.f32.mrf.mxu0
      %v4179 = vadd.f32 %v4120, %v4178
      %4180 = vmatmul.bf16.gmra.mxu0 %v3302
      %v4181 = vpop.f32.mrf.mxu0
      %v4182 = vadd.f32 %v4123, %v4181
      %v4183 = vpop.f32.mrf.mxu0
      %v4184 = vadd.f32 %v4125, %v4183
      %4185 = vmatmul.bf16.gmra.mxu0 %v3310
      %v4186 = vpop.f32.mrf.mxu0
      %v4187 = vadd.f32 %v4128, %v4186
      %v4188 = vpop.f32.mrf.mxu0
      %v4189 = vadd.f32 %v4130, %v4188
      %4190 = vmatmul.bf16.gmra.mxu0 %v3318
      %v4191 = vpop.f32.mrf.mxu0
      %v4192 = vadd.f32 %v4133, %v4191
      %v4193 = vpop.f32.mrf.mxu0
      %v4194 = vadd.f32 %v4135, %v4193
      %4195 = vmatmul.bf16.gmra.mxu0 %v3326
      %v4196 = vpop.f32.mrf.mxu0
      %v4197 = vadd.f32 %v4138, %v4196
      %v4198 = vpop.f32.mrf.mxu0
      %v4199 = vadd.f32 %v4140, %v4198
      %4200 = vmatmul.bf16.gmra.mxu0 %v3334
      %v4201 = vpop.f32.mrf.mxu0
      %v4202 = vadd.f32 %v4143, %v4201
      %v4203 = vpop.f32.mrf.mxu0
      %v4204 = vadd.f32 %v4145, %v4203
      %4205 = vmatmul.bf16.gmra.mxu0 %v3342
      %v4206 = vpop.f32.mrf.mxu0
      %v4207 = vadd.f32 %v4148, %v4206
      %v4208 = vpop.f32.mrf.mxu0
      %v4209 = vadd.f32 %v4150, %v4208
      %4210 = vdwg.mxu0
      %4211 = vmatpush.bf16.msra.mxu0 %v3784
      %4212 = vmatpush.bf16.msra.mxu0 %v3783
      %4213 = vmatpush.bf16.msra.mxu0 %v3782
      %4214 = vmatpush.bf16.msra.mxu0 %v3781
      %4215 = vmatpush.bf16.msra.mxu0 %v3780
      %4216 = vmatpush.bf16.msra.mxu0 %v3779
      %4217 = vmatpush.bf16.msra.mxu0 %v3778
      %4218 = vmatpush.bf16.msra.mxu0 %v3777
      %4219 = vmatmul.bf16.gmra.mxu0 %v3271
      %v4220 = vpop.f32.mrf.mxu0
      %v4221 = vadd.f32 %v4162, %v4220
      %v4222 = vpop.f32.mrf.mxu0
      %v4223 = vadd.f32 %v4164, %v4222
      %4224 = vmatmul.bf16.gmra.mxu0 %v3279
      %v4225 = vpop.f32.mrf.mxu0
      %v4226 = vadd.f32 %v4167, %v4225
      %v4227 = vpop.f32.mrf.mxu0
      %v4228 = vadd.f32 %v4169, %v4227
      %4229 = vmatmul.bf16.gmra.mxu0 %v3287
      %v4230 = vpop.f32.mrf.mxu0
      %v4231 = vadd.f32 %v4172, %v4230
      %v4232 = vpop.f32.mrf.mxu0
      %v4233 = vadd.f32 %v4174, %v4232
      %4234 = vmatmul.bf16.gmra.mxu0 %v3295
      %v4235 = vpop.f32.mrf.mxu0
      %v4236 = vadd.f32 %v4177, %v4235
      %v4237 = vpop.f32.mrf.mxu0
      %v4238 = vadd.f32 %v4179, %v4237
      %4239 = vmatmul.bf16.gmra.mxu0 %v3303
      %v4240 = vpop.f32.mrf.mxu0
      %v4241 = vadd.f32 %v4182, %v4240
      %v4242 = vpop.f32.mrf.mxu0
      %v4243 = vadd.f32 %v4184, %v4242
      %4244 = vmatmul.bf16.gmra.mxu0 %v3311
      %v4245 = vpop.f32.mrf.mxu0
      %v4246 = vadd.f32 %v4187, %v4245
      %v4247 = vpop.f32.mrf.mxu0
      %v4248 = vadd.f32 %v4189, %v4247
      %4249 = vmatmul.bf16.gmra.mxu0 %v3319
      %v4250 = vpop.f32.mrf.mxu0
      %v4251 = vadd.f32 %v4192, %v4250
      %v4252 = vpop.f32.mrf.mxu0
      %v4253 = vadd.f32 %v4194, %v4252
      %4254 = vmatmul.bf16.gmra.mxu0 %v3327
      %v4255 = vpop.f32.mrf.mxu0
      %v4256 = vadd.f32 %v4197, %v4255
      %v4257 = vpop.f32.mrf.mxu0
      %v4258 = vadd.f32 %v4199, %v4257
      %4259 = vmatmul.bf16.gmra.mxu0 %v3335
      %v4260 = vpop.f32.mrf.mxu0
      %v4261 = vadd.f32 %v4202, %v4260
      %v4262 = vpop.f32.mrf.mxu0
      %v4263 = vadd.f32 %v4204, %v4262
      %4264 = vmatmul.bf16.gmra.mxu0 %v3343
      %v4265 = vpop.f32.mrf.mxu0
      %v4266 = vadd.f32 %v4207, %v4265
      %v4267 = vpop.f32.mrf.mxu0
      %v4268 = vadd.f32 %v4209, %v4267
      %4269 = vdwg.mxu0
      %4270 = vmatpush.bf16.msra.mxu0 %v3792
      %4271 = vmatpush.bf16.msra.mxu0 %v3791
      %4272 = vmatpush.bf16.msra.mxu0 %v3790
      %4273 = vmatpush.bf16.msra.mxu0 %v3789
      %4274 = vmatpush.bf16.msra.mxu0 %v3788
      %4275 = vmatpush.bf16.msra.mxu0 %v3787
      %4276 = vmatpush.bf16.msra.mxu0 %v3786
      %4277 = vmatpush.bf16.msra.mxu0 %v3785
      %4278 = vmatmul.bf16.gmra.mxu0 %v3272
      %v4279 = vpop.f32.mrf.mxu0
      %v4280 = vadd.f32 %v4221, %v4279
      %v4281 = vpop.f32.mrf.mxu0
      %v4282 = vadd.f32 %v4223, %v4281
      %4283 = vmatmul.bf16.gmra.mxu0 %v3280
      %v4284 = vpop.f32.mrf.mxu0
      %v4285 = vadd.f32 %v4226, %v4284
      %v4286 = vpop.f32.mrf.mxu0
      %v4287 = vadd.f32 %v4228, %v4286
      %4288 = vmatmul.bf16.gmra.mxu0 %v3288
      %v4289 = vpop.f32.mrf.mxu0
      %v4290 = vadd.f32 %v4231, %v4289
      %v4291 = vpop.f32.mrf.mxu0
      %v4292 = vadd.f32 %v4233, %v4291
      %4293 = vmatmul.bf16.gmra.mxu0 %v3296
      %v4294 = vpop.f32.mrf.mxu0
      %v4295 = vadd.f32 %v4236, %v4294
      %v4296 = vpop.f32.mrf.mxu0
      %v4297 = vadd.f32 %v4238, %v4296
      %4298 = vmatmul.bf16.gmra.mxu0 %v3304
      %v4299 = vpop.f32.mrf.mxu0
      %v4300 = vadd.f32 %v4241, %v4299
      %v4301 = vpop.f32.mrf.mxu0
      %v4302 = vadd.f32 %v4243, %v4301
      %4303 = vmatmul.bf16.gmra.mxu0 %v3312
      %v4304 = vpop.f32.mrf.mxu0
      %v4305 = vadd.f32 %v4246, %v4304
      %v4306 = vpop.f32.mrf.mxu0
      %v4307 = vadd.f32 %v4248, %v4306
      %4308 = vmatmul.bf16.gmra.mxu0 %v3320
      %v4309 = vpop.f32.mrf.mxu0
      %v4310 = vadd.f32 %v4251, %v4309
      %v4311 = vpop.f32.mrf.mxu0
      %v4312 = vadd.f32 %v4253, %v4311
      %4313 = vmatmul.bf16.gmra.mxu0 %v3328
      %v4314 = vpop.f32.mrf.mxu0
      %v4315 = vadd.f32 %v4256, %v4314
      %v4316 = vpop.f32.mrf.mxu0
      %v4317 = vadd.f32 %v4258, %v4316
      %4318 = vmatmul.bf16.gmra.mxu0 %v3336
      %v4319 = vpop.f32.mrf.mxu0
      %v4320 = vadd.f32 %v4261, %v4319
      %v4321 = vpop.f32.mrf.mxu0
      %v4322 = vadd.f32 %v4263, %v4321
      %4323 = vmatmul.bf16.gmra.mxu0 %v3344
      %v4324 = vpop.f32.mrf.mxu0
      %v4325 = vadd.f32 %v4266, %v4324
      %v4326 = vpop.f32.mrf.mxu0
      %v4327 = vadd.f32 %v4268, %v4326
      %4328 = vdwg.mxu0
      %v4329 = vpack.c.bf16 %v4280, %v4280
      %v4330 = vpack.c.bf16 %v4282, %v4282
      %v4331 = vpack.c.bf16 %v4285, %v4285
      %v4332 = vpack.c.bf16 %v4287, %v4287
      %v4333 = vpack.c.bf16 %v4290, %v4290
      %v4334 = vpack.c.bf16 %v4292, %v4292
      %v4335 = vpack.c.bf16 %v4295, %v4295
      %v4336 = vpack.c.bf16 %v4297, %v4297
      %v4337 = vpack.c.bf16 %v4300, %v4300
      %v4338 = vpack.c.bf16 %v4302, %v4302
      %v4339 = vpack.c.bf16 %v4305, %v4305
      %v4340 = vpack.c.bf16 %v4307, %v4307
      %v4341 = vpack.c.bf16 %v4310, %v4310
      %v4342 = vpack.c.bf16 %v4312, %v4312
      %v4343 = vpack.c.bf16 %v4315, %v4315
      %v4344 = vpack.c.bf16 %v4317, %v4317
      %v4345 = vpack.c.bf16 %v4320, %v4320
      %v4346 = vpack.c.bf16 %v4322, %v4322
      %v4347 = vpack.c.bf16 %v4325, %v4325
      %v4348 = vpack.c.bf16 %v4327, %v4327
      %v4349 = vld [vmem:[%s9] sm:$0xf]
      %v4350 = vld [vmem:[%s9 + $0x4] sm:$0xf]
      %v4351 = vld [vmem:[%s9 + $0x8] sm:$0xf]
      %v4352 = vld [vmem:[%s9 + $0xc] sm:$0xf]
      %v4353 = vld [vmem:[%s9 + $0x10] sm:$0xf]
      %v4354 = vld [vmem:[%s9 + $0x14] sm:$0xf]
      %v4355 = vld [vmem:[%s9 + $0x18] sm:$0xf]
      %v4356 = vld [vmem:[%s9 + $0x1c] sm:$0xf]
      %v4357 = vld [vmem:[%s9 + $0x20] sm:$0xf]
      %v4358 = vld [vmem:[%s9 + $0x24] sm:$0xf]
      %v4359 = vld [vmem:[%s9 + $0x28] sm:$0xf]
      %v4360 = vld [vmem:[%s9 + $0x2c] sm:$0xf]
      %v4361 = vld [vmem:[%s9 + $0x30] sm:$0xf]
      %v4362 = vld [vmem:[%s9 + $0x34] sm:$0xf]
      %v4363 = vld [vmem:[%s9 + $0x38] sm:$0xf]
      %v4364 = vld [vmem:[%s9 + $0x3c] sm:$0xf]
      %v4385 = vunpack.c.l.b16 %v4329
      %v4386 = vunpack.c.l.b16 %v4330
      %v4387 = vunpack.c.l.b16 %v4331
      %v4388 = vunpack.c.l.b16 %v4332
      %v4389 = vunpack.c.l.b16 %v4333
      %v4390 = vunpack.c.l.b16 %v4334
      %v4391 = vunpack.c.l.b16 %v4335
      %v4392 = vunpack.c.l.b16 %v4336
      %v4393 = vunpack.c.l.b16 %v4337
      %v4394 = vunpack.c.l.b16 %v4338
      %v4395 = vunpack.c.l.b16 %v4339
      %v4396 = vunpack.c.l.b16 %v4340
      %v4397 = vunpack.c.l.b16 %v4341
      %v4398 = vunpack.c.l.b16 %v4342
      %v4399 = vunpack.c.l.b16 %v4343
      %v4400 = vunpack.c.l.b16 %v4344
      %v4401 = vunpack.c.l.b16 %v4345
      %v4402 = vunpack.c.l.b16 %v4346
      %v4403 = vunpack.c.l.b16 %v4347
      %v4404 = vunpack.c.l.b16 %v4348
      %v4405 = vpack.c.b16 %v4386, %v4385
      %v4406 = vpack.c.b16 %v4388, %v4387
      %v4407 = vpack.c.b16 %v4390, %v4389
      %v4408 = vpack.c.b16 %v4392, %v4391
      %v4409 = vpack.c.b16 %v4394, %v4393
      %v4410 = vpack.c.b16 %v4396, %v4395
      %v4411 = vpack.c.b16 %v4398, %v4397
      %v4412 = vpack.c.b16 %v4400, %v4399
      %v4413 = vpack.c.b16 %v4402, %v4401
      %v4414 = vpack.c.b16 %v4404, %v4403
      %v4441 = vunpack.c.l.b16 %v4349
      %v4442 = vunpack.c.l.b16 %v4350
      %v4443 = vunpack.c.l.b16 %v4351
      %v4444 = vunpack.c.l.b16 %v4352
      %v4445 = vunpack.c.l.b16 %v4353
      %v4446 = vunpack.c.l.b16 %v4354
      %v4447 = vunpack.c.l.b16 %v4355
      %v4448 = vunpack.c.l.b16 %v4356
      %v4449 = vunpack.c.l.b16 %v4357
      %v4450 = vunpack.c.l.b16 %v4358
      %v4451 = vunpack.c.l.b16 %v4359
      %v4452 = vunpack.c.l.b16 %v4360
      %v4453 = vunpack.c.l.b16 %v4361
      %v4454 = vunpack.c.l.b16 %v4362
      %v4455 = vunpack.c.l.b16 %v4363
      %v4456 = vunpack.c.l.b16 %v4364
      %v4457 = vpack.c.b16 %v4442, %v4441
      %v4458 = vpack.c.b16 %v4444, %v4443
      %v4459 = vpack.c.b16 %v4446, %v4445
      %v4460 = vpack.c.b16 %v4448, %v4447
      %v4461 = vpack.c.b16 %v4450, %v4449
      %v4462 = vpack.c.b16 %v4452, %v4451
      %v4463 = vpack.c.b16 %v4454, %v4453
      %v4464 = vpack.c.b16 %v4456, %v4455
      %4473 = vmatpush.bf16.msra.mxu0 %v4464
      %4474 = vmatpush.bf16.msra.mxu0 %v4463
      %4475 = vmatpush.bf16.msra.mxu0 %v4462
      %4476 = vmatpush.bf16.msra.mxu0 %v4461
      %4477 = vmatpush.bf16.msra.mxu0 %v4460
      %4478 = vmatpush.bf16.msra.mxu0 %v4459
      %4479 = vmatpush.bf16.msra.mxu0 %v4458
      %4480 = vmatpush.bf16.msra.mxu0 %v4457
      %4481 = vmatmul.bf16.gmra.mxu0 %v4405
      %v4482 = vpop.f32.mrf.mxu0
      %v4483 = vadd.f32 0.0, %v4482
      %v4484 = vpop.f32.mrf.mxu0
      %v4485 = vadd.f32 0.0, %v4484
      %4486 = vmatmul.bf16.gmra.mxu0 %v4406
      %v4487 = vpop.f32.mrf.mxu0
      %v4488 = vadd.f32 0.0, %v4487
      %v4489 = vpop.f32.mrf.mxu0
      %v4490 = vadd.f32 0.0, %v4489
      %4491 = vmatmul.bf16.gmra.mxu0 %v4407
      %v4492 = vpop.f32.mrf.mxu0
      %v4493 = vadd.f32 0.0, %v4492
      %v4494 = vpop.f32.mrf.mxu0
      %v4495 = vadd.f32 0.0, %v4494
      %4496 = vmatmul.bf16.gmra.mxu0 %v4408
      %v4497 = vpop.f32.mrf.mxu0
      %v4498 = vadd.f32 0.0, %v4497
      %v4499 = vpop.f32.mrf.mxu0
      %v4500 = vadd.f32 0.0, %v4499
      %4501 = vmatmul.bf16.gmra.mxu0 %v4409
      %v4502 = vpop.f32.mrf.mxu0
      %v4503 = vadd.f32 0.0, %v4502
      %v4504 = vpop.f32.mrf.mxu0
      %v4505 = vadd.f32 0.0, %v4504
      %4506 = vmatmul.bf16.gmra.mxu0 %v4410
      %v4507 = vpop.f32.mrf.mxu0
      %v4508 = vadd.f32 0.0, %v4507
      %v4509 = vpop.f32.mrf.mxu0
      %v4510 = vadd.f32 0.0, %v4509
      %4511 = vmatmul.bf16.gmra.mxu0 %v4411
      %v4512 = vpop.f32.mrf.mxu0
      %v4513 = vadd.f32 0.0, %v4512
      %v4514 = vpop.f32.mrf.mxu0
      %v4515 = vadd.f32 0.0, %v4514
      %4516 = vmatmul.bf16.gmra.mxu0 %v4412
      %v4517 = vpop.f32.mrf.mxu0
      %v4518 = vadd.f32 0.0, %v4517
      %v4519 = vpop.f32.mrf.mxu0
      %v4520 = vadd.f32 0.0, %v4519
      %4521 = vmatmul.bf16.gmra.mxu0 %v4413
      %v4522 = vpop.f32.mrf.mxu0
      %v4523 = vadd.f32 0.0, %v4522
      %v4524 = vpop.f32.mrf.mxu0
      %v4525 = vadd.f32 0.0, %v4524
      %4526 = vmatmul.bf16.gmra.mxu0 %v4414
      %v4527 = vpop.f32.mrf.mxu0
      %v4528 = vadd.f32 0.0, %v4527
      %v4529 = vpop.f32.mrf.mxu0
      %v4530 = vadd.f32 0.0, %v4529
      %4531 = vdwg.mxu0
      %v4532 = vadd.f32 %v3065, %v4483
      %v4533 = vadd.f32 %v3066, %v4485
      %v4534 = vadd.f32 %v3067, %v4488
      %v4535 = vadd.f32 %v3068, %v4490
      %v4536 = vadd.f32 %v3069, %v4493
      %v4537 = vadd.f32 %v3070, %v4495
      %v4538 = vadd.f32 %v3071, %v4498
      %v4539 = vadd.f32 %v3072, %v4500
      %v4540 = vadd.f32 %v3073, %v4503
      %v4541 = vadd.f32 %v3074, %v4505
      %v4542 = vadd.f32 %v3075, %v4508
      %v4543 = vadd.f32 %v3076, %v4510
      %v4544 = vadd.f32 %v3077, %v4513
      %v4545 = vadd.f32 %v3078, %v4515
      %v4546 = vadd.f32 %v3079, %v4518
      %v4547 = vadd.f32 %v3080, %v4520
      %v4548 = vadd.f32 %v3081, %v4523
      %v4549 = vadd.f32 %v3082, %v4525
      %v4550 = vadd.f32 %v3083, %v4528
      %v4551 = vadd.f32 %v3084, %v4530
      %v4552 = vunpack.c.l.bf16 %v4405
      %v4553 = vunpack.c.h.bf16 %v4405
      %v4554 = vunpack.c.l.bf16 %v4406
      %v4555 = vunpack.c.h.bf16 %v4406
      %v4556 = vunpack.c.l.bf16 %v4407
      %v4557 = vunpack.c.h.bf16 %v4407
      %v4558 = vunpack.c.l.bf16 %v4408
      %v4559 = vunpack.c.h.bf16 %v4408
      %v4560 = vunpack.c.l.bf16 %v4409
      %v4561 = vunpack.c.h.bf16 %v4409
      %v4562 = vunpack.c.l.bf16 %v4410
      %v4563 = vunpack.c.h.bf16 %v4410
      %v4564 = vunpack.c.l.bf16 %v4411
      %v4565 = vunpack.c.h.bf16 %v4411
      %v4566 = vunpack.c.l.bf16 %v4412
      %v4567 = vunpack.c.h.bf16 %v4412
      %v4568 = vunpack.c.l.bf16 %v4413
      %v4569 = vunpack.c.h.bf16 %v4413
      %v4570 = vunpack.c.l.bf16 %v4414
      %v4571 = vunpack.c.h.bf16 %v4414
      %v4572 = vmul.f32 %v4552, %v1858
      %v4573 = vmul.f32 %v4552, %v1917
      %v4574 = vmul.f32 %v4552, %v1976
      %v4575 = vmul.f32 %v4552, %v2035
      %v4576 = vmul.f32 %v4552, %v2094
      %v4577 = vmul.f32 %v4552, %v2153
      %v4578 = vmul.f32 %v4552, %v2212
      %v4579 = vmul.f32 %v4552, %v2271
      %v4580 = vmul.f32 %v4553, %v1860
      %v4581 = vmul.f32 %v4553, %v1919
      %v4582 = vmul.f32 %v4553, %v1978
      %v4583 = vmul.f32 %v4553, %v2037
      %v4584 = vmul.f32 %v4553, %v2096
      %v4585 = vmul.f32 %v4553, %v2155
      %v4586 = vmul.f32 %v4553, %v2214
      %v4587 = vmul.f32 %v4553, %v2273
      %v4588 = vmul.f32 %v4554, %v1863
      %v4589 = vmul.f32 %v4554, %v1922
      %v4590 = vmul.f32 %v4554, %v1981
      %v4591 = vmul.f32 %v4554, %v2040
      %v4592 = vmul.f32 %v4554, %v2099
      %v4593 = vmul.f32 %v4554, %v2158
      %v4594 = vmul.f32 %v4554, %v2217
      %v4595 = vmul.f32 %v4554, %v2276
      %v4596 = vmul.f32 %v4555, %v1865
      %v4597 = vmul.f32 %v4555, %v1924
      %v4598 = vmul.f32 %v4555, %v1983
      %v4599 = vmul.f32 %v4555, %v2042
      %v4600 = vmul.f32 %v4555, %v2101
      %v4601 = vmul.f32 %v4555, %v2160
      %v4602 = vmul.f32 %v4555, %v2219
      %v4603 = vmul.f32 %v4555, %v2278
      %v4604 = vmul.f32 %v4556, %v1868
      %v4605 = vmul.f32 %v4556, %v1927
      %v4606 = vmul.f32 %v4556, %v1986
      %v4607 = vmul.f32 %v4556, %v2045
      %v4608 = vmul.f32 %v4556, %v2104
      %v4609 = vmul.f32 %v4556, %v2163
      %v4610 = vmul.f32 %v4556, %v2222
      %v4611 = vmul.f32 %v4556, %v2281
      %v4612 = vmul.f32 %v4557, %v1870
      %v4613 = vmul.f32 %v4557, %v1929
      %v4614 = vmul.f32 %v4557, %v1988
      %v4615 = vmul.f32 %v4557, %v2047
      %v4616 = vmul.f32 %v4557, %v2106
      %v4617 = vmul.f32 %v4557, %v2165
      %v4618 = vmul.f32 %v4557, %v2224
      %v4619 = vmul.f32 %v4557, %v2283
      %v4620 = vmul.f32 %v4558, %v1873
      %v4621 = vmul.f32 %v4558, %v1932
      %v4622 = vmul.f32 %v4558, %v1991
      %v4623 = vmul.f32 %v4558, %v2050
      %v4624 = vmul.f32 %v4558, %v2109
      %v4625 = vmul.f32 %v4558, %v2168
      %v4626 = vmul.f32 %v4558, %v2227
      %v4627 = vmul.f32 %v4558, %v2286
      %v4628 = vmul.f32 %v4559, %v1875
      %v4629 = vmul.f32 %v4559, %v1934
      %v4630 = vmul.f32 %v4559, %v1993
      %v4631 = vmul.f32 %v4559, %v2052
      %v4632 = vmul.f32 %v4559, %v2111
      %v4633 = vmul.f32 %v4559, %v2170
      %v4634 = vmul.f32 %v4559, %v2229
      %v4635 = vmul.f32 %v4559, %v2288
      %v4636 = vmul.f32 %v4560, %v1878
      %v4637 = vmul.f32 %v4560, %v1937
      %v4638 = vmul.f32 %v4560, %v1996
      %v4639 = vmul.f32 %v4560, %v2055
      %v4640 = vmul.f32 %v4560, %v2114
      %v4641 = vmul.f32 %v4560, %v2173
      %v4642 = vmul.f32 %v4560, %v2232
      %v4643 = vmul.f32 %v4560, %v2291
      %v4644 = vmul.f32 %v4561, %v1880
      %v4645 = vmul.f32 %v4561, %v1939
      %v4646 = vmul.f32 %v4561, %v1998
      %v4647 = vmul.f32 %v4561, %v2057
      %v4648 = vmul.f32 %v4561, %v2116
      %v4649 = vmul.f32 %v4561, %v2175
      %v4650 = vmul.f32 %v4561, %v2234
      %v4651 = vmul.f32 %v4561, %v2293
      %v4652 = vmul.f32 %v4562, %v1883
      %v4653 = vmul.f32 %v4562, %v1942
      %v4654 = vmul.f32 %v4562, %v2001
      %v4655 = vmul.f32 %v4562, %v2060
      %v4656 = vmul.f32 %v4562, %v2119
      %v4657 = vmul.f32 %v4562, %v2178
      %v4658 = vmul.f32 %v4562, %v2237
      %v4659 = vmul.f32 %v4562, %v2296
      %v4660 = vmul.f32 %v4563, %v1885
      %v4661 = vmul.f32 %v4563, %v1944
      %v4662 = vmul.f32 %v4563, %v2003
      %v4663 = vmul.f32 %v4563, %v2062
      %v4664 = vmul.f32 %v4563, %v2121
      %v4665 = vmul.f32 %v4563, %v2180
      %v4666 = vmul.f32 %v4563, %v2239
      %v4667 = vmul.f32 %v4563, %v2298
      %v4668 = vmul.f32 %v4564, %v1888
      %v4669 = vmul.f32 %v4564, %v1947
      %v4670 = vmul.f32 %v4564, %v2006
      %v4671 = vmul.f32 %v4564, %v2065
      %v4672 = vmul.f32 %v4564, %v2124
      %v4673 = vmul.f32 %v4564, %v2183
      %v4674 = vmul.f32 %v4564, %v2242
      %v4675 = vmul.f32 %v4564, %v2301
      %v4676 = vmul.f32 %v4565, %v1890
      %v4677 = vmul.f32 %v4565, %v1949
      %v4678 = vmul.f32 %v4565, %v2008
      %v4679 = vmul.f32 %v4565, %v2067
      %v4680 = vmul.f32 %v4565, %v2126
      %v4681 = vmul.f32 %v4565, %v2185
      %v4682 = vmul.f32 %v4565, %v2244
      %v4683 = vmul.f32 %v4565, %v2303
      %v4684 = vmul.f32 %v4566, %v1893
      %v4685 = vmul.f32 %v4566, %v1952
      %v4686 = vmul.f32 %v4566, %v2011
      %v4687 = vmul.f32 %v4566, %v2070
      %v4688 = vmul.f32 %v4566, %v2129
      %v4689 = vmul.f32 %v4566, %v2188
      %v4690 = vmul.f32 %v4566, %v2247
      %v4691 = vmul.f32 %v4566, %v2306
      %v4692 = vmul.f32 %v4567, %v1895
      %v4693 = vmul.f32 %v4567, %v1954
      %v4694 = vmul.f32 %v4567, %v2013
      %v4695 = vmul.f32 %v4567, %v2072
      %v4696 = vmul.f32 %v4567, %v2131
      %v4697 = vmul.f32 %v4567, %v2190
      %v4698 = vmul.f32 %v4567, %v2249
      %v4699 = vmul.f32 %v4567, %v2308
      %v4700 = vmul.f32 %v4568, %v1898
      %v4701 = vmul.f32 %v4568, %v1957
      %v4702 = vmul.f32 %v4568, %v2016
      %v4703 = vmul.f32 %v4568, %v2075
      %v4704 = vmul.f32 %v4568, %v2134
      %v4705 = vmul.f32 %v4568, %v2193
      %v4706 = vmul.f32 %v4568, %v2252
      %v4707 = vmul.f32 %v4568, %v2311
      %v4708 = vmul.f32 %v4569, %v1900
      %v4709 = vmul.f32 %v4569, %v1959
      %v4710 = vmul.f32 %v4569, %v2018
      %v4711 = vmul.f32 %v4569, %v2077
      %v4712 = vmul.f32 %v4569, %v2136
      %v4713 = vmul.f32 %v4569, %v2195
      %v4714 = vmul.f32 %v4569, %v2254
      %v4715 = vmul.f32 %v4569, %v2313
      %v4716 = vmul.f32 %v4570, %v1903
      %v4717 = vmul.f32 %v4570, %v1962
      %v4718 = vmul.f32 %v4570, %v2021
      %v4719 = vmul.f32 %v4570, %v2080
      %v4720 = vmul.f32 %v4570, %v2139
      %v4721 = vmul.f32 %v4570, %v2198
      %v4722 = vmul.f32 %v4570, %v2257
      %v4723 = vmul.f32 %v4570, %v2316
      %v4724 = vmul.f32 %v4571, %v1905
      %v4725 = vmul.f32 %v4571, %v1964
      %v4726 = vmul.f32 %v4571, %v2023
      %v4727 = vmul.f32 %v4571, %v2082
      %v4728 = vmul.f32 %v4571, %v2141
      %v4729 = vmul.f32 %v4571, %v2200
      %v4730 = vmul.f32 %v4571, %v2259
      %v4731 = vmul.f32 %v4571, %v2318
      %v4732 = vpack.c.bf16 %v4580, %v4572
      %v4733 = vpack.c.bf16 %v4581, %v4573
      %v4734 = vpack.c.bf16 %v4582, %v4574
      %v4735 = vpack.c.bf16 %v4583, %v4575
      %v4736 = vpack.c.bf16 %v4584, %v4576
      %v4737 = vpack.c.bf16 %v4585, %v4577
      %v4738 = vpack.c.bf16 %v4586, %v4578
      %v4739 = vpack.c.bf16 %v4587, %v4579
      %v4740 = vpack.c.bf16 %v4596, %v4588
      %v4741 = vpack.c.bf16 %v4597, %v4589
      %v4742 = vpack.c.bf16 %v4598, %v4590
      %v4743 = vpack.c.bf16 %v4599, %v4591
      %v4744 = vpack.c.bf16 %v4600, %v4592
      %v4745 = vpack.c.bf16 %v4601, %v4593
      %v4746 = vpack.c.bf16 %v4602, %v4594
      %v4747 = vpack.c.bf16 %v4603, %v4595
      %v4748 = vpack.c.bf16 %v4612, %v4604
      %v4749 = vpack.c.bf16 %v4613, %v4605
      %v4750 = vpack.c.bf16 %v4614, %v4606
      %v4751 = vpack.c.bf16 %v4615, %v4607
      %v4752 = vpack.c.bf16 %v4616, %v4608
      %v4753 = vpack.c.bf16 %v4617, %v4609
      %v4754 = vpack.c.bf16 %v4618, %v4610
      %v4755 = vpack.c.bf16 %v4619, %v4611
      %v4756 = vpack.c.bf16 %v4628, %v4620
      %v4757 = vpack.c.bf16 %v4629, %v4621
      %v4758 = vpack.c.bf16 %v4630, %v4622
      %v4759 = vpack.c.bf16 %v4631, %v4623
      %v4760 = vpack.c.bf16 %v4632, %v4624
      %v4761 = vpack.c.bf16 %v4633, %v4625
      %v4762 = vpack.c.bf16 %v4634, %v4626
      %v4763 = vpack.c.bf16 %v4635, %v4627
      %v4764 = vpack.c.bf16 %v4644, %v4636
      %v4765 = vpack.c.bf16 %v4645, %v4637
      %v4766 = vpack.c.bf16 %v4646, %v4638
      %v4767 = vpack.c.bf16 %v4647, %v4639
      %v4768 = vpack.c.bf16 %v4648, %v4640
      %v4769 = vpack.c.bf16 %v4649, %v4641
      %v4770 = vpack.c.bf16 %v4650, %v4642
      %v4771 = vpack.c.bf16 %v4651, %v4643
      %v4772 = vpack.c.bf16 %v4660, %v4652
      %v4773 = vpack.c.bf16 %v4661, %v4653
      %v4774 = vpack.c.bf16 %v4662, %v4654
      %v4775 = vpack.c.bf16 %v4663, %v4655
      %v4776 = vpack.c.bf16 %v4664, %v4656
      %v4777 = vpack.c.bf16 %v4665, %v4657
      %v4778 = vpack.c.bf16 %v4666, %v4658
      %v4779 = vpack.c.bf16 %v4667, %v4659
      %v4780 = vpack.c.bf16 %v4676, %v4668
      %v4781 = vpack.c.bf16 %v4677, %v4669
      %v4782 = vpack.c.bf16 %v4678, %v4670
      %v4783 = vpack.c.bf16 %v4679, %v4671
      %v4784 = vpack.c.bf16 %v4680, %v4672
      %v4785 = vpack.c.bf16 %v4681, %v4673
      %v4786 = vpack.c.bf16 %v4682, %v4674
      %v4787 = vpack.c.bf16 %v4683, %v4675
      %v4788 = vpack.c.bf16 %v4692, %v4684
      %v4789 = vpack.c.bf16 %v4693, %v4685
      %v4790 = vpack.c.bf16 %v4694, %v4686
      %v4791 = vpack.c.bf16 %v4695, %v4687
      %v4792 = vpack.c.bf16 %v4696, %v4688
      %v4793 = vpack.c.bf16 %v4697, %v4689
      %v4794 = vpack.c.bf16 %v4698, %v4690
      %v4795 = vpack.c.bf16 %v4699, %v4691
      %v4796 = vpack.c.bf16 %v4708, %v4700
      %v4797 = vpack.c.bf16 %v4709, %v4701
      %v4798 = vpack.c.bf16 %v4710, %v4702
      %v4799 = vpack.c.bf16 %v4711, %v4703
      %v4800 = vpack.c.bf16 %v4712, %v4704
      %v4801 = vpack.c.bf16 %v4713, %v4705
      %v4802 = vpack.c.bf16 %v4714, %v4706
      %v4803 = vpack.c.bf16 %v4715, %v4707
      %v4804 = vpack.c.bf16 %v4724, %v4716
      %v4805 = vpack.c.bf16 %v4725, %v4717
      %v4806 = vpack.c.bf16 %v4726, %v4718
      %v4807 = vpack.c.bf16 %v4727, %v4719
      %v4808 = vpack.c.bf16 %v4728, %v4720
      %v4809 = vpack.c.bf16 %v4729, %v4721
      %v4810 = vpack.c.bf16 %v4730, %v4722
      %v4811 = vpack.c.bf16 %v4731, %v4723
      %v4812 = vld [vmem:[%s10] sm:$0xf]
      %v4813 = vld [vmem:[%s10 + $0x4] sm:$0xf]
      %v4814 = vld [vmem:[%s10 + $0x8] sm:$0xf]
      %v4815 = vld [vmem:[%s10 + $0xc] sm:$0xf]
      %v4816 = vld [vmem:[%s10 + $0x10] sm:$0xf]
      %v4817 = vld [vmem:[%s10 + $0x14] sm:$0xf]
      %v4818 = vld [vmem:[%s10 + $0x18] sm:$0xf]
      %v4819 = vld [vmem:[%s10 + $0x1c] sm:$0xf]
      %v4820 = vld [vmem:[%s10 + $0x20] sm:$0xf]
      %v4821 = vld [vmem:[%s10 + $0x24] sm:$0xf]
      %v4822 = vld [vmem:[%s10 + $0x28] sm:$0xf]
      %v4823 = vld [vmem:[%s10 + $0x2c] sm:$0xf]
      %v4824 = vld [vmem:[%s10 + $0x30] sm:$0xf]
      %v4825 = vld [vmem:[%s10 + $0x34] sm:$0xf]
      %v4826 = vld [vmem:[%s10 + $0x38] sm:$0xf]
      %v4827 = vld [vmem:[%s10 + $0x3c] sm:$0xf]
      %v4828 = vld [vmem:[%s10 + $0x40] sm:$0xf]
      %v4829 = vld [vmem:[%s10 + $0x44] sm:$0xf]
      %v4830 = vld [vmem:[%s10 + $0x48] sm:$0xf]
      %v4831 = vld [vmem:[%s10 + $0x4c] sm:$0xf]
      %v4832 = vld [vmem:[%s10 + $0x50] sm:$0xf]
      %v4833 = vld [vmem:[%s10 + $0x54] sm:$0xf]
      %v4834 = vld [vmem:[%s10 + $0x58] sm:$0xf]
      %v4835 = vld [vmem:[%s10 + $0x5c] sm:$0xf]
      %v4836 = vld [vmem:[%s10 + $0x60] sm:$0xf]
      %v4837 = vld [vmem:[%s10 + $0x64] sm:$0xf]
      %v4838 = vld [vmem:[%s10 + $0x68] sm:$0xf]
      %v4839 = vld [vmem:[%s10 + $0x6c] sm:$0xf]
      %v4840 = vld [vmem:[%s10 + $0x70] sm:$0xf]
      %v4841 = vld [vmem:[%s10 + $0x74] sm:$0xf]
      %v4842 = vld [vmem:[%s10 + $0x78] sm:$0xf]
      %v4843 = vld [vmem:[%s10 + $0x7c] sm:$0xf]
      %v4844 = vld [vmem:[%s10 + $0x80] sm:$0xf]
      %v4845 = vld [vmem:[%s10 + $0x84] sm:$0xf]
      %v4846 = vld [vmem:[%s10 + $0x88] sm:$0xf]
      %v4847 = vld [vmem:[%s10 + $0x8c] sm:$0xf]
      %v4848 = vld [vmem:[%s10 + $0x90] sm:$0xf]
      %v4849 = vld [vmem:[%s10 + $0x94] sm:$0xf]
      %v4850 = vld [vmem:[%s10 + $0x98] sm:$0xf]
      %v4851 = vld [vmem:[%s10 + $0x9c] sm:$0xf]
      %v4852 = vld [vmem:[%s10 + $0xa0] sm:$0xf]
      %v4853 = vld [vmem:[%s10 + $0xa4] sm:$0xf]
      %v4854 = vld [vmem:[%s10 + $0xa8] sm:$0xf]
      %v4855 = vld [vmem:[%s10 + $0xac] sm:$0xf]
      %v4856 = vld [vmem:[%s10 + $0xb0] sm:$0xf]
      %v4857 = vld [vmem:[%s10 + $0xb4] sm:$0xf]
      %v4858 = vld [vmem:[%s10 + $0xb8] sm:$0xf]
      %v4859 = vld [vmem:[%s10 + $0xbc] sm:$0xf]
      %v4860 = vld [vmem:[%s10 + $0xc0] sm:$0xf]
      %v4861 = vld [vmem:[%s10 + $0xc4] sm:$0xf]
      %v4862 = vld [vmem:[%s10 + $0xc8] sm:$0xf]
      %v4863 = vld [vmem:[%s10 + $0xcc] sm:$0xf]
      %v4864 = vld [vmem:[%s10 + $0xd0] sm:$0xf]
      %v4865 = vld [vmem:[%s10 + $0xd4] sm:$0xf]
      %v4866 = vld [vmem:[%s10 + $0xd8] sm:$0xf]
      %v4867 = vld [vmem:[%s10 + $0xdc] sm:$0xf]
      %v4868 = vld [vmem:[%s10 + $0xe0] sm:$0xf]
      %v4869 = vld [vmem:[%s10 + $0xe4] sm:$0xf]
      %v4870 = vld [vmem:[%s10 + $0xe8] sm:$0xf]
      %v4871 = vld [vmem:[%s10 + $0xec] sm:$0xf]
      %v4872 = vld [vmem:[%s10 + $0xf0] sm:$0xf]
      %v4873 = vld [vmem:[%s10 + $0xf4] sm:$0xf]
      %v4874 = vld [vmem:[%s10 + $0xf8] sm:$0xf]
      %v4875 = vld [vmem:[%s10 + $0xfc] sm:$0xf]
      %v4876 = vld [vmem:[%s10 + $0x100] sm:$0xf]
      %v4877 = vld [vmem:[%s10 + $0x104] sm:$0xf]
      %v4878 = vld [vmem:[%s10 + $0x108] sm:$0xf]
      %v4879 = vld [vmem:[%s10 + $0x10c] sm:$0xf]
      %v4880 = vld [vmem:[%s10 + $0x110] sm:$0xf]
      %v4881 = vld [vmem:[%s10 + $0x114] sm:$0xf]
      %v4882 = vld [vmem:[%s10 + $0x118] sm:$0xf]
      %v4883 = vld [vmem:[%s10 + $0x11c] sm:$0xf]
      %v4884 = vld [vmem:[%s10 + $0x120] sm:$0xf]
      %v4885 = vld [vmem:[%s10 + $0x124] sm:$0xf]
      %v4886 = vld [vmem:[%s10 + $0x128] sm:$0xf]
      %v4887 = vld [vmem:[%s10 + $0x12c] sm:$0xf]
      %v4888 = vld [vmem:[%s10 + $0x130] sm:$0xf]
      %v4889 = vld [vmem:[%s10 + $0x134] sm:$0xf]
      %v4890 = vld [vmem:[%s10 + $0x138] sm:$0xf]
      %v4891 = vld [vmem:[%s10 + $0x13c] sm:$0xf]
      %v4892 = vld [vmem:[%s10 + $0x140] sm:$0xf]
      %v4893 = vld [vmem:[%s10 + $0x144] sm:$0xf]
      %v4894 = vld [vmem:[%s10 + $0x148] sm:$0xf]
      %v4895 = vld [vmem:[%s10 + $0x14c] sm:$0xf]
      %v4896 = vld [vmem:[%s10 + $0x150] sm:$0xf]
      %v4897 = vld [vmem:[%s10 + $0x154] sm:$0xf]
      %v4898 = vld [vmem:[%s10 + $0x158] sm:$0xf]
      %v4899 = vld [vmem:[%s10 + $0x15c] sm:$0xf]
      %v4900 = vld [vmem:[%s10 + $0x160] sm:$0xf]
      %v4901 = vld [vmem:[%s10 + $0x164] sm:$0xf]
      %v4902 = vld [vmem:[%s10 + $0x168] sm:$0xf]
      %v4903 = vld [vmem:[%s10 + $0x16c] sm:$0xf]
      %v4904 = vld [vmem:[%s10 + $0x170] sm:$0xf]
      %v4905 = vld [vmem:[%s10 + $0x174] sm:$0xf]
      %v4906 = vld [vmem:[%s10 + $0x178] sm:$0xf]
      %v4907 = vld [vmem:[%s10 + $0x17c] sm:$0xf]
      %v4908 = vld [vmem:[%s10 + $0x180] sm:$0xf]
      %v4909 = vld [vmem:[%s10 + $0x184] sm:$0xf]
      %v4910 = vld [vmem:[%s10 + $0x188] sm:$0xf]
      %v4911 = vld [vmem:[%s10 + $0x18c] sm:$0xf]
      %v4912 = vld [vmem:[%s10 + $0x190] sm:$0xf]
      %v4913 = vld [vmem:[%s10 + $0x194] sm:$0xf]
      %v4914 = vld [vmem:[%s10 + $0x198] sm:$0xf]
      %v4915 = vld [vmem:[%s10 + $0x19c] sm:$0xf]
      %v4916 = vld [vmem:[%s10 + $0x1a0] sm:$0xf]
      %v4917 = vld [vmem:[%s10 + $0x1a4] sm:$0xf]
      %v4918 = vld [vmem:[%s10 + $0x1a8] sm:$0xf]
      %v4919 = vld [vmem:[%s10 + $0x1ac] sm:$0xf]
      %v4920 = vld [vmem:[%s10 + $0x1b0] sm:$0xf]
      %v4921 = vld [vmem:[%s10 + $0x1b4] sm:$0xf]
      %v4922 = vld [vmem:[%s10 + $0x1b8] sm:$0xf]
      %v4923 = vld [vmem:[%s10 + $0x1bc] sm:$0xf]
      %v4924 = vld [vmem:[%s10 + $0x1c0] sm:$0xf]
      %v4925 = vld [vmem:[%s10 + $0x1c4] sm:$0xf]
      %v4926 = vld [vmem:[%s10 + $0x1c8] sm:$0xf]
      %v4927 = vld [vmem:[%s10 + $0x1cc] sm:$0xf]
      %v4928 = vld [vmem:[%s10 + $0x1d0] sm:$0xf]
      %v4929 = vld [vmem:[%s10 + $0x1d4] sm:$0xf]
      %v4930 = vld [vmem:[%s10 + $0x1d8] sm:$0xf]
      %v4931 = vld [vmem:[%s10 + $0x1dc] sm:$0xf]
      %v4932 = vld [vmem:[%s10 + $0x1e0] sm:$0xf]
      %v4933 = vld [vmem:[%s10 + $0x1e4] sm:$0xf]
      %v4934 = vld [vmem:[%s10 + $0x1e8] sm:$0xf]
      %v4935 = vld [vmem:[%s10 + $0x1ec] sm:$0xf]
      %v4936 = vld [vmem:[%s10 + $0x1f0] sm:$0xf]
      %v4937 = vld [vmem:[%s10 + $0x1f4] sm:$0xf]
      %v4938 = vld [vmem:[%s10 + $0x1f8] sm:$0xf]
      %v4939 = vld [vmem:[%s10 + $0x1fc] sm:$0xf]
      %v5068 = vunpack.c.l.b16 %v4812
      %v5069 = vunpack.c.l.b16 %v4813
      %v5070 = vunpack.c.l.b16 %v4814
      %v5071 = vunpack.c.l.b16 %v4815
      %v5072 = vunpack.c.l.b16 %v4816
      %v5073 = vunpack.c.l.b16 %v4817
      %v5074 = vunpack.c.l.b16 %v4818
      %v5075 = vunpack.c.l.b16 %v4819
      %v5076 = vunpack.c.l.b16 %v4820
      %v5077 = vunpack.c.l.b16 %v4821
      %v5078 = vunpack.c.l.b16 %v4822
      %v5079 = vunpack.c.l.b16 %v4823
      %v5080 = vunpack.c.l.b16 %v4824
      %v5081 = vunpack.c.l.b16 %v4825
      %v5082 = vunpack.c.l.b16 %v4826
      %v5083 = vunpack.c.l.b16 %v4827
      %v5084 = vunpack.c.l.b16 %v4828
      %v5085 = vunpack.c.l.b16 %v4829
      %v5086 = vunpack.c.l.b16 %v4830
      %v5087 = vunpack.c.l.b16 %v4831
      %v5088 = vunpack.c.l.b16 %v4832
      %v5089 = vunpack.c.l.b16 %v4833
      %v5090 = vunpack.c.l.b16 %v4834
      %v5091 = vunpack.c.l.b16 %v4835
      %v5092 = vunpack.c.l.b16 %v4836
      %v5093 = vunpack.c.l.b16 %v4837
      %v5094 = vunpack.c.l.b16 %v4838
      %v5095 = vunpack.c.l.b16 %v4839
      %v5096 = vunpack.c.l.b16 %v4840
      %v5097 = vunpack.c.l.b16 %v4841
      %v5098 = vunpack.c.l.b16 %v4842
      %v5099 = vunpack.c.l.b16 %v4843
      %v5100 = vunpack.c.l.b16 %v4844
      %v5101 = vunpack.c.l.b16 %v4845
      %v5102 = vunpack.c.l.b16 %v4846
      %v5103 = vunpack.c.l.b16 %v4847
      %v5104 = vunpack.c.l.b16 %v4848
      %v5105 = vunpack.c.l.b16 %v4849
      %v5106 = vunpack.c.l.b16 %v4850
      %v5107 = vunpack.c.l.b16 %v4851
      %v5108 = vunpack.c.l.b16 %v4852
      %v5109 = vunpack.c.l.b16 %v4853
      %v5110 = vunpack.c.l.b16 %v4854
      %v5111 = vunpack.c.l.b16 %v4855
      %v5112 = vunpack.c.l.b16 %v4856
      %v5113 = vunpack.c.l.b16 %v4857
      %v5114 = vunpack.c.l.b16 %v4858
      %v5115 = vunpack.c.l.b16 %v4859
      %v5116 = vunpack.c.l.b16 %v4860
      %v5117 = vunpack.c.l.b16 %v4861
      %v5118 = vunpack.c.l.b16 %v4862
      %v5119 = vunpack.c.l.b16 %v4863
      %v5120 = vunpack.c.l.b16 %v4864
      %v5121 = vunpack.c.l.b16 %v4865
      %v5122 = vunpack.c.l.b16 %v4866
      %v5123 = vunpack.c.l.b16 %v4867
      %v5124 = vunpack.c.l.b16 %v4868
      %v5125 = vunpack.c.l.b16 %v4869
      %v5126 = vunpack.c.l.b16 %v4870
      %v5127 = vunpack.c.l.b16 %v4871
      %v5128 = vunpack.c.l.b16 %v4872
      %v5129 = vunpack.c.l.b16 %v4873
      %v5130 = vunpack.c.l.b16 %v4874
      %v5131 = vunpack.c.l.b16 %v4875
      %v5132 = vunpack.c.l.b16 %v4876
      %v5133 = vunpack.c.l.b16 %v4877
      %v5134 = vunpack.c.l.b16 %v4878
      %v5135 = vunpack.c.l.b16 %v4879
      %v5136 = vunpack.c.l.b16 %v4880
      %v5137 = vunpack.c.l.b16 %v4881
      %v5138 = vunpack.c.l.b16 %v4882
      %v5139 = vunpack.c.l.b16 %v4883
      %v5140 = vunpack.c.l.b16 %v4884
      %v5141 = vunpack.c.l.b16 %v4885
      %v5142 = vunpack.c.l.b16 %v4886
      %v5143 = vunpack.c.l.b16 %v4887
      %v5144 = vunpack.c.l.b16 %v4888
      %v5145 = vunpack.c.l.b16 %v4889
      %v5146 = vunpack.c.l.b16 %v4890
      %v5147 = vunpack.c.l.b16 %v4891
      %v5148 = vunpack.c.l.b16 %v4892
      %v5149 = vunpack.c.l.b16 %v4893
      %v5150 = vunpack.c.l.b16 %v4894
      %v5151 = vunpack.c.l.b16 %v4895
      %v5152 = vunpack.c.l.b16 %v4896
      %v5153 = vunpack.c.l.b16 %v4897
      %v5154 = vunpack.c.l.b16 %v4898
      %v5155 = vunpack.c.l.b16 %v4899
      %v5156 = vunpack.c.l.b16 %v4900
      %v5157 = vunpack.c.l.b16 %v4901
      %v5158 = vunpack.c.l.b16 %v4902
      %v5159 = vunpack.c.l.b16 %v4903
      %v5160 = vunpack.c.l.b16 %v4904
      %v5161 = vunpack.c.l.b16 %v4905
      %v5162 = vunpack.c.l.b16 %v4906
      %v5163 = vunpack.c.l.b16 %v4907
      %v5164 = vunpack.c.l.b16 %v4908
      %v5165 = vunpack.c.l.b16 %v4909
      %v5166 = vunpack.c.l.b16 %v4910
      %v5167 = vunpack.c.l.b16 %v4911
      %v5168 = vunpack.c.l.b16 %v4912
      %v5169 = vunpack.c.l.b16 %v4913
      %v5170 = vunpack.c.l.b16 %v4914
      %v5171 = vunpack.c.l.b16 %v4915
      %v5172 = vunpack.c.l.b16 %v4916
      %v5173 = vunpack.c.l.b16 %v4917
      %v5174 = vunpack.c.l.b16 %v4918
      %v5175 = vunpack.c.l.b16 %v4919
      %v5176 = vunpack.c.l.b16 %v4920
      %v5177 = vunpack.c.l.b16 %v4921
      %v5178 = vunpack.c.l.b16 %v4922
      %v5179 = vunpack.c.l.b16 %v4923
      %v5180 = vunpack.c.l.b16 %v4924
      %v5181 = vunpack.c.l.b16 %v4925
      %v5182 = vunpack.c.l.b16 %v4926
      %v5183 = vunpack.c.l.b16 %v4927
      %v5184 = vunpack.c.l.b16 %v4928
      %v5185 = vunpack.c.l.b16 %v4929
      %v5186 = vunpack.c.l.b16 %v4930
      %v5187 = vunpack.c.l.b16 %v4931
      %v5188 = vunpack.c.l.b16 %v4932
      %v5189 = vunpack.c.l.b16 %v4933
      %v5190 = vunpack.c.l.b16 %v4934
      %v5191 = vunpack.c.l.b16 %v4935
      %v5192 = vunpack.c.l.b16 %v4936
      %v5193 = vunpack.c.l.b16 %v4937
      %v5194 = vunpack.c.l.b16 %v4938
      %v5195 = vunpack.c.l.b16 %v4939
      %v5196 = vpack.c.b16 %v5069, %v5068
      %v5197 = vpack.c.b16 %v5071, %v5070
      %v5198 = vpack.c.b16 %v5073, %v5072
      %v5199 = vpack.c.b16 %v5075, %v5074
      %v5200 = vpack.c.b16 %v5077, %v5076
      %v5201 = vpack.c.b16 %v5079, %v5078
      %v5202 = vpack.c.b16 %v5081, %v5080
      %v5203 = vpack.c.b16 %v5083, %v5082
      %v5204 = vpack.c.b16 %v5085, %v5084
      %v5205 = vpack.c.b16 %v5087, %v5086
      %v5206 = vpack.c.b16 %v5089, %v5088
      %v5207 = vpack.c.b16 %v5091, %v5090
      %v5208 = vpack.c.b16 %v5093, %v5092
      %v5209 = vpack.c.b16 %v5095, %v5094
      %v5210 = vpack.c.b16 %v5097, %v5096
      %v5211 = vpack.c.b16 %v5099, %v5098
      %v5212 = vpack.c.b16 %v5101, %v5100
      %v5213 = vpack.c.b16 %v5103, %v5102
      %v5214 = vpack.c.b16 %v5105, %v5104
      %v5215 = vpack.c.b16 %v5107, %v5106
      %v5216 = vpack.c.b16 %v5109, %v5108
      %v5217 = vpack.c.b16 %v5111, %v5110
      %v5218 = vpack.c.b16 %v5113, %v5112
      %v5219 = vpack.c.b16 %v5115, %v5114
      %v5220 = vpack.c.b16 %v5117, %v5116
      %v5221 = vpack.c.b16 %v5119, %v5118
      %v5222 = vpack.c.b16 %v5121, %v5120
      %v5223 = vpack.c.b16 %v5123, %v5122
      %v5224 = vpack.c.b16 %v5125, %v5124
      %v5225 = vpack.c.b16 %v5127, %v5126
      %v5226 = vpack.c.b16 %v5129, %v5128
      %v5227 = vpack.c.b16 %v5131, %v5130
      %v5228 = vpack.c.b16 %v5133, %v5132
      %v5229 = vpack.c.b16 %v5135, %v5134
      %v5230 = vpack.c.b16 %v5137, %v5136
      %v5231 = vpack.c.b16 %v5139, %v5138
      %v5232 = vpack.c.b16 %v5141, %v5140
      %v5233 = vpack.c.b16 %v5143, %v5142
      %v5234 = vpack.c.b16 %v5145, %v5144
      %v5235 = vpack.c.b16 %v5147, %v5146
      %v5236 = vpack.c.b16 %v5149, %v5148
      %v5237 = vpack.c.b16 %v5151, %v5150
      %v5238 = vpack.c.b16 %v5153, %v5152
      %v5239 = vpack.c.b16 %v5155, %v5154
      %v5240 = vpack.c.b16 %v5157, %v5156
      %v5241 = vpack.c.b16 %v5159, %v5158
      %v5242 = vpack.c.b16 %v5161, %v5160
      %v5243 = vpack.c.b16 %v5163, %v5162
      %v5244 = vpack.c.b16 %v5165, %v5164
      %v5245 = vpack.c.b16 %v5167, %v5166
      %v5246 = vpack.c.b16 %v5169, %v5168
      %v5247 = vpack.c.b16 %v5171, %v5170
      %v5248 = vpack.c.b16 %v5173, %v5172
      %v5249 = vpack.c.b16 %v5175, %v5174
      %v5250 = vpack.c.b16 %v5177, %v5176
      %v5251 = vpack.c.b16 %v5179, %v5178
      %v5252 = vpack.c.b16 %v5181, %v5180
      %v5253 = vpack.c.b16 %v5183, %v5182
      %v5254 = vpack.c.b16 %v5185, %v5184
      %v5255 = vpack.c.b16 %v5187, %v5186
      %v5256 = vpack.c.b16 %v5189, %v5188
      %v5257 = vpack.c.b16 %v5191, %v5190
      %v5258 = vpack.c.b16 %v5193, %v5192
      %v5259 = vpack.c.b16 %v5195, %v5194
      %5324 = vmatpush.bf16.msra.mxu0 %v5203
      %5325 = vmatpush.bf16.msra.mxu0 %v5202
      %5326 = vmatpush.bf16.msra.mxu0 %v5201
      %5327 = vmatpush.bf16.msra.mxu0 %v5200
      %5328 = vmatpush.bf16.msra.mxu0 %v5199
      %5329 = vmatpush.bf16.msra.mxu0 %v5198
      %5330 = vmatpush.bf16.msra.mxu0 %v5197
      %5331 = vmatpush.bf16.msra.mxu0 %v5196
      %5332 = vmatmul.bf16.gmra.mxu0 %v4732
      %v5333 = vpop.f32.mrf.mxu0
      %v5334 = vadd.f32 0.0, %v5333
      %v5335 = vpop.f32.mrf.mxu0
      %v5336 = vadd.f32 0.0, %v5335
      %5337 = vmatmul.bf16.gmra.mxu0 %v4740
      %v5338 = vpop.f32.mrf.mxu0
      %v5339 = vadd.f32 0.0, %v5338
      %v5340 = vpop.f32.mrf.mxu0
      %v5341 = vadd.f32 0.0, %v5340
      %5342 = vmatmul.bf16.gmra.mxu0 %v4748
      %v5343 = vpop.f32.mrf.mxu0
      %v5344 = vadd.f32 0.0, %v5343
      %v5345 = vpop.f32.mrf.mxu0
      %v5346 = vadd.f32 0.0, %v5345
      %5347 = vmatmul.bf16.gmra.mxu0 %v4756
      %v5348 = vpop.f32.mrf.mxu0
      %v5349 = vadd.f32 0.0, %v5348
      %v5350 = vpop.f32.mrf.mxu0
      %v5351 = vadd.f32 0.0, %v5350
      %5352 = vmatmul.bf16.gmra.mxu0 %v4764
      %v5353 = vpop.f32.mrf.mxu0
      %v5354 = vadd.f32 0.0, %v5353
      %v5355 = vpop.f32.mrf.mxu0
      %v5356 = vadd.f32 0.0, %v5355
      %5357 = vmatmul.bf16.gmra.mxu0 %v4772
      %v5358 = vpop.f32.mrf.mxu0
      %v5359 = vadd.f32 0.0, %v5358
      %v5360 = vpop.f32.mrf.mxu0
      %v5361 = vadd.f32 0.0, %v5360
      %5362 = vmatmul.bf16.gmra.mxu0 %v4780
      %v5363 = vpop.f32.mrf.mxu0
      %v5364 = vadd.f32 0.0, %v5363
      %v5365 = vpop.f32.mrf.mxu0
      %v5366 = vadd.f32 0.0, %v5365
      %5367 = vmatmul.bf16.gmra.mxu0 %v4788
      %v5368 = vpop.f32.mrf.mxu0
      %v5369 = vadd.f32 0.0, %v5368
      %v5370 = vpop.f32.mrf.mxu0
      %v5371 = vadd.f32 0.0, %v5370
      %5372 = vmatmul.bf16.gmra.mxu0 %v4796
      %v5373 = vpop.f32.mrf.mxu0
      %v5374 = vadd.f32 0.0, %v5373
      %v5375 = vpop.f32.mrf.mxu0
      %v5376 = vadd.f32 0.0, %v5375
      %5377 = vmatmul.bf16.gmra.mxu0 %v4804
      %v5378 = vpop.f32.mrf.mxu0
      %v5379 = vadd.f32 0.0, %v5378
      %v5380 = vpop.f32.mrf.mxu0
      %v5381 = vadd.f32 0.0, %v5380
      %5382 = vdwg.mxu0
      %5383 = vmatpush.bf16.msra.mxu0 %v5211
      %5384 = vmatpush.bf16.msra.mxu0 %v5210
      %5385 = vmatpush.bf16.msra.mxu0 %v5209
      %5386 = vmatpush.bf16.msra.mxu0 %v5208
      %5387 = vmatpush.bf16.msra.mxu0 %v5207
      %5388 = vmatpush.bf16.msra.mxu0 %v5206
      %5389 = vmatpush.bf16.msra.mxu0 %v5205
      %5390 = vmatpush.bf16.msra.mxu0 %v5204
      %5391 = vmatmul.bf16.gmra.mxu0 %v4733
      %v5392 = vpop.f32.mrf.mxu0
      %v5393 = vadd.f32 %v5334, %v5392
      %v5394 = vpop.f32.mrf.mxu0
      %v5395 = vadd.f32 %v5336, %v5394
      %5396 = vmatmul.bf16.gmra.mxu0 %v4741
      %v5397 = vpop.f32.mrf.mxu0
      %v5398 = vadd.f32 %v5339, %v5397
      %v5399 = vpop.f32.mrf.mxu0
      %v5400 = vadd.f32 %v5341, %v5399
      %5401 = vmatmul.bf16.gmra.mxu0 %v4749
      %v5402 = vpop.f32.mrf.mxu0
      %v5403 = vadd.f32 %v5344, %v5402
      %v5404 = vpop.f32.mrf.mxu0
      %v5405 = vadd.f32 %v5346, %v5404
      %5406 = vmatmul.bf16.gmra.mxu0 %v4757
      %v5407 = vpop.f32.mrf.mxu0
      %v5408 = vadd.f32 %v5349, %v5407
      %v5409 = vpop.f32.mrf.mxu0
      %v5410 = vadd.f32 %v5351, %v5409
      %5411 = vmatmul.bf16.gmra.mxu0 %v4765
      %v5412 = vpop.f32.mrf.mxu0
      %v5413 = vadd.f32 %v5354, %v5412
      %v5414 = vpop.f32.mrf.mxu0
      %v5415 = vadd.f32 %v5356, %v5414
      %5416 = vmatmul.bf16.gmra.mxu0 %v4773
      %v5417 = vpop.f32.mrf.mxu0
      %v5418 = vadd.f32 %v5359, %v5417
      %v5419 = vpop.f32.mrf.mxu0
      %v5420 = vadd.f32 %v5361, %v5419
      %5421 = vmatmul.bf16.gmra.mxu0 %v4781
      %v5422 = vpop.f32.mrf.mxu0
      %v5423 = vadd.f32 %v5364, %v5422
      %v5424 = vpop.f32.mrf.mxu0
      %v5425 = vadd.f32 %v5366, %v5424
      %5426 = vmatmul.bf16.gmra.mxu0 %v4789
      %v5427 = vpop.f32.mrf.mxu0
      %v5428 = vadd.f32 %v5369, %v5427
      %v5429 = vpop.f32.mrf.mxu0
      %v5430 = vadd.f32 %v5371, %v5429
      %5431 = vmatmul.bf16.gmra.mxu0 %v4797
      %v5432 = vpop.f32.mrf.mxu0
      %v5433 = vadd.f32 %v5374, %v5432
      %v5434 = vpop.f32.mrf.mxu0
      %v5435 = vadd.f32 %v5376, %v5434
      %5436 = vmatmul.bf16.gmra.mxu0 %v4805
      %v5437 = vpop.f32.mrf.mxu0
      %v5438 = vadd.f32 %v5379, %v5437
      %v5439 = vpop.f32.mrf.mxu0
      %v5440 = vadd.f32 %v5381, %v5439
      %5441 = vdwg.mxu0
      %5442 = vmatpush.bf16.msra.mxu0 %v5219
      %5443 = vmatpush.bf16.msra.mxu0 %v5218
      %5444 = vmatpush.bf16.msra.mxu0 %v5217
      %5445 = vmatpush.bf16.msra.mxu0 %v5216
      %5446 = vmatpush.bf16.msra.mxu0 %v5215
      %5447 = vmatpush.bf16.msra.mxu0 %v5214
      %5448 = vmatpush.bf16.msra.mxu0 %v5213
      %5449 = vmatpush.bf16.msra.mxu0 %v5212
      %5450 = vmatmul.bf16.gmra.mxu0 %v4734
      %v5451 = vpop.f32.mrf.mxu0
      %v5452 = vadd.f32 %v5393, %v5451
      %v5453 = vpop.f32.mrf.mxu0
      %v5454 = vadd.f32 %v5395, %v5453
      %5455 = vmatmul.bf16.gmra.mxu0 %v4742
      %v5456 = vpop.f32.mrf.mxu0
      %v5457 = vadd.f32 %v5398, %v5456
      %v5458 = vpop.f32.mrf.mxu0
      %v5459 = vadd.f32 %v5400, %v5458
      %5460 = vmatmul.bf16.gmra.mxu0 %v4750
      %v5461 = vpop.f32.mrf.mxu0
      %v5462 = vadd.f32 %v5403, %v5461
      %v5463 = vpop.f32.mrf.mxu0
      %v5464 = vadd.f32 %v5405, %v5463
      %5465 = vmatmul.bf16.gmra.mxu0 %v4758
      %v5466 = vpop.f32.mrf.mxu0
      %v5467 = vadd.f32 %v5408, %v5466
      %v5468 = vpop.f32.mrf.mxu0
      %v5469 = vadd.f32 %v5410, %v5468
      %5470 = vmatmul.bf16.gmra.mxu0 %v4766
      %v5471 = vpop.f32.mrf.mxu0
      %v5472 = vadd.f32 %v5413, %v5471
      %v5473 = vpop.f32.mrf.mxu0
      %v5474 = vadd.f32 %v5415, %v5473
      %5475 = vmatmul.bf16.gmra.mxu0 %v4774
      %v5476 = vpop.f32.mrf.mxu0
      %v5477 = vadd.f32 %v5418, %v5476
      %v5478 = vpop.f32.mrf.mxu0
      %v5479 = vadd.f32 %v5420, %v5478
      %5480 = vmatmul.bf16.gmra.mxu0 %v4782
      %v5481 = vpop.f32.mrf.mxu0
      %v5482 = vadd.f32 %v5423, %v5481
      %v5483 = vpop.f32.mrf.mxu0
      %v5484 = vadd.f32 %v5425, %v5483
      %5485 = vmatmul.bf16.gmra.mxu0 %v4790
      %v5486 = vpop.f32.mrf.mxu0
      %v5487 = vadd.f32 %v5428, %v5486
      %v5488 = vpop.f32.mrf.mxu0
      %v5489 = vadd.f32 %v5430, %v5488
      %5490 = vmatmul.bf16.gmra.mxu0 %v4798
      %v5491 = vpop.f32.mrf.mxu0
      %v5492 = vadd.f32 %v5433, %v5491
      %v5493 = vpop.f32.mrf.mxu0
      %v5494 = vadd.f32 %v5435, %v5493
      %5495 = vmatmul.bf16.gmra.mxu0 %v4806
      %v5496 = vpop.f32.mrf.mxu0
      %v5497 = vadd.f32 %v5438, %v5496
      %v5498 = vpop.f32.mrf.mxu0
      %v5499 = vadd.f32 %v5440, %v5498
      %5500 = vdwg.mxu0
      %5501 = vmatpush.bf16.msra.mxu0 %v5227
      %5502 = vmatpush.bf16.msra.mxu0 %v5226
      %5503 = vmatpush.bf16.msra.mxu0 %v5225
      %5504 = vmatpush.bf16.msra.mxu0 %v5224
      %5505 = vmatpush.bf16.msra.mxu0 %v5223
      %5506 = vmatpush.bf16.msra.mxu0 %v5222
      %5507 = vmatpush.bf16.msra.mxu0 %v5221
      %5508 = vmatpush.bf16.msra.mxu0 %v5220
      %5509 = vmatmul.bf16.gmra.mxu0 %v4735
      %v5510 = vpop.f32.mrf.mxu0
      %v5511 = vadd.f32 %v5452, %v5510
      %v5512 = vpop.f32.mrf.mxu0
      %v5513 = vadd.f32 %v5454, %v5512
      %5514 = vmatmul.bf16.gmra.mxu0 %v4743
      %v5515 = vpop.f32.mrf.mxu0
      %v5516 = vadd.f32 %v5457, %v5515
      %v5517 = vpop.f32.mrf.mxu0
      %v5518 = vadd.f32 %v5459, %v5517
      %5519 = vmatmul.bf16.gmra.mxu0 %v4751
      %v5520 = vpop.f32.mrf.mxu0
      %v5521 = vadd.f32 %v5462, %v5520
      %v5522 = vpop.f32.mrf.mxu0
      %v5523 = vadd.f32 %v5464, %v5522
      %5524 = vmatmul.bf16.gmra.mxu0 %v4759
      %v5525 = vpop.f32.mrf.mxu0
      %v5526 = vadd.f32 %v5467, %v5525
      %v5527 = vpop.f32.mrf.mxu0
      %v5528 = vadd.f32 %v5469, %v5527
      %5529 = vmatmul.bf16.gmra.mxu0 %v4767
      %v5530 = vpop.f32.mrf.mxu0
      %v5531 = vadd.f32 %v5472, %v5530
      %v5532 = vpop.f32.mrf.mxu0
      %v5533 = vadd.f32 %v5474, %v5532
      %5534 = vmatmul.bf16.gmra.mxu0 %v4775
      %v5535 = vpop.f32.mrf.mxu0
      %v5536 = vadd.f32 %v5477, %v5535
      %v5537 = vpop.f32.mrf.mxu0
      %v5538 = vadd.f32 %v5479, %v5537
      %5539 = vmatmul.bf16.gmra.mxu0 %v4783
      %v5540 = vpop.f32.mrf.mxu0
      %v5541 = vadd.f32 %v5482, %v5540
      %v5542 = vpop.f32.mrf.mxu0
      %v5543 = vadd.f32 %v5484, %v5542
      %5544 = vmatmul.bf16.gmra.mxu0 %v4791
      %v5545 = vpop.f32.mrf.mxu0
      %v5546 = vadd.f32 %v5487, %v5545
      %v5547 = vpop.f32.mrf.mxu0
      %v5548 = vadd.f32 %v5489, %v5547
      %5549 = vmatmul.bf16.gmra.mxu0 %v4799
      %v5550 = vpop.f32.mrf.mxu0
      %v5551 = vadd.f32 %v5492, %v5550
      %v5552 = vpop.f32.mrf.mxu0
      %v5553 = vadd.f32 %v5494, %v5552
      %5554 = vmatmul.bf16.gmra.mxu0 %v4807
      %v5555 = vpop.f32.mrf.mxu0
      %v5556 = vadd.f32 %v5497, %v5555
      %v5557 = vpop.f32.mrf.mxu0
      %v5558 = vadd.f32 %v5499, %v5557
      %5559 = vdwg.mxu0
      %5560 = vmatpush.bf16.msra.mxu0 %v5235
      %5561 = vmatpush.bf16.msra.mxu0 %v5234
      %5562 = vmatpush.bf16.msra.mxu0 %v5233
      %5563 = vmatpush.bf16.msra.mxu0 %v5232
      %5564 = vmatpush.bf16.msra.mxu0 %v5231
      %5565 = vmatpush.bf16.msra.mxu0 %v5230
      %5566 = vmatpush.bf16.msra.mxu0 %v5229
      %5567 = vmatpush.bf16.msra.mxu0 %v5228
      %5568 = vmatmul.bf16.gmra.mxu0 %v4736
      %v5569 = vpop.f32.mrf.mxu0
      %v5570 = vadd.f32 %v5511, %v5569
      %v5571 = vpop.f32.mrf.mxu0
      %v5572 = vadd.f32 %v5513, %v5571
      %5573 = vmatmul.bf16.gmra.mxu0 %v4744
      %v5574 = vpop.f32.mrf.mxu0
      %v5575 = vadd.f32 %v5516, %v5574
      %v5576 = vpop.f32.mrf.mxu0
      %v5577 = vadd.f32 %v5518, %v5576
      %5578 = vmatmul.bf16.gmra.mxu0 %v4752
      %v5579 = vpop.f32.mrf.mxu0
      %v5580 = vadd.f32 %v5521, %v5579
      %v5581 = vpop.f32.mrf.mxu0
      %v5582 = vadd.f32 %v5523, %v5581
      %5583 = vmatmul.bf16.gmra.mxu0 %v4760
      %v5584 = vpop.f32.mrf.mxu0
      %v5585 = vadd.f32 %v5526, %v5584
      %v5586 = vpop.f32.mrf.mxu0
      %v5587 = vadd.f32 %v5528, %v5586
      %5588 = vmatmul.bf16.gmra.mxu0 %v4768
      %v5589 = vpop.f32.mrf.mxu0
      %v5590 = vadd.f32 %v5531, %v5589
      %v5591 = vpop.f32.mrf.mxu0
      %v5592 = vadd.f32 %v5533, %v5591
      %5593 = vmatmul.bf16.gmra.mxu0 %v4776
      %v5594 = vpop.f32.mrf.mxu0
      %v5595 = vadd.f32 %v5536, %v5594
      %v5596 = vpop.f32.mrf.mxu0
      %v5597 = vadd.f32 %v5538, %v5596
      %5598 = vmatmul.bf16.gmra.mxu0 %v4784
      %v5599 = vpop.f32.mrf.mxu0
      %v5600 = vadd.f32 %v5541, %v5599
      %v5601 = vpop.f32.mrf.mxu0
      %v5602 = vadd.f32 %v5543, %v5601
      %5603 = vmatmul.bf16.gmra.mxu0 %v4792
      %v5604 = vpop.f32.mrf.mxu0
      %v5605 = vadd.f32 %v5546, %v5604
      %v5606 = vpop.f32.mrf.mxu0
      %v5607 = vadd.f32 %v5548, %v5606
      %5608 = vmatmul.bf16.gmra.mxu0 %v4800
      %v5609 = vpop.f32.mrf.mxu0
      %v5610 = vadd.f32 %v5551, %v5609
      %v5611 = vpop.f32.mrf.mxu0
      %v5612 = vadd.f32 %v5553, %v5611
      %5613 = vmatmul.bf16.gmra.mxu0 %v4808
      %v5614 = vpop.f32.mrf.mxu0
      %v5615 = vadd.f32 %v5556, %v5614
      %v5616 = vpop.f32.mrf.mxu0
      %v5617 = vadd.f32 %v5558, %v5616
      %5618 = vdwg.mxu0
      %5619 = vmatpush.bf16.msra.mxu0 %v5243
      %5620 = vmatpush.bf16.msra.mxu0 %v5242
      %5621 = vmatpush.bf16.msra.mxu0 %v5241
      %5622 = vmatpush.bf16.msra.mxu0 %v5240
      %5623 = vmatpush.bf16.msra.mxu0 %v5239
      %5624 = vmatpush.bf16.msra.mxu0 %v5238
      %5625 = vmatpush.bf16.msra.mxu0 %v5237
      %5626 = vmatpush.bf16.msra.mxu0 %v5236
      %5627 = vmatmul.bf16.gmra.mxu0 %v4737
      %v5628 = vpop.f32.mrf.mxu0
      %v5629 = vadd.f32 %v5570, %v5628
      %v5630 = vpop.f32.mrf.mxu0
      %v5631 = vadd.f32 %v5572, %v5630
      %5632 = vmatmul.bf16.gmra.mxu0 %v4745
      %v5633 = vpop.f32.mrf.mxu0
      %v5634 = vadd.f32 %v5575, %v5633
      %v5635 = vpop.f32.mrf.mxu0
      %v5636 = vadd.f32 %v5577, %v5635
      %5637 = vmatmul.bf16.gmra.mxu0 %v4753
      %v5638 = vpop.f32.mrf.mxu0
      %v5639 = vadd.f32 %v5580, %v5638
      %v5640 = vpop.f32.mrf.mxu0
      %v5641 = vadd.f32 %v5582, %v5640
      %5642 = vmatmul.bf16.gmra.mxu0 %v4761
      %v5643 = vpop.f32.mrf.mxu0
      %v5644 = vadd.f32 %v5585, %v5643
      %v5645 = vpop.f32.mrf.mxu0
      %v5646 = vadd.f32 %v5587, %v5645
      %5647 = vmatmul.bf16.gmra.mxu0 %v4769
      %v5648 = vpop.f32.mrf.mxu0
      %v5649 = vadd.f32 %v5590, %v5648
      %v5650 = vpop.f32.mrf.mxu0
      %v5651 = vadd.f32 %v5592, %v5650
      %5652 = vmatmul.bf16.gmra.mxu0 %v4777
      %v5653 = vpop.f32.mrf.mxu0
      %v5654 = vadd.f32 %v5595, %v5653
      %v5655 = vpop.f32.mrf.mxu0
      %v5656 = vadd.f32 %v5597, %v5655
      %5657 = vmatmul.bf16.gmra.mxu0 %v4785
      %v5658 = vpop.f32.mrf.mxu0
      %v5659 = vadd.f32 %v5600, %v5658
      %v5660 = vpop.f32.mrf.mxu0
      %v5661 = vadd.f32 %v5602, %v5660
      %5662 = vmatmul.bf16.gmra.mxu0 %v4793
      %v5663 = vpop.f32.mrf.mxu0
      %v5664 = vadd.f32 %v5605, %v5663
      %v5665 = vpop.f32.mrf.mxu0
      %v5666 = vadd.f32 %v5607, %v5665
      %5667 = vmatmul.bf16.gmra.mxu0 %v4801
      %v5668 = vpop.f32.mrf.mxu0
      %v5669 = vadd.f32 %v5610, %v5668
      %v5670 = vpop.f32.mrf.mxu0
      %v5671 = vadd.f32 %v5612, %v5670
      %5672 = vmatmul.bf16.gmra.mxu0 %v4809
      %v5673 = vpop.f32.mrf.mxu0
      %v5674 = vadd.f32 %v5615, %v5673
      %v5675 = vpop.f32.mrf.mxu0
      %v5676 = vadd.f32 %v5617, %v5675
      %5677 = vdwg.mxu0
      %5678 = vmatpush.bf16.msra.mxu0 %v5251
      %5679 = vmatpush.bf16.msra.mxu0 %v5250
      %5680 = vmatpush.bf16.msra.mxu0 %v5249
      %5681 = vmatpush.bf16.msra.mxu0 %v5248
      %5682 = vmatpush.bf16.msra.mxu0 %v5247
      %5683 = vmatpush.bf16.msra.mxu0 %v5246
      %5684 = vmatpush.bf16.msra.mxu0 %v5245
      %5685 = vmatpush.bf16.msra.mxu0 %v5244
      %5686 = vmatmul.bf16.gmra.mxu0 %v4738
      %v5687 = vpop.f32.mrf.mxu0
      %v5688 = vadd.f32 %v5629, %v5687
      %v5689 = vpop.f32.mrf.mxu0
      %v5690 = vadd.f32 %v5631, %v5689
      %5691 = vmatmul.bf16.gmra.mxu0 %v4746
      %v5692 = vpop.f32.mrf.mxu0
      %v5693 = vadd.f32 %v5634, %v5692
      %v5694 = vpop.f32.mrf.mxu0
      %v5695 = vadd.f32 %v5636, %v5694
      %5696 = vmatmul.bf16.gmra.mxu0 %v4754
      %v5697 = vpop.f32.mrf.mxu0
      %v5698 = vadd.f32 %v5639, %v5697
      %v5699 = vpop.f32.mrf.mxu0
      %v5700 = vadd.f32 %v5641, %v5699
      %5701 = vmatmul.bf16.gmra.mxu0 %v4762
      %v5702 = vpop.f32.mrf.mxu0
      %v5703 = vadd.f32 %v5644, %v5702
      %v5704 = vpop.f32.mrf.mxu0
      %v5705 = vadd.f32 %v5646, %v5704
      %5706 = vmatmul.bf16.gmra.mxu0 %v4770
      %v5707 = vpop.f32.mrf.mxu0
      %v5708 = vadd.f32 %v5649, %v5707
      %v5709 = vpop.f32.mrf.mxu0
      %v5710 = vadd.f32 %v5651, %v5709
      %5711 = vmatmul.bf16.gmra.mxu0 %v4778
      %v5712 = vpop.f32.mrf.mxu0
      %v5713 = vadd.f32 %v5654, %v5712
      %v5714 = vpop.f32.mrf.mxu0
      %v5715 = vadd.f32 %v5656, %v5714
      %5716 = vmatmul.bf16.gmra.mxu0 %v4786
      %v5717 = vpop.f32.mrf.mxu0
      %v5718 = vadd.f32 %v5659, %v5717
      %v5719 = vpop.f32.mrf.mxu0
      %v5720 = vadd.f32 %v5661, %v5719
      %5721 = vmatmul.bf16.gmra.mxu0 %v4794
      %v5722 = vpop.f32.mrf.mxu0
      %v5723 = vadd.f32 %v5664, %v5722
      %v5724 = vpop.f32.mrf.mxu0
      %v5725 = vadd.f32 %v5666, %v5724
      %5726 = vmatmul.bf16.gmra.mxu0 %v4802
      %v5727 = vpop.f32.mrf.mxu0
      %v5728 = vadd.f32 %v5669, %v5727
      %v5729 = vpop.f32.mrf.mxu0
      %v5730 = vadd.f32 %v5671, %v5729
      %5731 = vmatmul.bf16.gmra.mxu0 %v4810
      %v5732 = vpop.f32.mrf.mxu0
      %v5733 = vadd.f32 %v5674, %v5732
      %v5734 = vpop.f32.mrf.mxu0
      %v5735 = vadd.f32 %v5676, %v5734
      %5736 = vdwg.mxu0
      %5737 = vmatpush.bf16.msra.mxu0 %v5259
      %5738 = vmatpush.bf16.msra.mxu0 %v5258
      %5739 = vmatpush.bf16.msra.mxu0 %v5257
      %5740 = vmatpush.bf16.msra.mxu0 %v5256
      %5741 = vmatpush.bf16.msra.mxu0 %v5255
      %5742 = vmatpush.bf16.msra.mxu0 %v5254
      %5743 = vmatpush.bf16.msra.mxu0 %v5253
      %5744 = vmatpush.bf16.msra.mxu0 %v5252
      %5745 = vmatmul.bf16.gmra.mxu0 %v4739
      %v5746 = vpop.f32.mrf.mxu0
      %v5747 = vadd.f32 %v5688, %v5746
      %v5748 = vpop.f32.mrf.mxu0
      %v5749 = vadd.f32 %v5690, %v5748
      %5750 = vmatmul.bf16.gmra.mxu0 %v4747
      %v5751 = vpop.f32.mrf.mxu0
      %v5752 = vadd.f32 %v5693, %v5751
      %v5753 = vpop.f32.mrf.mxu0
      %v5754 = vadd.f32 %v5695, %v5753
      %5755 = vmatmul.bf16.gmra.mxu0 %v4755
      %v5756 = vpop.f32.mrf.mxu0
      %v5757 = vadd.f32 %v5698, %v5756
      %v5758 = vpop.f32.mrf.mxu0
      %v5759 = vadd.f32 %v5700, %v5758
      %5760 = vmatmul.bf16.gmra.mxu0 %v4763
      %v5761 = vpop.f32.mrf.mxu0
      %v5762 = vadd.f32 %v5703, %v5761
      %v5763 = vpop.f32.mrf.mxu0
      %v5764 = vadd.f32 %v5705, %v5763
      %5765 = vmatmul.bf16.gmra.mxu0 %v4771
      %v5766 = vpop.f32.mrf.mxu0
      %v5767 = vadd.f32 %v5708, %v5766
      %v5768 = vpop.f32.mrf.mxu0
      %v5769 = vadd.f32 %v5710, %v5768
      %5770 = vmatmul.bf16.gmra.mxu0 %v4779
      %v5771 = vpop.f32.mrf.mxu0
      %v5772 = vadd.f32 %v5713, %v5771
      %v5773 = vpop.f32.mrf.mxu0
      %v5774 = vadd.f32 %v5715, %v5773
      %5775 = vmatmul.bf16.gmra.mxu0 %v4787
      %v5776 = vpop.f32.mrf.mxu0
      %v5777 = vadd.f32 %v5718, %v5776
      %v5778 = vpop.f32.mrf.mxu0
      %v5779 = vadd.f32 %v5720, %v5778
      %5780 = vmatmul.bf16.gmra.mxu0 %v4795
      %v5781 = vpop.f32.mrf.mxu0
      %v5782 = vadd.f32 %v5723, %v5781
      %v5783 = vpop.f32.mrf.mxu0
      %v5784 = vadd.f32 %v5725, %v5783
      %5785 = vmatmul.bf16.gmra.mxu0 %v4803
      %v5786 = vpop.f32.mrf.mxu0
      %v5787 = vadd.f32 %v5728, %v5786
      %v5788 = vpop.f32.mrf.mxu0
      %v5789 = vadd.f32 %v5730, %v5788
      %5790 = vmatmul.bf16.gmra.mxu0 %v4811
      %v5791 = vpop.f32.mrf.mxu0
      %v5792 = vadd.f32 %v5733, %v5791
      %v5793 = vpop.f32.mrf.mxu0
      %v5794 = vadd.f32 %v5735, %v5793
      %5795 = vdwg.mxu0
      %v5796 = vadd.f32 %v4532, %v5747
      %v5797 = vadd.f32 %v4533, %v5749
      %v5798 = vadd.f32 %v4534, %v5752
      %v5799 = vadd.f32 %v4535, %v5754
      %v5800 = vadd.f32 %v4536, %v5757
      %v5801 = vadd.f32 %v4537, %v5759
      %v5802 = vadd.f32 %v4538, %v5762
      %v5803 = vadd.f32 %v4539, %v5764
      %v5804 = vadd.f32 %v4540, %v5767
      %v5805 = vadd.f32 %v4541, %v5769
      %v5806 = vadd.f32 %v4542, %v5772
      %v5807 = vadd.f32 %v4543, %v5774
      %v5808 = vadd.f32 %v4544, %v5777
      %v5809 = vadd.f32 %v4545, %v5779
      %v5810 = vadd.f32 %v4546, %v5782
      %v5811 = vadd.f32 %v4547, %v5784
      %v5812 = vadd.f32 %v4548, %v5787
      %v5813 = vadd.f32 %v4549, %v5789
      %v5814 = vadd.f32 %v4550, %v5792
      %v5815 = vadd.f32 %v4551, %v5794
      %vm5816 = vcmask 31744
      %5817 = vst.msk [vmem:[%s410] sm:$0xff] %vm5816, %v5796
      %5818 = vst.msk [vmem:[%s410 + $0x8] sm:$0xff] %vm5816, %v5797
      %5819 = vst.msk [vmem:[%s410 + $0x10] sm:$0xff] %vm5816, %v5798
      %5820 = vst.msk [vmem:[%s410 + $0x18] sm:$0xff] %vm5816, %v5799
      %5821 = vst.msk [vmem:[%s410 + $0x20] sm:$0xff] %vm5816, %v5800
      %5822 = vst.msk [vmem:[%s410 + $0x28] sm:$0xff] %vm5816, %v5801
      %5823 = vst.msk [vmem:[%s410 + $0x30] sm:$0xff] %vm5816, %v5802
      %5824 = vst.msk [vmem:[%s410 + $0x38] sm:$0xff] %vm5816, %v5803
      %5825 = vst.msk [vmem:[%s410 + $0x40] sm:$0xff] %vm5816, %v5804
      %5826 = vst.msk [vmem:[%s410 + $0x48] sm:$0xff] %vm5816, %v5805
      %5827 = vst.msk [vmem:[%s410 + $0x50] sm:$0xff] %vm5816, %v5806
      %5828 = vst.msk [vmem:[%s410 + $0x58] sm:$0xff] %vm5816, %v5807
      %5829 = vst.msk [vmem:[%s410 + $0x60] sm:$0xff] %vm5816, %v5808
      %5830 = vst.msk [vmem:[%s410 + $0x68] sm:$0xff] %vm5816, %v5809
      %5831 = vst.msk [vmem:[%s410 + $0x70] sm:$0xff] %vm5816, %v5810
      %5832 = vst.msk [vmem:[%s410 + $0x78] sm:$0xff] %vm5816, %v5811
      %5833 = vst.msk [vmem:[%s410 + $0x80] sm:$0xff] %vm5816, %v5812
      %5834 = vst.msk [vmem:[%s410 + $0x88] sm:$0xff] %vm5816, %v5813
      %5835 = vst.msk [vmem:[%s410 + $0x90] sm:$0xff] %vm5816, %v5814
      %5836 = vst.msk [vmem:[%s410 + $0x98] sm:$0xff] %vm5816, %v5815
      %s5837 = smul.u32 20, %s22
      %p5838 = scmp.lt.s32.totalorder %s5837, 39
      %s5839 = scalar_select %p5838, %s5837, 39
      %s5840 = smul.addr %s5839, 8
      %s5841 = scalar_lea.vmem %s11, %s5840
      // Predicated region
      $region65: #{xdeepfm_forward.1} parent=63 // pred_check
        %p5842 = pneg %p281
      $region66: #{xdeepfm_forward.1} parent=63 // pred_check_branch
        %5844 = sbr.rel (%p5842) target = $region68
      $region67: #{xdeepfm_forward.1} parent=63 // pred_region
        %s5845 = smul.u32 20, %s22
      $region68: #{xdeepfm_forward.1} parent=63 // pred_fallthru
        _
    $region64: #{xdeepfm_forward.1} parent=5 // pred_fallthru
      _
    %p5846 = scmp.le.s32.totalorder 2, %s17
    // Predicated region
    $region69: #{xdeepfm_forward.1} parent=5 // pred_check
      %p5847 = pneg %p5846
    $region70: #{xdeepfm_forward.1} parent=5 // pred_check_branch
      %5849 = sbr.rel (%p5847) target = $region72
    $region71: #{xdeepfm_forward.1} parent=5 // pred_region
      %s5850 = ssub.s32 %s17, 2
      // Predicated region
      $region73: #{xdeepfm_forward.1} parent=71 // pred_check
        %p5851 = pneg %p287
      $region74: #{xdeepfm_forward.1} parent=71 // pred_check_branch
        %5853 = sbr.rel (%p5851) target = $region76
      $region75: #{xdeepfm_forward.1} parent=71 // pred_region
        %s5854 = smul.u32 20, %s23
        %p5855 = scmp.lt.s32.totalorder %s5854, 39
        %s5856 = scalar_select %p5855, %s5854, 39
        %s5857 = smul.addr %s5856, 8
        %s5858 = scalar_lea.vmem %s11, %s5857
      $region76: #{xdeepfm_forward.1} parent=71 // pred_fallthru
        _
    $region72: #{xdeepfm_forward.1} parent=5 // pred_fallthru
      _
  $region6: #{xdeepfm_forward.1} parent=0 // loop_footer
    %s21 = sadd.s32 1, %s17
  $region7: #{xdeepfm_forward.1} parent=0 // loop_footer_branch
    %16 = sbr.rel target = $region3
  $region8: #{xdeepfm_forward.1} parent=0 // loop_exit
    _

</llo_original>
